<compile_context>
chip_gen: v5e
topology: v5e:2x2
jax: 0.10.0
libtpu: 0.0.40
codegen_flags: <defaults>
</compile_context>

<pallas_src>
import functools

import numpy as np
import jax
import jax.numpy as jnp
from jax.experimental import pallas as pl
from jax.experimental.pallas import tpu as pltpu

# Small shapes consistent with the module (window_length=100, axis_num=9 in
# the original; window_length shrunk for a quick synthetic run).
WINDOW_LENGTH = 16
AXIS_NUM = 9
LABEL_NUM = 6
BATCH = 2
KS = 3          # conv kernel size
LABEL_PAD = 128  # lane-dense padded label axis for the output store


def _vmem_spec():
    # Whole array resident in VMEM (all operands are small, no grid tiling).
    return pl.BlockSpec(memory_space=pltpu.MemorySpace.VMEM)


# --------------------------------------------------------------------------
# Fused kernel: conv1+BN1 -> conv2+BN2 -> (implicit flatten) -> fc1 -> fc2 ->
# log_softmax.  All intermediates stay in VMEM scratch.
#
# Activation layout: rows index (h, n) with stride N, columns index (w, ch).
#   x_ref   : (H*N, W)                input, single channel, row = h*N + n
#   u_ref   : (KS, W, Wo1*C1)         conv1 width-Toeplitz weights (per kh)
#   w2_ref  : (KS, Wo1*C1, Wo2*C2)    conv2 width-Toeplitz weights (per kh)
#   v_ref   : (Ho2, Wo2*C2, HIDDEN)   fc1 weights, permuted so the torch
#                                     (c,h,w) flatten needs no data movement
#   b/s/t   : per-channel bias / BN scale / BN shift, tiled to the col layout
#   wf2/bf2 : fc2 weight/bias padded to LABEL_PAD lanes (pad bias = -1e30)
#   a_scr   : (Ho1*N, Wo1*C1)         conv1 activations (post ReLU+BN)
#   c2_scr  : (Ho2*N, Wo2*C2)         conv2 activations (post ReLU+BN)
# --------------------------------------------------------------------------
def _fused_cnn_kernel(x_ref, u_ref, b1_ref, s1_ref, t1_ref,
                      w2_ref, b2_ref, s2_ref, t2_ref,
                      v_ref, bf1_ref, wf2_ref, bf2_ref,
                      o_ref, a_scr, c2_scr, *, N, H):
    K = u_ref.shape[0]
    Ho1 = H - (K - 1)
    Ho2 = H - 2 * (K - 1)
    hidden = v_ref.shape[-1]

    # ---- conv1 + bias + ReLU + BN (3 MXU dots over kh) -------------------
    # a[h1*N + n, :] = sum_kh x[(h1+kh)*N + n, :] @ u[kh]; the row shift is a
    # static contiguous slice, and every computed row is a valid output row.
    a_pre = jnp.zeros((Ho1 * N, u_ref.shape[-1]), jnp.float32)
    for kh in range(K):
        a_pre = a_pre + jnp.dot(x_ref[kh * N:kh * N + Ho1 * N, :], u_ref[kh],
                                preferred_element_type=jnp.float32)
    a_scr[...] = (jnp.maximum(a_pre + b1_ref[...], 0.0) * s1_ref[...]
                  + t1_ref[...])

    # ---- conv2 + bias + ReLU + BN (3 MXU dots over kh) -------------------
    c2_pre = jnp.zeros((Ho2 * N, w2_ref.shape[-1]), jnp.float32)
    for kh in range(K):
        c2_pre = c2_pre + jnp.dot(a_scr[kh * N:kh * N + Ho2 * N, :],
                                  w2_ref[kh],
                                  preferred_element_type=jnp.float32)
    c2_scr[...] = (jnp.maximum(c2_pre + b2_ref[...], 0.0) * s2_ref[...]
                   + t2_ref[...])

    # ---- fc1 (reduction chunked over conv2 h2-rows) + ReLU ---------------
    # With the (h, n)-major layout, the rows of sample n for a fixed h2 are
    # the contiguous block [h2*N, (h2+1)*N): one static slice + one MXU dot
    # per h2.  The flatten permutation lives entirely in v (built at init).
    h = jnp.zeros((N, hidden), jnp.float32)
    for h2 in range(Ho2):
        h = h + jnp.dot(c2_scr[h2 * N:(h2 + 1) * N, :], v_ref[h2],
                        preferred_element_type=jnp.float32)
    h = jnp.maximum(h + bf1_ref[...], 0.0)

    # ---- fc2 + log_softmax (over the lane-dense padded label axis) -------
    # Pad columns have zero weight and -1e30 bias -> exp underflows to 0, so
    # the log-softmax of the valid columns is unchanged.
    logits = (jnp.dot(h, wf2_ref[...], preferred_element_type=jnp.float32)
              + bf2_ref[...])
    m = jnp.max(logits, axis=-1, keepdims=True)
    s = logits - m
    lse = jnp.log(jnp.sum(jnp.exp(s), axis=-1, keepdims=True))
    o_ref[...] = s - lse


# --------------------------------------------------------------------------
# Wrapper
# --------------------------------------------------------------------------
def cnn_classifier_forward(x_nchw, kparams, *, label_num):
    N, cin, H, W = x_nchw.shape
    assert cin == 1
    Ho1, Ho2 = H - 2, H - 4
    label_pad = kparams["wf2"].shape[-1]

    # (h, n)-major slab: row h*N + n.  Tiny host/XLA-side transpose of the
    # input only; all weights were prepared once at init.
    x2d = jnp.transpose(x_nchw[:, 0], (1, 0, 2)).reshape(H * N, W)

    kern = functools.partial(_fused_cnn_kernel, N=N, H=H)
    out_pad = pl.pallas_call(
        kern,
        out_shape=jax.ShapeDtypeStruct((N, label_pad), jnp.float32),
        in_specs=[_vmem_spec()] * 13,
        out_specs=_vmem_spec(),
        scratch_shapes=[
            pltpu.VMEM((Ho1 * N, kparams["u1"].shape[-1]), jnp.float32),
            pltpu.VMEM((Ho2 * N, kparams["w2toe"].shape[-1]), jnp.float32),
        ],
    )(x2d, kparams["u1"], kparams["b1t"], kparams["s1t"], kparams["t1t"],
      kparams["w2toe"], kparams["b2t"], kparams["s2t"], kparams["t2t"],
      kparams["v1"], kparams["bf1"], kparams["wf2"], kparams["bf2"])
    return out_pad[:, :label_num]


# --------------------------------------------------------------------------
# Parameters in PyTorch layout (what the nn.Module would hold).
# --------------------------------------------------------------------------
def init_params(key, window_length, axis_num, label_num):
    ks = jax.random.split(key, 16)
    c1, c2, hidden = 32, 64, 128
    feat = c2 * (window_length - 4) * (axis_num - 4)
    return {
        "conv1_w": 0.1 * jax.random.normal(ks[0], (c1, 1, 3, 3), jnp.float32),
        "conv1_b": 0.05 * jax.random.normal(ks[1], (c1,), jnp.float32),
        "bn1_gamma": 1.0 + 0.1 * jax.random.normal(ks[2], (c1,), jnp.float32),
        "bn1_beta": 0.1 * jax.random.normal(ks[3], (c1,), jnp.float32),
        "bn1_mean": 0.1 * jax.random.normal(ks[4], (c1,), jnp.float32),
        "bn1_var": 1.0 + 0.5 * jax.random.uniform(ks[5], (c1,), jnp.float32),
        "conv2_w": 0.05 * jax.random.normal(ks[6], (c2, c1, 3, 3), jnp.float32),
        "conv2_b": 0.05 * jax.random.normal(ks[7], (c2,), jnp.float32),
        "bn2_gamma": 1.0 + 0.1 * jax.random.normal(ks[8], (c2,), jnp.float32),
        "bn2_beta": 0.1 * jax.random.normal(ks[9], (c2,), jnp.float32),
        "bn2_mean": 0.1 * jax.random.normal(ks[10], (c2,), jnp.float32),
        "bn2_var": 1.0 + 0.5 * jax.random.uniform(ks[11], (c2,), jnp.float32),
        "fc1_w": 0.02 * jax.random.normal(ks[12], (hidden, feat), jnp.float32),
        "fc1_b": 0.02 * jax.random.normal(ks[13], (hidden,), jnp.float32),
        "fc2_w": 0.05 * jax.random.normal(ks[14], (label_num, hidden), jnp.float32),
        "fc2_b": 0.05 * jax.random.normal(ks[15], (label_num,), jnp.float32),
    }


# --------------------------------------------------------------------------
# One-time host-side weight preparation: width-Toeplitz conv weights, tiled
# per-channel bias/BN vectors, the flatten-permuted fc1 weight, and the
# lane-dense padded fc2 weight/bias.
# --------------------------------------------------------------------------
def prepare_kernel_params(p, window_length, axis_num, eps=1e-5,
                          label_pad=LABEL_PAD):
    H, W = window_length, axis_num
    Wo1, Wo2 = W - 2, W - 4
    Ho2 = H - 4
    c1 = p["conv1_w"].shape[0]
    c2 = p["conv2_w"].shape[0]
    hidden = p["fc1_w"].shape[0]
    label_num = p["fc2_w"].shape[0]
    assert label_pad >= label_num and label_pad % 128 == 0

    def bn_fold(gamma, beta, mean, var):
        scale = gamma / jnp.sqrt(var + eps)
        shift = beta - mean * scale
        return scale, shift

    s1, t1 = bn_fold(p["bn1_gamma"], p["bn1_beta"], p["bn1_mean"], p["bn1_var"])
    s2, t2 = bn_fold(p["bn2_gamma"], p["bn2_beta"], p["bn2_mean"], p["bn2_var"])

    # conv1 width-Toeplitz: u1[kh, w_in, w*c1 + c] = W1[c, 0, kh, w_in - w]
    w1 = np.asarray(p["conv1_w"])
    u1 = np.zeros((KS, W, Wo1 * c1), np.float32)
    for kh in range(KS):
        for w in range(Wo1):
            for kw in range(KS):
                u1[kh, w + kw, w * c1:(w + 1) * c1] = w1[:, 0, kh, kw]

    # conv2 width-Toeplitz: w2toe[kh, w*c1 + ci, w2*c2 + co] = W2[co, ci, kh, w - w2]
    w2 = np.asarray(p["conv2_w"])
    w2toe = np.zeros((KS, Wo1 * c1, Wo2 * c2), np.float32)
    for kh in range(KS):
        for w2i in range(Wo2):
            for kw in range(KS):
                w2toe[kh, (w2i + kw) * c1:(w2i + kw + 1) * c1,
                      w2i * c2:(w2i + 1) * c2] = w2[:, :, kh, kw].T

    # fc1 permuted to (Ho2, Wo2*C2, hidden): absorbs torch's (c, h, w) flatten.
    wf1 = p["fc1_w"].reshape(hidden, c2, Ho2, Wo2)           # [j, c, h2, w2]
    v1 = jnp.transpose(wf1, (2, 3, 1, 0)).reshape(Ho2, Wo2 * c2, hidden)

    # fc2 padded to a lane-dense label axis; padded columns get zero weight
    # and a -1e30 bias so they contribute exactly 0 to the softmax sum.
    wf2 = np.zeros((hidden, label_pad), np.float32)
    wf2[:, :label_num] = np.asarray(p["fc2_w"]).T
    bf2 = np.full((1, label_pad), -1e30, np.float32)
    bf2[0, :label_num] = np.asarray(p["fc2_b"])

    return {
        "u1": jnp.asarray(u1),
        "b1t": jnp.tile(p["conv1_b"], Wo1).reshape(1, Wo1 * c1),
        "s1t": jnp.tile(s1, Wo1).reshape(1, Wo1 * c1),
        "t1t": jnp.tile(t1, Wo1).reshape(1, Wo1 * c1),
        "w2toe": jnp.asarray(w2toe),
        "b2t": jnp.tile(p["conv2_b"], Wo2).reshape(1, Wo2 * c2),
        "s2t": jnp.tile(s2, Wo2).reshape(1, Wo2 * c2),
        "t2t": jnp.tile(t2, Wo2).reshape(1, Wo2 * c2),
        "v1": v1,
        "bf1": p["fc1_b"].reshape(1, hidden),
        "wf2": jnp.asarray(wf2),
        "bf2": jnp.asarray(bf2),
    }


# --------------------------------------------------------------------------
# Pure-JAX reference in the original (PyTorch-layout) formulation — validates
# the Toeplitz / flatten-permutation / padding construction, not just the
# kernel body.
# --------------------------------------------------------------------------
def forward_reference(x_nchw, p, eps=1e-5):
    N, _, H, W = x_nchw.shape
    hp = jax.lax.Precision.HIGHEST
    x = x_nchw[:, 0]

    def bn(y, gamma, beta, mean, var):
        scale = gamma / jnp.sqrt(var + eps)
        return y * scale + (beta - mean * scale)

    Ho1, Wo1 = H - 2, W - 2
    w1 = jnp.transpose(p["conv1_w"][:, 0], (1, 2, 0))        # (3, 3, C1)
    c1 = jnp.zeros((N, Ho1, Wo1, w1.shape[-1]), jnp.float32)
    for kh in range(3):
        for kw in range(3):
            c1 = c1 + x[:, kh:kh + Ho1, kw:kw + Wo1, None] * w1[kh, kw]
    c1 = jnp.maximum(c1 + p["conv1_b"], 0.0)
    c1 = bn(c1, p["bn1_gamma"], p["bn1_beta"], p["bn1_mean"], p["bn1_var"])

    Ho2, Wo2 = H - 4, W - 4
    w2 = jnp.transpose(p["conv2_w"], (2, 3, 1, 0))           # (3, 3, C1, C2)
    c2 = jnp.zeros((N, Ho2, Wo2, w2.shape[-1]), jnp.float32)
    for kh in range(3):
        for kw in range(3):
            c2 = c2 + jnp.einsum("nhwc,cd->nhwd",
                                 c1[:, kh:kh + Ho2, kw:kw + Wo2, :],
                                 w2[kh, kw], precision=hp)
    c2 = jnp.maximum(c2 + p["conv2_b"], 0.0)
    c2 = bn(c2, p["bn2_gamma"], p["bn2_beta"], p["bn2_mean"], p["bn2_var"])

    feat = jnp.transpose(c2, (0, 3, 1, 2)).reshape(N, -1)    # torch flatten (c,h,w)
    h = jnp.maximum(jnp.dot(feat, p["fc1_w"].T, precision=hp) + p["fc1_b"], 0.0)
    logits = jnp.dot(h, p["fc2_w"].T, precision=hp) + p["fc2_b"]
    return jax.nn.log_softmax(logits, axis=-1)


if __name__ == "__main__":
    key = jax.random.PRNGKey(0)
    pkey, xkey = jax.random.split(key)
    params = init_params(pkey, WINDOW_LENGTH, AXIS_NUM, LABEL_NUM)
    kparams = prepare_kernel_params(params, WINDOW_LENGTH, AXIS_NUM)
    x = jax.random.normal(xkey, (BATCH, 1, WINDOW_LENGTH, AXIS_NUM), jnp.float32)

    fwd = jax.jit(functools.partial(cnn_classifier_forward, label_num=LABEL_NUM))
    out = jax.block_until_ready(fwd(x, kparams))
    assert out.shape == (BATCH, LABEL_NUM)

    ref = forward_reference(x, params)
    # The in-kernel f32 MXU dots may run with default (bf16-pass) contraction
    # precision while the reference runs at HIGHEST; 1e-2 bounds that rounding
    # difference (with matched precision the two paths agree to ~1e-6).
    assert bool(jnp.allclose(out, ref, rtol=1e-2, atol=1e-2)), "mismatch vs reference"

    print("KERNEL_OK")
</pallas_src>

<mosaic_0001>
module attributes {stable_mosaic.version = 11 : i64} {
  func.func @_fused_cnn_kernel(%arg0: memref<32x9xf32, #tpu.memory_space<vmem>>, %arg1: memref<3x9x224xf32, #tpu.memory_space<vmem>>, %arg2: memref<1x224xf32, #tpu.memory_space<vmem>>, %arg3: memref<1x224xf32, #tpu.memory_space<vmem>>, %arg4: memref<1x224xf32, #tpu.memory_space<vmem>>, %arg5: memref<3x224x320xf32, #tpu.memory_space<vmem>>, %arg6: memref<1x320xf32, #tpu.memory_space<vmem>>, %arg7: memref<1x320xf32, #tpu.memory_space<vmem>>, %arg8: memref<1x320xf32, #tpu.memory_space<vmem>>, %arg9: memref<12x320x128xf32, #tpu.memory_space<vmem>>, %arg10: memref<1x128xf32, #tpu.memory_space<vmem>>, %arg11: memref<128x128xf32, #tpu.memory_space<vmem>>, %arg12: memref<1x128xf32, #tpu.memory_space<vmem>>, %arg13: memref<2x128xf32, #tpu.memory_space<vmem>>, %arg14: memref<28x224xf32, #tpu.memory_space<vmem>>, %arg15: memref<24x320xf32, #tpu.memory_space<vmem>>) attributes {dimension_semantics = [], scalar_prefetch = 0 : i64, scratch_operands = 2 : i64, tpu.core_type = #tpu.core_type<tc>} {
    %cst = arith.constant 0.000000e+00 : f32
    %0 = vector.broadcast %cst : f32 to vector<28x224xf32>
    %c0 = arith.constant 0 : index
    %c0_0 = arith.constant 0 : index
    %1 = vector.load %arg0[%c0, %c0_0] : memref<32x9xf32, #tpu.memory_space<vmem>>, vector<28x9xf32>
    %c0_1 = arith.constant 0 : index
    %c0_2 = arith.constant 0 : index
    %c0_3 = arith.constant 0 : index
    %2 = vector.load %arg1[%c0_1, %c0_2, %c0_3] : memref<3x9x224xf32, #tpu.memory_space<vmem>>, vector<1x9x224xf32>
    %3 = vector.shape_cast %2 : vector<1x9x224xf32> to vector<9x224xf32>
    %cst_4 = arith.constant dense<0.000000e+00> : vector<28x224xf32>
    %4 = tpu.matmul %1, %3, %cst_4 {dimension_numbers = #tpu.dot_dimension_numbers<[1], [0], [0], [1], [0, 0, 1, 1], [], []>} : vector<28x9xf32>, vector<9x224xf32>, vector<28x224xf32> -> vector<28x224xf32>
    %5 = arith.addf %0, %4 : vector<28x224xf32>
    %c2 = arith.constant 2 : index
    %c0_5 = arith.constant 0 : index
    %6 = vector.load %arg0[%c2, %c0_5] : memref<32x9xf32, #tpu.memory_space<vmem>>, vector<28x9xf32>
    %c1 = arith.constant 1 : index
    %c0_6 = arith.constant 0 : index
    %c0_7 = arith.constant 0 : index
    %7 = vector.load %arg1[%c1, %c0_6, %c0_7] : memref<3x9x224xf32, #tpu.memory_space<vmem>>, vector<1x9x224xf32>
    %8 = vector.shape_cast %7 : vector<1x9x224xf32> to vector<9x224xf32>
    %cst_8 = arith.constant dense<0.000000e+00> : vector<28x224xf32>
    %9 = tpu.matmul %6, %8, %cst_8 {dimension_numbers = #tpu.dot_dimension_numbers<[1], [0], [0], [1], [0, 0, 1, 1], [], []>} : vector<28x9xf32>, vector<9x224xf32>, vector<28x224xf32> -> vector<28x224xf32>
    %10 = arith.addf %5, %9 : vector<28x224xf32>
    %c4 = arith.constant 4 : index
    %c0_9 = arith.constant 0 : index
    %11 = vector.load %arg0[%c4, %c0_9] : memref<32x9xf32, #tpu.memory_space<vmem>>, vector<28x9xf32>
    %c2_10 = arith.constant 2 : index
    %c0_11 = arith.constant 0 : index
    %c0_12 = arith.constant 0 : index
    %12 = vector.load %arg1[%c2_10, %c0_11, %c0_12] : memref<3x9x224xf32, #tpu.memory_space<vmem>>, vector<1x9x224xf32>
    %13 = vector.shape_cast %12 : vector<1x9x224xf32> to vector<9x224xf32>
    %cst_13 = arith.constant dense<0.000000e+00> : vector<28x224xf32>
    %14 = tpu.matmul %11, %13, %cst_13 {dimension_numbers = #tpu.dot_dimension_numbers<[1], [0], [0], [1], [0, 0, 1, 1], [], []>} : vector<28x9xf32>, vector<9x224xf32>, vector<28x224xf32> -> vector<28x224xf32>
    %15 = arith.addf %10, %14 : vector<28x224xf32>
    %c0_14 = arith.constant 0 : index
    %c0_15 = arith.constant 0 : index
    %16 = vector.load %arg2[%c0_14, %c0_15] : memref<1x224xf32, #tpu.memory_space<vmem>>, vector<1x224xf32>
    %17 = vector.broadcast %16 : vector<1x224xf32> to vector<28x224xf32>
    %18 = arith.addf %15, %17 : vector<28x224xf32>
    %cst_16 = arith.constant 0.000000e+00 : f32
    %19 = vector.broadcast %cst_16 : f32 to vector<28x224xf32>
    %20 = arith.maximumf %18, %19 : vector<28x224xf32>
    %c0_17 = arith.constant 0 : index
    %c0_18 = arith.constant 0 : index
    %21 = vector.load %arg3[%c0_17, %c0_18] : memref<1x224xf32, #tpu.memory_space<vmem>>, vector<1x224xf32>
    %22 = vector.broadcast %21 : vector<1x224xf32> to vector<28x224xf32>
    %23 = arith.mulf %20, %22 : vector<28x224xf32>
    %c0_19 = arith.constant 0 : index
    %c0_20 = arith.constant 0 : index
    %24 = vector.load %arg4[%c0_19, %c0_20] : memref<1x224xf32, #tpu.memory_space<vmem>>, vector<1x224xf32>
    %25 = vector.broadcast %24 : vector<1x224xf32> to vector<28x224xf32>
    %26 = arith.addf %23, %25 : vector<28x224xf32>
    %c0_21 = arith.constant 0 : index
    %c0_22 = arith.constant 0 : index
    %27 = vector.load %arg14[%c0_21, %c0_22] : memref<28x224xf32, #tpu.memory_space<vmem>>, vector<28x224xf32>
    tpu.vector_store %arg14[%c0_21, %c0_22], %26 {strides = array<i32>} : memref<28x224xf32, #tpu.memory_space<vmem>>, vector<28x224xf32>,
    %cst_23 = arith.constant 0.000000e+00 : f32
    %28 = vector.broadcast %cst_23 : f32 to vector<24x320xf32>
    %c0_24 = arith.constant 0 : index
    %c0_25 = arith.constant 0 : index
    %29 = vector.load %arg14[%c0_24, %c0_25] : memref<28x224xf32, #tpu.memory_space<vmem>>, vector<24x224xf32>
    %c0_26 = arith.constant 0 : index
    %c0_27 = arith.constant 0 : index
    %c0_28 = arith.constant 0 : index
    %30 = vector.load %arg5[%c0_26, %c0_27, %c0_28] : memref<3x224x320xf32, #tpu.memory_space<vmem>>, vector<1x224x320xf32>
    %31 = vector.shape_cast %30 : vector<1x224x320xf32> to vector<224x320xf32>
    %cst_29 = arith.constant dense<0.000000e+00> : vector<24x320xf32>
    %32 = tpu.matmul %29, %31, %cst_29 {dimension_numbers = #tpu.dot_dimension_numbers<[1], [0], [0], [1], [0, 0, 1, 1], [], []>} : vector<24x224xf32>, vector<224x320xf32>, vector<24x320xf32> -> vector<24x320xf32>
    %33 = arith.addf %28, %32 : vector<24x320xf32>
    %c2_30 = arith.constant 2 : index
    %c0_31 = arith.constant 0 : index
    %34 = vector.load %arg14[%c2_30, %c0_31] : memref<28x224xf32, #tpu.memory_space<vmem>>, vector<24x224xf32>
    %c1_32 = arith.constant 1 : index
    %c0_33 = arith.constant 0 : index
    %c0_34 = arith.constant 0 : index
    %35 = vector.load %arg5[%c1_32, %c0_33, %c0_34] : memref<3x224x320xf32, #tpu.memory_space<vmem>>, vector<1x224x320xf32>
    %36 = vector.shape_cast %35 : vector<1x224x320xf32> to vector<224x320xf32>
    %cst_35 = arith.constant dense<0.000000e+00> : vector<24x320xf32>
    %37 = tpu.matmul %34, %36, %cst_35 {dimension_numbers = #tpu.dot_dimension_numbers<[1], [0], [0], [1], [0, 0, 1, 1], [], []>} : vector<24x224xf32>, vector<224x320xf32>, vector<24x320xf32> -> vector<24x320xf32>
    %38 = arith.addf %33, %37 : vector<24x320xf32>
    %c4_36 = arith.constant 4 : index
    %c0_37 = arith.constant 0 : index
    %39 = vector.load %arg14[%c4_36, %c0_37] : memref<28x224xf32, #tpu.memory_space<vmem>>, vector<24x224xf32>
    %c2_38 = arith.constant 2 : index
    %c0_39 = arith.constant 0 : index
    %c0_40 = arith.constant 0 : index
    %40 = vector.load %arg5[%c2_38, %c0_39, %c0_40] : memref<3x224x320xf32, #tpu.memory_space<vmem>>, vector<1x224x320xf32>
    %41 = vector.shape_cast %40 : vector<1x224x320xf32> to vector<224x320xf32>
    %cst_41 = arith.constant dense<0.000000e+00> : vector<24x320xf32>
    %42 = tpu.matmul %39, %41, %cst_41 {dimension_numbers = #tpu.dot_dimension_numbers<[1], [0], [0], [1], [0, 0, 1, 1], [], []>} : vector<24x224xf32>, vector<224x320xf32>, vector<24x320xf32> -> vector<24x320xf32>
    %43 = arith.addf %38, %42 : vector<24x320xf32>
    %c0_42 = arith.constant 0 : index
    %c0_43 = arith.constant 0 : index
    %44 = vector.load %arg6[%c0_42, %c0_43] : memref<1x320xf32, #tpu.memory_space<vmem>>, vector<1x320xf32>
    %45 = vector.broadcast %44 : vector<1x320xf32> to vector<24x320xf32>
    %46 = arith.addf %43, %45 : vector<24x320xf32>
    %cst_44 = arith.constant 0.000000e+00 : f32
    %47 = vector.broadcast %cst_44 : f32 to vector<24x320xf32>
    %48 = arith.maximumf %46, %47 : vector<24x320xf32>
    %c0_45 = arith.constant 0 : index
    %c0_46 = arith.constant 0 : index
    %49 = vector.load %arg7[%c0_45, %c0_46] : memref<1x320xf32, #tpu.memory_space<vmem>>, vector<1x320xf32>
    %50 = vector.broadcast %49 : vector<1x320xf32> to vector<24x320xf32>
    %51 = arith.mulf %48, %50 : vector<24x320xf32>
    %c0_47 = arith.constant 0 : index
    %c0_48 = arith.constant 0 : index
    %52 = vector.load %arg8[%c0_47, %c0_48] : memref<1x320xf32, #tpu.memory_space<vmem>>, vector<1x320xf32>
    %53 = vector.broadcast %52 : vector<1x320xf32> to vector<24x320xf32>
    %54 = arith.addf %51, %53 : vector<24x320xf32>
    %c0_49 = arith.constant 0 : index
    %c0_50 = arith.constant 0 : index
    %55 = vector.load %arg15[%c0_49, %c0_50] : memref<24x320xf32, #tpu.memory_space<vmem>>, vector<24x320xf32>
    tpu.vector_store %arg15[%c0_49, %c0_50], %54 {strides = array<i32>} : memref<24x320xf32, #tpu.memory_space<vmem>>, vector<24x320xf32>,
    %cst_51 = arith.constant 0.000000e+00 : f32
    %56 = vector.broadcast %cst_51 : f32 to vector<2x128xf32>
    %c0_52 = arith.constant 0 : index
    %c0_53 = arith.constant 0 : index
    %57 = vector.load %arg15[%c0_52, %c0_53] : memref<24x320xf32, #tpu.memory_space<vmem>>, vector<2x320xf32>
    %c0_54 = arith.constant 0 : index
    %c0_55 = arith.constant 0 : index
    %c0_56 = arith.constant 0 : index
    %58 = vector.load %arg9[%c0_54, %c0_55, %c0_56] : memref<12x320x128xf32, #tpu.memory_space<vmem>>, vector<1x320x128xf32>
    %59 = vector.shape_cast %58 : vector<1x320x128xf32> to vector<320x128xf32>
    %cst_57 = arith.constant dense<0.000000e+00> : vector<2x128xf32>
    %60 = tpu.matmul %57, %59, %cst_57 {dimension_numbers = #tpu.dot_dimension_numbers<[1], [0], [0], [1], [0, 0, 1, 1], [], []>} : vector<2x320xf32>, vector<320x128xf32>, vector<2x128xf32> -> vector<2x128xf32>
    %61 = arith.addf %56, %60 : vector<2x128xf32>
    %c2_58 = arith.constant 2 : index
    %c0_59 = arith.constant 0 : index
    %62 = vector.load %arg15[%c2_58, %c0_59] : memref<24x320xf32, #tpu.memory_space<vmem>>, vector<2x320xf32>
    %c1_60 = arith.constant 1 : index
    %c0_61 = arith.constant 0 : index
    %c0_62 = arith.constant 0 : index
    %63 = vector.load %arg9[%c1_60, %c0_61, %c0_62] : memref<12x320x128xf32, #tpu.memory_space<vmem>>, vector<1x320x128xf32>
    %64 = vector.shape_cast %63 : vector<1x320x128xf32> to vector<320x128xf32>
    %cst_63 = arith.constant dense<0.000000e+00> : vector<2x128xf32>
    %65 = tpu.matmul %62, %64, %cst_63 {dimension_numbers = #tpu.dot_dimension_numbers<[1], [0], [0], [1], [0, 0, 1, 1], [], []>} : vector<2x320xf32>, vector<320x128xf32>, vector<2x128xf32> -> vector<2x128xf32>
    %66 = arith.addf %61, %65 : vector<2x128xf32>
    %c4_64 = arith.constant 4 : index
    %c0_65 = arith.constant 0 : index
    %67 = vector.load %arg15[%c4_64, %c0_65] : memref<24x320xf32, #tpu.memory_space<vmem>>, vector<2x320xf32>
    %c2_66 = arith.constant 2 : index
    %c0_67 = arith.constant 0 : index
    %c0_68 = arith.constant 0 : index
    %68 = vector.load %arg9[%c2_66, %c0_67, %c0_68] : memref<12x320x128xf32, #tpu.memory_space<vmem>>, vector<1x320x128xf32>
    %69 = vector.shape_cast %68 : vector<1x320x128xf32> to vector<320x128xf32>
    %cst_69 = arith.constant dense<0.000000e+00> : vector<2x128xf32>
    %70 = tpu.matmul %67, %69, %cst_69 {dimension_numbers = #tpu.dot_dimension_numbers<[1], [0], [0], [1], [0, 0, 1, 1], [], []>} : vector<2x320xf32>, vector<320x128xf32>, vector<2x128xf32> -> vector<2x128xf32>
    %71 = arith.addf %66, %70 : vector<2x128xf32>
    %c6 = arith.constant 6 : index
    %c0_70 = arith.constant 0 : index
    %72 = vector.load %arg15[%c6, %c0_70] : memref<24x320xf32, #tpu.memory_space<vmem>>, vector<2x320xf32>
    %c3 = arith.constant 3 : index
    %c0_71 = arith.constant 0 : index
    %c0_72 = arith.constant 0 : index
    %73 = vector.load %arg9[%c3, %c0_71, %c0_72] : memref<12x320x128xf32, #tpu.memory_space<vmem>>, vector<1x320x128xf32>
    %74 = vector.shape_cast %73 : vector<1x320x128xf32> to vector<320x128xf32>
    %cst_73 = arith.constant dense<0.000000e+00> : vector<2x128xf32>
    %75 = tpu.matmul %72, %74, %cst_73 {dimension_numbers = #tpu.dot_dimension_numbers<[1], [0], [0], [1], [0, 0, 1, 1], [], []>} : vector<2x320xf32>, vector<320x128xf32>, vector<2x128xf32> -> vector<2x128xf32>
    %76 = arith.addf %71, %75 : vector<2x128xf32>
    %c8 = arith.constant 8 : index
    %c0_74 = arith.constant 0 : index
    %77 = vector.load %arg15[%c8, %c0_74] : memref<24x320xf32, #tpu.memory_space<vmem>>, vector<2x320xf32>
    %c4_75 = arith.constant 4 : index
    %c0_76 = arith.constant 0 : index
    %c0_77 = arith.constant 0 : index
    %78 = vector.load %arg9[%c4_75, %c0_76, %c0_77] : memref<12x320x128xf32, #tpu.memory_space<vmem>>, vector<1x320x128xf32>
    %79 = vector.shape_cast %78 : vector<1x320x128xf32> to vector<320x128xf32>
    %cst_78 = arith.constant dense<0.000000e+00> : vector<2x128xf32>
    %80 = tpu.matmul %77, %79, %cst_78 {dimension_numbers = #tpu.dot_dimension_numbers<[1], [0], [0], [1], [0, 0, 1, 1], [], []>} : vector<2x320xf32>, vector<320x128xf32>, vector<2x128xf32> -> vector<2x128xf32>
    %81 = arith.addf %76, %80 : vector<2x128xf32>
    %c10 = arith.constant 10 : index
    %c0_79 = arith.constant 0 : index
    %82 = vector.load %arg15[%c10, %c0_79] : memref<24x320xf32, #tpu.memory_space<vmem>>, vector<2x320xf32>
    %c5 = arith.constant 5 : index
    %c0_80 = arith.constant 0 : index
    %c0_81 = arith.constant 0 : index
    %83 = vector.load %arg9[%c5, %c0_80, %c0_81] : memref<12x320x128xf32, #tpu.memory_space<vmem>>, vector<1x320x128xf32>
    %84 = vector.shape_cast %83 : vector<1x320x128xf32> to vector<320x128xf32>
    %cst_82 = arith.constant dense<0.000000e+00> : vector<2x128xf32>
    %85 = tpu.matmul %82, %84, %cst_82 {dimension_numbers = #tpu.dot_dimension_numbers<[1], [0], [0], [1], [0, 0, 1, 1], [], []>} : vector<2x320xf32>, vector<320x128xf32>, vector<2x128xf32> -> vector<2x128xf32>
    %86 = arith.addf %81, %85 : vector<2x128xf32>
    %c12 = arith.constant 12 : index
    %c0_83 = arith.constant 0 : index
    %87 = vector.load %arg15[%c12, %c0_83] : memref<24x320xf32, #tpu.memory_space<vmem>>, vector<2x320xf32>
    %c6_84 = arith.constant 6 : index
    %c0_85 = arith.constant 0 : index
    %c0_86 = arith.constant 0 : index
    %88 = vector.load %arg9[%c6_84, %c0_85, %c0_86] : memref<12x320x128xf32, #tpu.memory_space<vmem>>, vector<1x320x128xf32>
    %89 = vector.shape_cast %88 : vector<1x320x128xf32> to vector<320x128xf32>
    %cst_87 = arith.constant dense<0.000000e+00> : vector<2x128xf32>
    %90 = tpu.matmul %87, %89, %cst_87 {dimension_numbers = #tpu.dot_dimension_numbers<[1], [0], [0], [1], [0, 0, 1, 1], [], []>} : vector<2x320xf32>, vector<320x128xf32>, vector<2x128xf32> -> vector<2x128xf32>
    %91 = arith.addf %86, %90 : vector<2x128xf32>
    %c14 = arith.constant 14 : index
    %c0_88 = arith.constant 0 : index
    %92 = vector.load %arg15[%c14, %c0_88] : memref<24x320xf32, #tpu.memory_space<vmem>>, vector<2x320xf32>
    %c7 = arith.constant 7 : index
    %c0_89 = arith.constant 0 : index
    %c0_90 = arith.constant 0 : index
    %93 = vector.load %arg9[%c7, %c0_89, %c0_90] : memref<12x320x128xf32, #tpu.memory_space<vmem>>, vector<1x320x128xf32>
    %94 = vector.shape_cast %93 : vector<1x320x128xf32> to vector<320x128xf32>
    %cst_91 = arith.constant dense<0.000000e+00> : vector<2x128xf32>
    %95 = tpu.matmul %92, %94, %cst_91 {dimension_numbers = #tpu.dot_dimension_numbers<[1], [0], [0], [1], [0, 0, 1, 1], [], []>} : vector<2x320xf32>, vector<320x128xf32>, vector<2x128xf32> -> vector<2x128xf32>
    %96 = arith.addf %91, %95 : vector<2x128xf32>
    %c16 = arith.constant 16 : index
    %c0_92 = arith.constant 0 : index
    %97 = vector.load %arg15[%c16, %c0_92] : memref<24x320xf32, #tpu.memory_space<vmem>>, vector<2x320xf32>
    %c8_93 = arith.constant 8 : index
    %c0_94 = arith.constant 0 : index
    %c0_95 = arith.constant 0 : index
    %98 = vector.load %arg9[%c8_93, %c0_94, %c0_95] : memref<12x320x128xf32, #tpu.memory_space<vmem>>, vector<1x320x128xf32>
    %99 = vector.shape_cast %98 : vector<1x320x128xf32> to vector<320x128xf32>
    %cst_96 = arith.constant dense<0.000000e+00> : vector<2x128xf32>
    %100 = tpu.matmul %97, %99, %cst_96 {dimension_numbers = #tpu.dot_dimension_numbers<[1], [0], [0], [1], [0, 0, 1, 1], [], []>} : vector<2x320xf32>, vector<320x128xf32>, vector<2x128xf32> -> vector<2x128xf32>
    %101 = arith.addf %96, %100 : vector<2x128xf32>
    %c18 = arith.constant 18 : index
    %c0_97 = arith.constant 0 : index
    %102 = vector.load %arg15[%c18, %c0_97] : memref<24x320xf32, #tpu.memory_space<vmem>>, vector<2x320xf32>
    %c9 = arith.constant 9 : index
    %c0_98 = arith.constant 0 : index
    %c0_99 = arith.constant 0 : index
    %103 = vector.load %arg9[%c9, %c0_98, %c0_99] : memref<12x320x128xf32, #tpu.memory_space<vmem>>, vector<1x320x128xf32>
    %104 = vector.shape_cast %103 : vector<1x320x128xf32> to vector<320x128xf32>
    %cst_100 = arith.constant dense<0.000000e+00> : vector<2x128xf32>
    %105 = tpu.matmul %102, %104, %cst_100 {dimension_numbers = #tpu.dot_dimension_numbers<[1], [0], [0], [1], [0, 0, 1, 1], [], []>} : vector<2x320xf32>, vector<320x128xf32>, vector<2x128xf32> -> vector<2x128xf32>
    %106 = arith.addf %101, %105 : vector<2x128xf32>
    %c20 = arith.constant 20 : index
    %c0_101 = arith.constant 0 : index
    %107 = vector.load %arg15[%c20, %c0_101] : memref<24x320xf32, #tpu.memory_space<vmem>>, vector<2x320xf32>
    %c10_102 = arith.constant 10 : index
    %c0_103 = arith.constant 0 : index
    %c0_104 = arith.constant 0 : index
    %108 = vector.load %arg9[%c10_102, %c0_103, %c0_104] : memref<12x320x128xf32, #tpu.memory_space<vmem>>, vector<1x320x128xf32>
    %109 = vector.shape_cast %108 : vector<1x320x128xf32> to vector<320x128xf32>
    %cst_105 = arith.constant dense<0.000000e+00> : vector<2x128xf32>
    %110 = tpu.matmul %107, %109, %cst_105 {dimension_numbers = #tpu.dot_dimension_numbers<[1], [0], [0], [1], [0, 0, 1, 1], [], []>} : vector<2x320xf32>, vector<320x128xf32>, vector<2x128xf32> -> vector<2x128xf32>
    %111 = arith.addf %106, %110 : vector<2x128xf32>
    %c22 = arith.constant 22 : index
    %c0_106 = arith.constant 0 : index
    %112 = vector.load %arg15[%c22, %c0_106] : memref<24x320xf32, #tpu.memory_space<vmem>>, vector<2x320xf32>
    %c11 = arith.constant 11 : index
    %c0_107 = arith.constant 0 : index
    %c0_108 = arith.constant 0 : index
    %113 = vector.load %arg9[%c11, %c0_107, %c0_108] : memref<12x320x128xf32, #tpu.memory_space<vmem>>, vector<1x320x128xf32>
    %114 = vector.shape_cast %113 : vector<1x320x128xf32> to vector<320x128xf32>
    %cst_109 = arith.constant dense<0.000000e+00> : vector<2x128xf32>
    %115 = tpu.matmul %112, %114, %cst_109 {dimension_numbers = #tpu.dot_dimension_numbers<[1], [0], [0], [1], [0, 0, 1, 1], [], []>} : vector<2x320xf32>, vector<320x128xf32>, vector<2x128xf32> -> vector<2x128xf32>
    %116 = arith.addf %111, %115 : vector<2x128xf32>
    %c0_110 = arith.constant 0 : index
    %c0_111 = arith.constant 0 : index
    %117 = vector.load %arg10[%c0_110, %c0_111] : memref<1x128xf32, #tpu.memory_space<vmem>>, vector<1x128xf32>
    %118 = vector.broadcast %117 : vector<1x128xf32> to vector<2x128xf32>
    %119 = arith.addf %116, %118 : vector<2x128xf32>
    %cst_112 = arith.constant 0.000000e+00 : f32
    %120 = vector.broadcast %cst_112 : f32 to vector<2x128xf32>
    %121 = arith.maximumf %119, %120 : vector<2x128xf32>
    %c0_113 = arith.constant 0 : index
    %c0_114 = arith.constant 0 : index
    %122 = vector.load %arg11[%c0_113, %c0_114] : memref<128x128xf32, #tpu.memory_space<vmem>>, vector<128x128xf32>
    %cst_115 = arith.constant dense<0.000000e+00> : vector<2x128xf32>
    %123 = tpu.matmul %121, %122, %cst_115 {dimension_numbers = #tpu.dot_dimension_numbers<[1], [0], [0], [1], [0, 0, 1, 1], [], []>} : vector<2x128xf32>, vector<128x128xf32>, vector<2x128xf32> -> vector<2x128xf32>
    %c0_116 = arith.constant 0 : index
    %c0_117 = arith.constant 0 : index
    %124 = vector.load %arg12[%c0_116, %c0_117] : memref<1x128xf32, #tpu.memory_space<vmem>>, vector<1x128xf32>
    %125 = vector.broadcast %124 : vector<1x128xf32> to vector<2x128xf32>
    %126 = arith.addf %123, %125 : vector<2x128xf32>
    %cst_118 = arith.constant dense<0xFF800000> : vector<2xf32>
    %127 = vector.multi_reduction <maximumf>, %126, %cst_118 [1] : vector<2x128xf32> to vector<2xf32>
    %128 = vector.shape_cast %127 : vector<2xf32> to vector<2x1xf32>
    %129 = vector.broadcast %128 : vector<2x1xf32> to vector<2x128xf32>
    %130 = arith.subf %126, %129 : vector<2x128xf32>
    %131 = math.exp %130 : vector<2x128xf32>
    %cst_119 = arith.constant dense<0.000000e+00> : vector<2xf32>
    %132 = vector.multi_reduction <add>, %131, %cst_119 [1] : vector<2x128xf32> to vector<2xf32>
    %133 = vector.shape_cast %132 : vector<2xf32> to vector<2x1xf32>
    %134 = math.log %133 : vector<2x1xf32>
    %135 = vector.broadcast %134 : vector<2x1xf32> to vector<2x128xf32>
    %136 = arith.subf %130, %135 : vector<2x128xf32>
    %c0_120 = arith.constant 0 : index
    %c0_121 = arith.constant 0 : index
    %137 = vector.load %arg13[%c0_120, %c0_121] : memref<2x128xf32, #tpu.memory_space<vmem>>, vector<2x128xf32>
    tpu.vector_store %arg13[%c0_120, %c0_121], %136 {strides = array<i32>} : memref<2x128xf32, #tpu.memory_space<vmem>>, vector<2x128xf32>,
    return
  }
}

</mosaic_0001>

<llo_original>
// kernel: cnn_classifier_forward.1
$region0: #{cnn_classifier_forward.1}
  #allocation0 [shape = 'u32[]', space=smem, size = 0x4, offset = 0x4, fixed_abs, tag = 'smem constant byte address 0x4 - core index']
  #allocation1 [shape = 'u32[72,128]{1,0:T(1,128)}', space=vmem, size = 0x9000, scoped, tag = 'internal scratch']
  #allocation2 [shape = 'f32[28,224]{1,0:T(8,128)}', space=vmem, size = 0x8000, scoped, tag = 'scratch operand']
  #allocation3 [shape = 'f32[24,320]{1,0:T(8,128)}', space=vmem, size = 0x9000, scoped, tag = 'scratch operand']
  %s0 = inlined_call_operand.vmem [shape: f32[32,9], index: 0, kind: input, shape index: {}]
  %s1 = inlined_call_operand.vmem [shape: f32[3,9,224], index: 1, kind: input, shape index: {}]
  %s2 = inlined_call_operand.vmem [shape: f32[1,224], index: 2, kind: input, shape index: {}]
  %s3 = inlined_call_operand.vmem [shape: f32[1,224], index: 3, kind: input, shape index: {}]
  %s4 = inlined_call_operand.vmem [shape: f32[1,224], index: 4, kind: input, shape index: {}]
  %s5 = inlined_call_operand.vmem [shape: f32[3,224,320], index: 5, kind: input, shape index: {}]
  %s6 = inlined_call_operand.vmem [shape: f32[1,320], index: 6, kind: input, shape index: {}]
  %s7 = inlined_call_operand.vmem [shape: f32[1,320], index: 7, kind: input, shape index: {}]
  %s8 = inlined_call_operand.vmem [shape: f32[1,320], index: 8, kind: input, shape index: {}]
  %s9 = inlined_call_operand.vmem [shape: f32[12,320,128], index: 9, kind: input, shape index: {}]
  %s10 = inlined_call_operand.vmem [shape: f32[1,128], index: 10, kind: input, shape index: {}]
  %s11 = inlined_call_operand.vmem [shape: f32[128,128], index: 11, kind: input, shape index: {}]
  %s12 = inlined_call_operand.vmem [shape: f32[1,128], index: 12, kind: input, shape index: {}]
  %s13 = inlined_call_operand.hbm [shape: f32[2,128], index: 13, kind: output, shape index: {}]
  %s14 = sld [smem:[#allocation0]]
  $region62: #{cnn_classifier_forward.1} parent=0
    _
  %s16 = ssub.s32 1, %s14
  %s17 = scalar_select 0, %s16, %s14
  $region1: #{cnn_classifier_forward.1} parent=0
    #allocation4 [shape = 'u8[1024]{0}', space=vmem, size = 0x400, scoped, tag = 'output window, operand 0, single buffered']
    #allocation5 [shape = 's32[1]{0}', space=sflag, size = 0x4, scoped, tag = 'scoped memory for cnn_classifier_forward.1']
    %18 = vsyncpa [#allocation5], 0
    // Predicated region
    $region2: #{cnn_classifier_forward.1} parent=1 // pred_check
      _
    $region3: #{cnn_classifier_forward.1} parent=1 // pred_check_branch
      %20 = sbr.rel (0) target = $region5
    $region4: #{cnn_classifier_forward.1} parent=1 // pred_region
      _
    $region5: #{cnn_classifier_forward.1} parent=1 // pred_fallthru
      _
    // Predicated region
    $region6: #{cnn_classifier_forward.1} parent=1 // pred_check
      _
    $region7: #{cnn_classifier_forward.1} parent=1 // pred_check_branch
      %22 = sbr.rel (0) target = $region9
    $region8: #{cnn_classifier_forward.1} parent=1 // pred_region
      _
    $region9: #{cnn_classifier_forward.1} parent=1 // pred_fallthru
      _
    // Predicated region
    $region10: #{cnn_classifier_forward.1} parent=1 // pred_check
      _
    $region11: #{cnn_classifier_forward.1} parent=1 // pred_check_branch
      %24 = sbr.rel (0) target = $region13
    $region12: #{cnn_classifier_forward.1} parent=1 // pred_region
      _
    $region13: #{cnn_classifier_forward.1} parent=1 // pred_fallthru
      _
    // Predicated region
    $region14: #{cnn_classifier_forward.1} parent=1 // pred_check
      _
    $region15: #{cnn_classifier_forward.1} parent=1 // pred_check_branch
      %26 = sbr.rel (0) target = $region17
    $region16: #{cnn_classifier_forward.1} parent=1 // pred_region
      _
    $region17: #{cnn_classifier_forward.1} parent=1 // pred_fallthru
      _
    // Predicated region
    $region18: #{cnn_classifier_forward.1} parent=1 // pred_check
      _
    $region19: #{cnn_classifier_forward.1} parent=1 // pred_check_branch
      %28 = sbr.rel (0) target = $region21
    $region20: #{cnn_classifier_forward.1} parent=1 // pred_region
      _
    $region21: #{cnn_classifier_forward.1} parent=1 // pred_fallthru
      _
    // Predicated region
    $region22: #{cnn_classifier_forward.1} parent=1 // pred_check
      _
    $region23: #{cnn_classifier_forward.1} parent=1 // pred_check_branch
      %30 = sbr.rel (0) target = $region25
    $region24: #{cnn_classifier_forward.1} parent=1 // pred_region
      _
    $region25: #{cnn_classifier_forward.1} parent=1 // pred_fallthru
      _
    // Predicated region
    $region26: #{cnn_classifier_forward.1} parent=1 // pred_check
      _
    $region27: #{cnn_classifier_forward.1} parent=1 // pred_check_branch
      %32 = sbr.rel (0) target = $region29
    $region28: #{cnn_classifier_forward.1} parent=1 // pred_region
      _
    $region29: #{cnn_classifier_forward.1} parent=1 // pred_fallthru
      _
    // Predicated region
    $region30: #{cnn_classifier_forward.1} parent=1 // pred_check
      _
    $region31: #{cnn_classifier_forward.1} parent=1 // pred_check_branch
      %34 = sbr.rel (0) target = $region33
    $region32: #{cnn_classifier_forward.1} parent=1 // pred_region
      _
    $region33: #{cnn_classifier_forward.1} parent=1 // pred_fallthru
      _
    // Predicated region
    $region34: #{cnn_classifier_forward.1} parent=1 // pred_check
      _
    $region35: #{cnn_classifier_forward.1} parent=1 // pred_check_branch
      %36 = sbr.rel (0) target = $region37
    $region36: #{cnn_classifier_forward.1} parent=1 // pred_region
      _
    $region37: #{cnn_classifier_forward.1} parent=1 // pred_fallthru
      _
    // Predicated region
    $region38: #{cnn_classifier_forward.1} parent=1 // pred_check
      _
    $region39: #{cnn_classifier_forward.1} parent=1 // pred_check_branch
      %38 = sbr.rel (0) target = $region41
    $region40: #{cnn_classifier_forward.1} parent=1 // pred_region
      _
    $region41: #{cnn_classifier_forward.1} parent=1 // pred_fallthru
      _
    // Predicated region
    $region42: #{cnn_classifier_forward.1} parent=1 // pred_check
      _
    $region43: #{cnn_classifier_forward.1} parent=1 // pred_check_branch
      %40 = sbr.rel (0) target = $region45
    $region44: #{cnn_classifier_forward.1} parent=1 // pred_region
      _
    $region45: #{cnn_classifier_forward.1} parent=1 // pred_fallthru
      _
    // Predicated region
    $region46: #{cnn_classifier_forward.1} parent=1 // pred_check
      _
    $region47: #{cnn_classifier_forward.1} parent=1 // pred_check_branch
      %42 = sbr.rel (0) target = $region49
    $region48: #{cnn_classifier_forward.1} parent=1 // pred_region
      _
    $region49: #{cnn_classifier_forward.1} parent=1 // pred_fallthru
      _
    // Predicated region
    $region50: #{cnn_classifier_forward.1} parent=1 // pred_check
      _
    $region51: #{cnn_classifier_forward.1} parent=1 // pred_check_branch
      %44 = sbr.rel (0) target = $region53
    $region52: #{cnn_classifier_forward.1} parent=1 // pred_region
      _
    $region53: #{cnn_classifier_forward.1} parent=1 // pred_fallthru
      _
    %v45 = vld [vmem:[%s0] sm:$0xff]
    %v46 = vld [vmem:[%s0 + $0x8] sm:$0xff]
    %v47 = vld [vmem:[%s0 + $0x10] sm:$0xff]
    %v48 = vld [vmem:[%s0 + $0x18] sm:$0xf]
    %v49 = vld [vmem:[%s1] sm:$0xff]
    %v50 = vld [vmem:[%s1 + $0x8] sm:$0xff]
    %v51 = vld [vmem:[%s1 + $0x10] sm:$0x1]
    %v52 = vld [vmem:[%s1 + $0x18] sm:$0x1]
    %v53 = vld [vmem:[%s0 + $0x2] sm:$0xff]
    %v54 = vld [vmem:[%s0 + $0xa] sm:$0xff]
    %v55 = vld [vmem:[%s0 + $0x12] sm:$0xff]
    %v56 = vld [vmem:[%s0 + $0x1a] sm:$0xf]
    %s57 = scalar_lea.vmem %s1, 32
    %v58 = vld [vmem:[%s57] sm:$0xff]
    %v59 = vld [vmem:[%s57 + $0x8] sm:$0xff]
    %v60 = vld [vmem:[%s57 + $0x10] sm:$0x1]
    %v61 = vld [vmem:[%s57 + $0x18] sm:$0x1]
    %vm62 = vcmask 72704
    %v64 = vsel %vm62, %v53, 0
    %v67 = vsel %vm62, %v54, 0
    %v70 = vsel %vm62, %v55, 0
    %v73 = vsel %vm62, %v56, 0
    %vm75 = vcmask 1040384
    %v77 = vsel %vm75, %v60, 0
    %v80 = vsel %vm75, %v61, 0
    %82 = vmatpush.msra.mxu0 0.0
    %83 = vmatpush.msra.mxu0 0.0
    %84 = vmatpush.msra.mxu0 0.0
    %85 = vmatpush.msra.mxu0 0.0
    %86 = vmatpush.msra.mxu0 0.0
    %87 = vmatpush.msra.mxu0 0.0
    %88 = vmatpush.msra.mxu0 0.0
    %89 = vmatpush.msra.mxu0 0.0
    %90 = vmatpush.msra.mxu0 0.0
    %91 = vmatpush.msra.mxu0 0.0
    %92 = vmatpush.msra.mxu0 0.0
    %93 = vmatpush.msra.mxu0 0.0
    %94 = vmatpush.msra.mxu0 0.0
    %95 = vmatpush.msra.mxu0 0.0
    %96 = vmatpush.msra.mxu0 %v77
    %97 = vmatpush.msra.mxu0 %v58
    %98 = vmatmul.f32.gmra.mxu0 %v64
    %v99 = vpop.f32.mrf.mxu0
    %v100 = vadd.f32 0.0, %v99
    %101 = vmatmul.f32.gmra.mxu0 %v67
    %v102 = vpop.f32.mrf.mxu0
    %v103 = vadd.f32 0.0, %v102
    %104 = vmatmul.f32.gmra.mxu0 %v70
    %v105 = vpop.f32.mrf.mxu0
    %v106 = vadd.f32 0.0, %v105
    %107 = vmatmul.f32.gmra.mxu0 %v73
    %v108 = vpop.f32.mrf.mxu0
    %v109 = vadd.f32 0.0, %v108
    %110 = vdwg.mxu0
    %111 = vmatpush.msra.mxu0 0.0
    %112 = vmatpush.msra.mxu0 0.0
    %113 = vmatpush.msra.mxu0 0.0
    %114 = vmatpush.msra.mxu0 0.0
    %115 = vmatpush.msra.mxu0 0.0
    %116 = vmatpush.msra.mxu0 0.0
    %117 = vmatpush.msra.mxu0 0.0
    %118 = vmatpush.msra.mxu0 0.0
    %119 = vmatpush.msra.mxu0 0.0
    %120 = vmatpush.msra.mxu0 0.0
    %121 = vmatpush.msra.mxu0 0.0
    %122 = vmatpush.msra.mxu0 0.0
    %123 = vmatpush.msra.mxu0 0.0
    %124 = vmatpush.msra.mxu0 0.0
    %125 = vmatpush.msra.mxu0 %v80
    %126 = vmatpush.msra.mxu0 %v59
    %127 = vmatmul.f32.gmra.mxu0 %v64
    %v128 = vpop.f32.mrf.mxu0
    %v129 = vadd.f32 0.0, %v128
    %130 = vmatmul.f32.gmra.mxu0 %v67
    %v131 = vpop.f32.mrf.mxu0
    %v132 = vadd.f32 0.0, %v131
    %133 = vmatmul.f32.gmra.mxu0 %v70
    %v134 = vpop.f32.mrf.mxu0
    %v135 = vadd.f32 0.0, %v134
    %136 = vmatmul.f32.gmra.mxu0 %v73
    %v137 = vpop.f32.mrf.mxu0
    %v138 = vadd.f32 0.0, %v137
    %139 = vdwg.mxu0
    %v141 = vsel %vm62, %v45, 0
    %v144 = vsel %vm62, %v46, 0
    %v147 = vsel %vm62, %v47, 0
    %v150 = vsel %vm62, %v48, 0
    %v153 = vsel %vm75, %v51, 0
    %v156 = vsel %vm75, %v52, 0
    %158 = vmatpush.msra.mxu0 0.0
    %159 = vmatpush.msra.mxu0 0.0
    %160 = vmatpush.msra.mxu0 0.0
    %161 = vmatpush.msra.mxu0 0.0
    %162 = vmatpush.msra.mxu0 0.0
    %163 = vmatpush.msra.mxu0 0.0
    %164 = vmatpush.msra.mxu0 0.0
    %165 = vmatpush.msra.mxu0 0.0
    %166 = vmatpush.msra.mxu0 0.0
    %167 = vmatpush.msra.mxu0 0.0
    %168 = vmatpush.msra.mxu0 0.0
    %169 = vmatpush.msra.mxu0 0.0
    %170 = vmatpush.msra.mxu0 0.0
    %171 = vmatpush.msra.mxu0 0.0
    %172 = vmatpush.msra.mxu0 %v153
    %173 = vmatpush.msra.mxu0 %v49
    %174 = vmatmul.f32.gmra.mxu0 %v141
    %v175 = vpop.f32.mrf.mxu0
    %v176 = vadd.f32 %v100, %v175
    %177 = vmatmul.f32.gmra.mxu0 %v144
    %v178 = vpop.f32.mrf.mxu0
    %v179 = vadd.f32 %v103, %v178
    %180 = vmatmul.f32.gmra.mxu0 %v147
    %v181 = vpop.f32.mrf.mxu0
    %v182 = vadd.f32 %v106, %v181
    %183 = vmatmul.f32.gmra.mxu0 %v150
    %v184 = vpop.f32.mrf.mxu0
    %v185 = vadd.f32 %v109, %v184
    %186 = vdwg.mxu0
    %187 = vmatpush.msra.mxu0 0.0
    %188 = vmatpush.msra.mxu0 0.0
    %189 = vmatpush.msra.mxu0 0.0
    %190 = vmatpush.msra.mxu0 0.0
    %191 = vmatpush.msra.mxu0 0.0
    %192 = vmatpush.msra.mxu0 0.0
    %193 = vmatpush.msra.mxu0 0.0
    %194 = vmatpush.msra.mxu0 0.0
    %195 = vmatpush.msra.mxu0 0.0
    %196 = vmatpush.msra.mxu0 0.0
    %197 = vmatpush.msra.mxu0 0.0
    %198 = vmatpush.msra.mxu0 0.0
    %199 = vmatpush.msra.mxu0 0.0
    %200 = vmatpush.msra.mxu0 0.0
    %201 = vmatpush.msra.mxu0 %v156
    %202 = vmatpush.msra.mxu0 %v50
    %203 = vmatmul.f32.gmra.mxu0 %v141
    %v204 = vpop.f32.mrf.mxu0
    %v205 = vadd.f32 %v129, %v204
    %206 = vmatmul.f32.gmra.mxu0 %v144
    %v207 = vpop.f32.mrf.mxu0
    %v208 = vadd.f32 %v132, %v207
    %209 = vmatmul.f32.gmra.mxu0 %v147
    %v210 = vpop.f32.mrf.mxu0
    %v211 = vadd.f32 %v135, %v210
    %212 = vmatmul.f32.gmra.mxu0 %v150
    %v213 = vpop.f32.mrf.mxu0
    %v214 = vadd.f32 %v138, %v213
    %215 = vdwg.mxu0
    %v216 = vld [vmem:[%s0 + $0x4] sm:$0xff]
    %v217 = vld [vmem:[%s0 + $0xc] sm:$0xff]
    %v218 = vld [vmem:[%s0 + $0x14] sm:$0xff]
    %v219 = vld [vmem:[%s0 + $0x1c] sm:$0xf]
    %s220 = scalar_lea.vmem %s1, 64
    %v221 = vld [vmem:[%s220] sm:$0xff]
    %v222 = vld [vmem:[%s220 + $0x8] sm:$0xff]
    %v223 = vld [vmem:[%s220 + $0x10] sm:$0x1]
    %v224 = vld [vmem:[%s220 + $0x18] sm:$0x1]
    %v226 = vsel %vm62, %v216, 0
    %v229 = vsel %vm62, %v217, 0
    %v232 = vsel %vm62, %v218, 0
    %v235 = vsel %vm62, %v219, 0
    %v238 = vsel %vm75, %v223, 0
    %v241 = vsel %vm75, %v224, 0
    %243 = vmatpush.msra.mxu0 0.0
    %244 = vmatpush.msra.mxu0 0.0
    %245 = vmatpush.msra.mxu0 0.0
    %246 = vmatpush.msra.mxu0 0.0
    %247 = vmatpush.msra.mxu0 0.0
    %248 = vmatpush.msra.mxu0 0.0
    %249 = vmatpush.msra.mxu0 0.0
    %250 = vmatpush.msra.mxu0 0.0
    %251 = vmatpush.msra.mxu0 0.0
    %252 = vmatpush.msra.mxu0 0.0
    %253 = vmatpush.msra.mxu0 0.0
    %254 = vmatpush.msra.mxu0 0.0
    %255 = vmatpush.msra.mxu0 0.0
    %256 = vmatpush.msra.mxu0 0.0
    %257 = vmatpush.msra.mxu0 %v238
    %258 = vmatpush.msra.mxu0 %v221
    %259 = vmatmul.f32.gmra.mxu0 %v226
    %v260 = vpop.f32.mrf.mxu0
    %v261 = vadd.f32 0.0, %v260
    %262 = vmatmul.f32.gmra.mxu0 %v229
    %v263 = vpop.f32.mrf.mxu0
    %v264 = vadd.f32 0.0, %v263
    %265 = vmatmul.f32.gmra.mxu0 %v232
    %v266 = vpop.f32.mrf.mxu0
    %v267 = vadd.f32 0.0, %v266
    %268 = vmatmul.f32.gmra.mxu0 %v235
    %v269 = vpop.f32.mrf.mxu0
    %v270 = vadd.f32 0.0, %v269
    %271 = vdwg.mxu0
    %272 = vmatpush.msra.mxu0 0.0
    %273 = vmatpush.msra.mxu0 0.0
    %274 = vmatpush.msra.mxu0 0.0
    %275 = vmatpush.msra.mxu0 0.0
    %276 = vmatpush.msra.mxu0 0.0
    %277 = vmatpush.msra.mxu0 0.0
    %278 = vmatpush.msra.mxu0 0.0
    %279 = vmatpush.msra.mxu0 0.0
    %280 = vmatpush.msra.mxu0 0.0
    %281 = vmatpush.msra.mxu0 0.0
    %282 = vmatpush.msra.mxu0 0.0
    %283 = vmatpush.msra.mxu0 0.0
    %284 = vmatpush.msra.mxu0 0.0
    %285 = vmatpush.msra.mxu0 0.0
    %286 = vmatpush.msra.mxu0 %v241
    %287 = vmatpush.msra.mxu0 %v222
    %288 = vmatmul.f32.gmra.mxu0 %v226
    %v289 = vpop.f32.mrf.mxu0
    %v290 = vadd.f32 0.0, %v289
    %291 = vmatmul.f32.gmra.mxu0 %v229
    %v292 = vpop.f32.mrf.mxu0
    %v293 = vadd.f32 0.0, %v292
    %294 = vmatmul.f32.gmra.mxu0 %v232
    %v295 = vpop.f32.mrf.mxu0
    %v296 = vadd.f32 0.0, %v295
    %297 = vmatmul.f32.gmra.mxu0 %v235
    %v298 = vpop.f32.mrf.mxu0
    %v299 = vadd.f32 0.0, %v298
    %300 = vdwg.mxu0
    %v301 = vadd.f32 %v176, %v261
    %v302 = vadd.f32 %v205, %v290
    %v303 = vadd.f32 %v179, %v264
    %v304 = vadd.f32 %v208, %v293
    %v305 = vadd.f32 %v182, %v267
    %v306 = vadd.f32 %v211, %v296
    %v307 = vadd.f32 %v185, %v270
    %v308 = vadd.f32 %v214, %v299
    %v309 = vld [vmem:[%s2] sm:$0x3]
    %v311 = vperm.slane %v309, 0
    %v312 = vperm.slane %v309, 1
    %v315 = vadd.f32 %v301, %v311
    %v316 = vadd.f32 %v302, %v312
    %v317 = vadd.f32 %v303, %v311
    %v318 = vadd.f32 %v304, %v312
    %v319 = vadd.f32 %v305, %v311
    %v320 = vadd.f32 %v306, %v312
    %v321 = vadd.f32 %v307, %v311
    %v322 = vadd.f32 %v308, %v312
    %v323 = vmax.f32 %v315, 0.0
    %v324 = vmax.f32 %v316, 0.0
    %v325 = vmax.f32 %v317, 0.0
    %v326 = vmax.f32 %v318, 0.0
    %v327 = vmax.f32 %v319, 0.0
    %v328 = vmax.f32 %v320, 0.0
    %v329 = vmax.f32 %v321, 0.0
    %v330 = vmax.f32 %v322, 0.0
    %v331 = vld [vmem:[%s3] sm:$0x3]
    %v333 = vperm.slane %v331, 0
    %v334 = vperm.slane %v331, 1
    %v337 = vmul.f32 %v323, %v333
    %v338 = vmul.f32 %v324, %v334
    %v339 = vmul.f32 %v325, %v333
    %v340 = vmul.f32 %v326, %v334
    %v341 = vmul.f32 %v327, %v333
    %v342 = vmul.f32 %v328, %v334
    %v343 = vmul.f32 %v329, %v333
    %v344 = vmul.f32 %v330, %v334
    %v345 = vld [vmem:[%s4] sm:$0x3]
    %v347 = vperm.slane %v345, 0
    %v348 = vperm.slane %v345, 1
    %v351 = vadd.f32 %v337, %v347
    %v352 = vadd.f32 %v338, %v348
    %v353 = vadd.f32 %v339, %v347
    %v354 = vadd.f32 %v340, %v348
    %v355 = vadd.f32 %v341, %v347
    %v356 = vadd.f32 %v342, %v348
    %v357 = vadd.f32 %v343, %v347
    %v358 = vadd.f32 %v344, %v348
    %359 = vst [vmem:[#allocation2] sm:$0xff] %v351
    %vm360 = vcmask 785408
    %361 = vst.msk [vmem:[#allocation2 + $0x8] sm:$0xff] %vm360, %v352
    %362 = vst [vmem:[#allocation2 + $0x10] sm:$0xff] %v353
    %363 = vst.msk [vmem:[#allocation2 + $0x18] sm:$0xff] %vm360, %v354
    %364 = vst [vmem:[#allocation2 + $0x20] sm:$0xff] %v355
    %365 = vst.msk [vmem:[#allocation2 + $0x28] sm:$0xff] %vm360, %v356
    %366 = vst [vmem:[#allocation2 + $0x30] sm:$0xf] %v357
    %vm367 = vcmask 781312
    %368 = vst.msk [vmem:[#allocation2 + $0x38] sm:$0xf] %vm367, %v358
    %v369 = vld [vmem:[#allocation2] sm:$0xff]
    %v370 = vld [vmem:[#allocation2 + $0x8] sm:$0xff]
    %v371 = vld [vmem:[#allocation2 + $0x10] sm:$0xff]
    %v372 = vld [vmem:[#allocation2 + $0x18] sm:$0xff]
    %v373 = vld [vmem:[#allocation2 + $0x20] sm:$0xff]
    %v374 = vld [vmem:[#allocation2 + $0x28] sm:$0xff]
    %v375 = vld [vmem:[%s5] sm:$0xff]
    %v376 = vld [vmem:[%s5 + $0x8] sm:$0xff]
    %v377 = vld [vmem:[%s5 + $0x10] sm:$0xff]
    %v378 = vld [vmem:[%s5 + $0x18] sm:$0xff]
    %v379 = vld [vmem:[%s5 + $0x20] sm:$0xff]
    %v380 = vld [vmem:[%s5 + $0x28] sm:$0xff]
    %v381 = vld [vmem:[%s5 + $0x30] sm:$0xff]
    %v382 = vld [vmem:[%s5 + $0x38] sm:$0xff]
    %v383 = vld [vmem:[%s5 + $0x40] sm:$0xff]
    %v384 = vld [vmem:[%s5 + $0x48] sm:$0xff]
    %v385 = vld [vmem:[%s5 + $0x50] sm:$0xff]
    %v386 = vld [vmem:[%s5 + $0x58] sm:$0xff]
    %v387 = vld [vmem:[%s5 + $0x60] sm:$0xff]
    %v388 = vld [vmem:[%s5 + $0x68] sm:$0xff]
    %v389 = vld [vmem:[%s5 + $0x70] sm:$0xff]
    %v390 = vld [vmem:[%s5 + $0x78] sm:$0xff]
    %v391 = vld [vmem:[%s5 + $0x80] sm:$0xff]
    %v392 = vld [vmem:[%s5 + $0x88] sm:$0xff]
    %v393 = vld [vmem:[%s5 + $0x90] sm:$0xff]
    %v394 = vld [vmem:[%s5 + $0x98] sm:$0xff]
    %v395 = vld [vmem:[%s5 + $0xa0] sm:$0xff]
    %v396 = vld [vmem:[%s5 + $0xa8] sm:$0xff]
    %v397 = vld [vmem:[%s5 + $0xb0] sm:$0xff]
    %v398 = vld [vmem:[%s5 + $0xb8] sm:$0xff]
    %v399 = vld [vmem:[%s5 + $0xc0] sm:$0xff]
    %v400 = vld [vmem:[%s5 + $0xc8] sm:$0xff]
    %v401 = vld [vmem:[%s5 + $0xd0] sm:$0xff]
    %v402 = vld [vmem:[%s5 + $0xd8] sm:$0xff]
    %v403 = vld [vmem:[%s5 + $0xe0] sm:$0xff]
    %v404 = vld [vmem:[%s5 + $0xe8] sm:$0xff]
    %v405 = vld [vmem:[%s5 + $0xf0] sm:$0xff]
    %v406 = vld [vmem:[%s5 + $0xf8] sm:$0xff]
    %v407 = vld [vmem:[%s5 + $0x100] sm:$0xff]
    %v408 = vld [vmem:[%s5 + $0x108] sm:$0xff]
    %v409 = vld [vmem:[%s5 + $0x110] sm:$0xff]
    %v410 = vld [vmem:[%s5 + $0x118] sm:$0xff]
    %v411 = vld [vmem:[%s5 + $0x120] sm:$0xff]
    %v412 = vld [vmem:[%s5 + $0x128] sm:$0xff]
    %v413 = vld [vmem:[%s5 + $0x130] sm:$0xff]
    %v414 = vld [vmem:[%s5 + $0x138] sm:$0xff]
    %v415 = vld [vmem:[%s5 + $0x140] sm:$0xff]
    %v416 = vld [vmem:[%s5 + $0x148] sm:$0xff]
    %v417 = vld [vmem:[%s5 + $0x150] sm:$0xff]
    %v418 = vld [vmem:[%s5 + $0x158] sm:$0xff]
    %v419 = vld [vmem:[%s5 + $0x160] sm:$0xff]
    %v420 = vld [vmem:[%s5 + $0x168] sm:$0xff]
    %v421 = vld [vmem:[%s5 + $0x170] sm:$0xff]
    %v422 = vld [vmem:[%s5 + $0x178] sm:$0xff]
    %v423 = vld [vmem:[%s5 + $0x180] sm:$0xff]
    %v424 = vld [vmem:[%s5 + $0x188] sm:$0xff]
    %v425 = vld [vmem:[%s5 + $0x190] sm:$0xff]
    %v426 = vld [vmem:[%s5 + $0x198] sm:$0xff]
    %v427 = vld [vmem:[%s5 + $0x1a0] sm:$0xff]
    %v428 = vld [vmem:[%s5 + $0x1a8] sm:$0xff]
    %v429 = vld [vmem:[%s5 + $0x1b0] sm:$0xff]
    %v430 = vld [vmem:[%s5 + $0x1b8] sm:$0xff]
    %v431 = vld [vmem:[%s5 + $0x1c0] sm:$0xff]
    %v432 = vld [vmem:[%s5 + $0x1c8] sm:$0xff]
    %v433 = vld [vmem:[%s5 + $0x1d0] sm:$0xff]
    %v434 = vld [vmem:[%s5 + $0x1d8] sm:$0xff]
    %v435 = vld [vmem:[%s5 + $0x1e0] sm:$0xff]
    %v436 = vld [vmem:[%s5 + $0x1e8] sm:$0xff]
    %v437 = vld [vmem:[%s5 + $0x1f0] sm:$0xff]
    %v438 = vld [vmem:[%s5 + $0x1f8] sm:$0xff]
    %v439 = vld [vmem:[%s5 + $0x200] sm:$0xff]
    %v440 = vld [vmem:[%s5 + $0x208] sm:$0xff]
    %v441 = vld [vmem:[%s5 + $0x210] sm:$0xff]
    %v442 = vld [vmem:[%s5 + $0x218] sm:$0xff]
    %v443 = vld [vmem:[%s5 + $0x220] sm:$0xff]
    %v444 = vld [vmem:[%s5 + $0x228] sm:$0xff]
    %v445 = vld [vmem:[%s5 + $0x230] sm:$0xff]
    %v446 = vld [vmem:[%s5 + $0x238] sm:$0xff]
    %v447 = vld [vmem:[%s5 + $0x240] sm:$0xff]
    %v448 = vld [vmem:[%s5 + $0x248] sm:$0xff]
    %v449 = vld [vmem:[%s5 + $0x250] sm:$0xff]
    %v450 = vld [vmem:[%s5 + $0x258] sm:$0xff]
    %v451 = vld [vmem:[%s5 + $0x260] sm:$0xff]
    %v452 = vld [vmem:[%s5 + $0x268] sm:$0xff]
    %v453 = vld [vmem:[%s5 + $0x270] sm:$0xff]
    %v454 = vld [vmem:[%s5 + $0x278] sm:$0xff]
    %v455 = vld [vmem:[%s5 + $0x280] sm:$0xff]
    %v456 = vld [vmem:[%s5 + $0x288] sm:$0xff]
    %v457 = vld [vmem:[%s5 + $0x290] sm:$0xff]
    %v458 = vld [vmem:[%s5 + $0x298] sm:$0xff]
    %v459 = vld [vmem:[#allocation2] sm:$0xfc]
    %v460 = vld [vmem:[#allocation2 + $0x8] sm:$0xfc]
    %v461 = vld [vmem:[#allocation2 + $0x30] sm:$0x3]
    %v462 = vld [vmem:[#allocation2 + $0x38] sm:$0x3]
    %s463 = scalar_lea.vmem %s5, 672
    %v464 = vld [vmem:[%s463] sm:$0xff]
    %v465 = vld [vmem:[%s463 + $0x8] sm:$0xff]
    %v466 = vld [vmem:[%s463 + $0x10] sm:$0xff]
    %v467 = vld [vmem:[%s463 + $0x18] sm:$0xff]
    %v468 = vld [vmem:[%s463 + $0x20] sm:$0xff]
    %v469 = vld [vmem:[%s463 + $0x28] sm:$0xff]
    %v470 = vld [vmem:[%s463 + $0x30] sm:$0xff]
    %v471 = vld [vmem:[%s463 + $0x38] sm:$0xff]
    %v472 = vld [vmem:[%s463 + $0x40] sm:$0xff]
    %v473 = vld [vmem:[%s463 + $0x48] sm:$0xff]
    %v474 = vld [vmem:[%s463 + $0x50] sm:$0xff]
    %v475 = vld [vmem:[%s463 + $0x58] sm:$0xff]
    %v476 = vld [vmem:[%s463 + $0x60] sm:$0xff]
    %v477 = vld [vmem:[%s463 + $0x68] sm:$0xff]
    %v478 = vld [vmem:[%s463 + $0x70] sm:$0xff]
    %v479 = vld [vmem:[%s463 + $0x78] sm:$0xff]
    %v480 = vld [vmem:[%s463 + $0x80] sm:$0xff]
    %v481 = vld [vmem:[%s463 + $0x88] sm:$0xff]
    %v482 = vld [vmem:[%s463 + $0x90] sm:$0xff]
    %v483 = vld [vmem:[%s463 + $0x98] sm:$0xff]
    %v484 = vld [vmem:[%s463 + $0xa0] sm:$0xff]
    %v485 = vld [vmem:[%s463 + $0xa8] sm:$0xff]
    %v486 = vld [vmem:[%s463 + $0xb0] sm:$0xff]
    %v487 = vld [vmem:[%s463 + $0xb8] sm:$0xff]
    %v488 = vld [vmem:[%s463 + $0xc0] sm:$0xff]
    %v489 = vld [vmem:[%s463 + $0xc8] sm:$0xff]
    %v490 = vld [vmem:[%s463 + $0xd0] sm:$0xff]
    %v491 = vld [vmem:[%s463 + $0xd8] sm:$0xff]
    %v492 = vld [vmem:[%s463 + $0xe0] sm:$0xff]
    %v493 = vld [vmem:[%s463 + $0xe8] sm:$0xff]
    %v494 = vld [vmem:[%s463 + $0xf0] sm:$0xff]
    %v495 = vld [vmem:[%s463 + $0xf8] sm:$0xff]
    %v496 = vld [vmem:[%s463 + $0x100] sm:$0xff]
    %v497 = vld [vmem:[%s463 + $0x108] sm:$0xff]
    %v498 = vld [vmem:[%s463 + $0x110] sm:$0xff]
    %v499 = vld [vmem:[%s463 + $0x118] sm:$0xff]
    %v500 = vld [vmem:[%s463 + $0x120] sm:$0xff]
    %v501 = vld [vmem:[%s463 + $0x128] sm:$0xff]
    %v502 = vld [vmem:[%s463 + $0x130] sm:$0xff]
    %v503 = vld [vmem:[%s463 + $0x138] sm:$0xff]
    %v504 = vld [vmem:[%s463 + $0x140] sm:$0xff]
    %v505 = vld [vmem:[%s463 + $0x148] sm:$0xff]
    %v506 = vld [vmem:[%s463 + $0x150] sm:$0xff]
    %v507 = vld [vmem:[%s463 + $0x158] sm:$0xff]
    %v508 = vld [vmem:[%s463 + $0x160] sm:$0xff]
    %v509 = vld [vmem:[%s463 + $0x168] sm:$0xff]
    %v510 = vld [vmem:[%s463 + $0x170] sm:$0xff]
    %v511 = vld [vmem:[%s463 + $0x178] sm:$0xff]
    %v512 = vld [vmem:[%s463 + $0x180] sm:$0xff]
    %v513 = vld [vmem:[%s463 + $0x188] sm:$0xff]
    %v514 = vld [vmem:[%s463 + $0x190] sm:$0xff]
    %v515 = vld [vmem:[%s463 + $0x198] sm:$0xff]
    %v516 = vld [vmem:[%s463 + $0x1a0] sm:$0xff]
    %v517 = vld [vmem:[%s463 + $0x1a8] sm:$0xff]
    %v518 = vld [vmem:[%s463 + $0x1b0] sm:$0xff]
    %v519 = vld [vmem:[%s463 + $0x1b8] sm:$0xff]
    %v520 = vld [vmem:[%s463 + $0x1c0] sm:$0xff]
    %v521 = vld [vmem:[%s463 + $0x1c8] sm:$0xff]
    %v522 = vld [vmem:[%s463 + $0x1d0] sm:$0xff]
    %v523 = vld [vmem:[%s463 + $0x1d8] sm:$0xff]
    %v524 = vld [vmem:[%s463 + $0x1e0] sm:$0xff]
    %v525 = vld [vmem:[%s463 + $0x1e8] sm:$0xff]
    %v526 = vld [vmem:[%s463 + $0x1f0] sm:$0xff]
    %v527 = vld [vmem:[%s463 + $0x1f8] sm:$0xff]
    %v528 = vld [vmem:[%s463 + $0x200] sm:$0xff]
    %v529 = vld [vmem:[%s463 + $0x208] sm:$0xff]
    %v530 = vld [vmem:[%s463 + $0x210] sm:$0xff]
    %v531 = vld [vmem:[%s463 + $0x218] sm:$0xff]
    %v532 = vld [vmem:[%s463 + $0x220] sm:$0xff]
    %v533 = vld [vmem:[%s463 + $0x228] sm:$0xff]
    %v534 = vld [vmem:[%s463 + $0x230] sm:$0xff]
    %v535 = vld [vmem:[%s463 + $0x238] sm:$0xff]
    %v536 = vld [vmem:[%s463 + $0x240] sm:$0xff]
    %v537 = vld [vmem:[%s463 + $0x248] sm:$0xff]
    %v538 = vld [vmem:[%s463 + $0x250] sm:$0xff]
    %v539 = vld [vmem:[%s463 + $0x258] sm:$0xff]
    %v540 = vld [vmem:[%s463 + $0x260] sm:$0xff]
    %v541 = vld [vmem:[%s463 + $0x268] sm:$0xff]
    %v542 = vld [vmem:[%s463 + $0x270] sm:$0xff]
    %v543 = vld [vmem:[%s463 + $0x278] sm:$0xff]
    %v544 = vld [vmem:[%s463 + $0x280] sm:$0xff]
    %v545 = vld [vmem:[%s463 + $0x288] sm:$0xff]
    %v546 = vld [vmem:[%s463 + $0x290] sm:$0xff]
    %v547 = vld [vmem:[%s463 + $0x298] sm:$0xff]
    %vm556 = vcmask 1045504
    %v557 = vrot.slane %v459, 2
    %v558 = vrot.slane %v371, 2
    %v559 = vsel %vm556, %v557, %v558
    %v560 = vrot.slane %v460, 2
    %v561 = vrot.slane %v372, 2
    %v562 = vsel %vm556, %v560, %v561
    %v563 = vrot.slane %v373, 2
    %v564 = vsel %vm556, %v558, %v563
    %v565 = vrot.slane %v374, 2
    %v566 = vsel %vm556, %v561, %v565
    %v567 = vrot.slane %v461, 2
    %v568 = vsel %vm556, %v563, %v567
    %v569 = vrot.slane %v462, 2
    %v570 = vsel %vm556, %v565, %v569
    %v574 = vsel %vm360, %v562, 0
    %v576 = vsel %vm360, %v566, 0
    %v578 = vsel %vm360, %v570, 0
    %580 = vmatpush.msra.mxu0 %v509
    %581 = vmatpush.msra.mxu0 %v506
    %582 = vmatpush.msra.mxu0 %v503
    %583 = vmatpush.msra.mxu0 %v500
    %584 = vmatpush.msra.mxu0 %v497
    %585 = vmatpush.msra.mxu0 %v494
    %586 = vmatpush.msra.mxu0 %v491
    %587 = vmatpush.msra.mxu0 %v488
    %588 = vmatpush.msra.mxu0 %v485
    %589 = vmatpush.msra.mxu0 %v482
    %590 = vmatpush.msra.mxu0 %v479
    %591 = vmatpush.msra.mxu0 %v476
    %592 = vmatpush.msra.mxu0 %v473
    %593 = vmatpush.msra.mxu0 %v470
    %594 = vmatpush.msra.mxu0 %v467
    %595 = vmatpush.msra.mxu0 %v464
    %596 = vmatmul.f32.gmra.mxu0 %v559
    %v597 = vpop.f32.mrf.mxu0
    %v598 = vadd.f32 0.0, %v597
    %599 = vmatmul.f32.gmra.mxu0 %v564
    %v600 = vpop.f32.mrf.mxu0
    %v601 = vadd.f32 0.0, %v600
    %602 = vmatmul.f32.gmra.mxu0 %v568
    %v603 = vpop.f32.mrf.mxu0
    %v604 = vadd.f32 0.0, %v603
    %605 = vdwg.mxu0
    %606 = vmatpush.msra.mxu0 0.0
    %607 = vmatpush.msra.mxu0 0.0
    %608 = vmatpush.msra.mxu0 0.0
    %609 = vmatpush.msra.mxu0 0.0
    %610 = vmatpush.msra.mxu0 %v545
    %611 = vmatpush.msra.mxu0 %v542
    %612 = vmatpush.msra.mxu0 %v539
    %613 = vmatpush.msra.mxu0 %v536
    %614 = vmatpush.msra.mxu0 %v533
    %615 = vmatpush.msra.mxu0 %v530
    %616 = vmatpush.msra.mxu0 %v527
    %617 = vmatpush.msra.mxu0 %v524
    %618 = vmatpush.msra.mxu0 %v521
    %619 = vmatpush.msra.mxu0 %v518
    %620 = vmatpush.msra.mxu0 %v515
    %621 = vmatpush.msra.mxu0 %v512
    %622 = vmatmul.f32.gmra.mxu0 %v574
    %v623 = vpop.f32.mrf.mxu0
    %v624 = vadd.f32 %v598, %v623
    %625 = vmatmul.f32.gmra.mxu0 %v576
    %v626 = vpop.f32.mrf.mxu0
    %v627 = vadd.f32 %v601, %v626
    %628 = vmatmul.f32.gmra.mxu0 %v578
    %v629 = vpop.f32.mrf.mxu0
    %v630 = vadd.f32 %v604, %v629
    %631 = vdwg.mxu0
    %632 = vmatpush.msra.mxu0 %v510
    %633 = vmatpush.msra.mxu0 %v507
    %634 = vmatpush.msra.mxu0 %v504
    %635 = vmatpush.msra.mxu0 %v501
    %636 = vmatpush.msra.mxu0 %v498
    %637 = vmatpush.msra.mxu0 %v495
    %638 = vmatpush.msra.mxu0 %v492
    %639 = vmatpush.msra.mxu0 %v489
    %640 = vmatpush.msra.mxu0 %v486
    %641 = vmatpush.msra.mxu0 %v483
    %642 = vmatpush.msra.mxu0 %v480
    %643 = vmatpush.msra.mxu0 %v477
    %644 = vmatpush.msra.mxu0 %v474
    %645 = vmatpush.msra.mxu0 %v471
    %646 = vmatpush.msra.mxu0 %v468
    %647 = vmatpush.msra.mxu0 %v465
    %648 = vmatmul.f32.gmra.mxu0 %v559
    %v649 = vpop.f32.mrf.mxu0
    %v650 = vadd.f32 0.0, %v649
    %651 = vmatmul.f32.gmra.mxu0 %v564
    %v652 = vpop.f32.mrf.mxu0
    %v653 = vadd.f32 0.0, %v652
    %654 = vmatmul.f32.gmra.mxu0 %v568
    %v655 = vpop.f32.mrf.mxu0
    %v656 = vadd.f32 0.0, %v655
    %657 = vdwg.mxu0
    %658 = vmatpush.msra.mxu0 0.0
    %659 = vmatpush.msra.mxu0 0.0
    %660 = vmatpush.msra.mxu0 0.0
    %661 = vmatpush.msra.mxu0 0.0
    %662 = vmatpush.msra.mxu0 %v546
    %663 = vmatpush.msra.mxu0 %v543
    %664 = vmatpush.msra.mxu0 %v540
    %665 = vmatpush.msra.mxu0 %v537
    %666 = vmatpush.msra.mxu0 %v534
    %667 = vmatpush.msra.mxu0 %v531
    %668 = vmatpush.msra.mxu0 %v528
    %669 = vmatpush.msra.mxu0 %v525
    %670 = vmatpush.msra.mxu0 %v522
    %671 = vmatpush.msra.mxu0 %v519
    %672 = vmatpush.msra.mxu0 %v516
    %673 = vmatpush.msra.mxu0 %v513
    %674 = vmatmul.f32.gmra.mxu0 %v574
    %v675 = vpop.f32.mrf.mxu0
    %v676 = vadd.f32 %v650, %v675
    %677 = vmatmul.f32.gmra.mxu0 %v576
    %v678 = vpop.f32.mrf.mxu0
    %v679 = vadd.f32 %v653, %v678
    %680 = vmatmul.f32.gmra.mxu0 %v578
    %v681 = vpop.f32.mrf.mxu0
    %v682 = vadd.f32 %v656, %v681
    %683 = vdwg.mxu0
    %684 = vmatpush.msra.mxu0 %v511
    %685 = vmatpush.msra.mxu0 %v508
    %686 = vmatpush.msra.mxu0 %v505
    %687 = vmatpush.msra.mxu0 %v502
    %688 = vmatpush.msra.mxu0 %v499
    %689 = vmatpush.msra.mxu0 %v496
    %690 = vmatpush.msra.mxu0 %v493
    %691 = vmatpush.msra.mxu0 %v490
    %692 = vmatpush.msra.mxu0 %v487
    %693 = vmatpush.msra.mxu0 %v484
    %694 = vmatpush.msra.mxu0 %v481
    %695 = vmatpush.msra.mxu0 %v478
    %696 = vmatpush.msra.mxu0 %v475
    %697 = vmatpush.msra.mxu0 %v472
    %698 = vmatpush.msra.mxu0 %v469
    %699 = vmatpush.msra.mxu0 %v466
    %700 = vmatmul.f32.gmra.mxu0 %v559
    %v701 = vpop.f32.mrf.mxu0
    %v702 = vadd.f32 0.0, %v701
    %703 = vmatmul.f32.gmra.mxu0 %v564
    %v704 = vpop.f32.mrf.mxu0
    %v705 = vadd.f32 0.0, %v704
    %706 = vmatmul.f32.gmra.mxu0 %v568
    %v707 = vpop.f32.mrf.mxu0
    %v708 = vadd.f32 0.0, %v707
    %709 = vdwg.mxu0
    %710 = vmatpush.msra.mxu0 0.0
    %711 = vmatpush.msra.mxu0 0.0
    %712 = vmatpush.msra.mxu0 0.0
    %713 = vmatpush.msra.mxu0 0.0
    %714 = vmatpush.msra.mxu0 %v547
    %715 = vmatpush.msra.mxu0 %v544
    %716 = vmatpush.msra.mxu0 %v541
    %717 = vmatpush.msra.mxu0 %v538
    %718 = vmatpush.msra.mxu0 %v535
    %719 = vmatpush.msra.mxu0 %v532
    %720 = vmatpush.msra.mxu0 %v529
    %721 = vmatpush.msra.mxu0 %v526
    %722 = vmatpush.msra.mxu0 %v523
    %723 = vmatpush.msra.mxu0 %v520
    %724 = vmatpush.msra.mxu0 %v517
    %725 = vmatpush.msra.mxu0 %v514
    %726 = vmatmul.f32.gmra.mxu0 %v574
    %v727 = vpop.f32.mrf.mxu0
    %v728 = vadd.f32 %v702, %v727
    %729 = vmatmul.f32.gmra.mxu0 %v576
    %v730 = vpop.f32.mrf.mxu0
    %v731 = vadd.f32 %v705, %v730
    %732 = vmatmul.f32.gmra.mxu0 %v578
    %v733 = vpop.f32.mrf.mxu0
    %v734 = vadd.f32 %v708, %v733
    %735 = vdwg.mxu0
    %v737 = vsel %vm360, %v370, 0
    %v739 = vsel %vm360, %v372, 0
    %v741 = vsel %vm360, %v374, 0
    %743 = vmatpush.msra.mxu0 %v420
    %744 = vmatpush.msra.mxu0 %v417
    %745 = vmatpush.msra.mxu0 %v414
    %746 = vmatpush.msra.mxu0 %v411
    %747 = vmatpush.msra.mxu0 %v408
    %748 = vmatpush.msra.mxu0 %v405
    %749 = vmatpush.msra.mxu0 %v402
    %750 = vmatpush.msra.mxu0 %v399
    %751 = vmatpush.msra.mxu0 %v396
    %752 = vmatpush.msra.mxu0 %v393
    %753 = vmatpush.msra.mxu0 %v390
    %754 = vmatpush.msra.mxu0 %v387
    %755 = vmatpush.msra.mxu0 %v384
    %756 = vmatpush.msra.mxu0 %v381
    %757 = vmatpush.msra.mxu0 %v378
    %758 = vmatpush.msra.mxu0 %v375
    %759 = vmatmul.f32.gmra.mxu0 %v369
    %v760 = vpop.f32.mrf.mxu0
    %v761 = vadd.f32 %v624, %v760
    %762 = vmatmul.f32.gmra.mxu0 %v371
    %v763 = vpop.f32.mrf.mxu0
    %v764 = vadd.f32 %v627, %v763
    %765 = vmatmul.f32.gmra.mxu0 %v373
    %v766 = vpop.f32.mrf.mxu0
    %v767 = vadd.f32 %v630, %v766
    %768 = vdwg.mxu0
    %769 = vmatpush.msra.mxu0 0.0
    %770 = vmatpush.msra.mxu0 0.0
    %771 = vmatpush.msra.mxu0 0.0
    %772 = vmatpush.msra.mxu0 0.0
    %773 = vmatpush.msra.mxu0 %v456
    %774 = vmatpush.msra.mxu0 %v453
    %775 = vmatpush.msra.mxu0 %v450
    %776 = vmatpush.msra.mxu0 %v447
    %777 = vmatpush.msra.mxu0 %v444
    %778 = vmatpush.msra.mxu0 %v441
    %779 = vmatpush.msra.mxu0 %v438
    %780 = vmatpush.msra.mxu0 %v435
    %781 = vmatpush.msra.mxu0 %v432
    %782 = vmatpush.msra.mxu0 %v429
    %783 = vmatpush.msra.mxu0 %v426
    %784 = vmatpush.msra.mxu0 %v423
    %785 = vmatmul.f32.gmra.mxu0 %v737
    %v786 = vpop.f32.mrf.mxu0
    %v787 = vadd.f32 %v761, %v786
    %788 = vmatmul.f32.gmra.mxu0 %v739
    %v789 = vpop.f32.mrf.mxu0
    %v790 = vadd.f32 %v764, %v789
    %791 = vmatmul.f32.gmra.mxu0 %v741
    %v792 = vpop.f32.mrf.mxu0
    %v793 = vadd.f32 %v767, %v792
    %794 = vdwg.mxu0
    %795 = vmatpush.msra.mxu0 %v421
    %796 = vmatpush.msra.mxu0 %v418
    %797 = vmatpush.msra.mxu0 %v415
    %798 = vmatpush.msra.mxu0 %v412
    %799 = vmatpush.msra.mxu0 %v409
    %800 = vmatpush.msra.mxu0 %v406
    %801 = vmatpush.msra.mxu0 %v403
    %802 = vmatpush.msra.mxu0 %v400
    %803 = vmatpush.msra.mxu0 %v397
    %804 = vmatpush.msra.mxu0 %v394
    %805 = vmatpush.msra.mxu0 %v391
    %806 = vmatpush.msra.mxu0 %v388
    %807 = vmatpush.msra.mxu0 %v385
    %808 = vmatpush.msra.mxu0 %v382
    %809 = vmatpush.msra.mxu0 %v379
    %810 = vmatpush.msra.mxu0 %v376
    %811 = vmatmul.f32.gmra.mxu0 %v369
    %v812 = vpop.f32.mrf.mxu0
    %v813 = vadd.f32 %v676, %v812
    %814 = vmatmul.f32.gmra.mxu0 %v371
    %v815 = vpop.f32.mrf.mxu0
    %v816 = vadd.f32 %v679, %v815
    %817 = vmatmul.f32.gmra.mxu0 %v373
    %v818 = vpop.f32.mrf.mxu0
    %v819 = vadd.f32 %v682, %v818
    %820 = vdwg.mxu0
    %821 = vmatpush.msra.mxu0 0.0
    %822 = vmatpush.msra.mxu0 0.0
    %823 = vmatpush.msra.mxu0 0.0
    %824 = vmatpush.msra.mxu0 0.0
    %825 = vmatpush.msra.mxu0 %v457
    %826 = vmatpush.msra.mxu0 %v454
    %827 = vmatpush.msra.mxu0 %v451
    %828 = vmatpush.msra.mxu0 %v448
    %829 = vmatpush.msra.mxu0 %v445
    %830 = vmatpush.msra.mxu0 %v442
    %831 = vmatpush.msra.mxu0 %v439
    %832 = vmatpush.msra.mxu0 %v436
    %833 = vmatpush.msra.mxu0 %v433
    %834 = vmatpush.msra.mxu0 %v430
    %835 = vmatpush.msra.mxu0 %v427
    %836 = vmatpush.msra.mxu0 %v424
    %837 = vmatmul.f32.gmra.mxu0 %v737
    %v838 = vpop.f32.mrf.mxu0
    %v839 = vadd.f32 %v813, %v838
    %840 = vmatmul.f32.gmra.mxu0 %v739
    %v841 = vpop.f32.mrf.mxu0
    %v842 = vadd.f32 %v816, %v841
    %843 = vmatmul.f32.gmra.mxu0 %v741
    %v844 = vpop.f32.mrf.mxu0
    %v845 = vadd.f32 %v819, %v844
    %846 = vdwg.mxu0
    %847 = vmatpush.msra.mxu0 %v422
    %848 = vmatpush.msra.mxu0 %v419
    %849 = vmatpush.msra.mxu0 %v416
    %850 = vmatpush.msra.mxu0 %v413
    %851 = vmatpush.msra.mxu0 %v410
    %852 = vmatpush.msra.mxu0 %v407
    %853 = vmatpush.msra.mxu0 %v404
    %854 = vmatpush.msra.mxu0 %v401
    %855 = vmatpush.msra.mxu0 %v398
    %856 = vmatpush.msra.mxu0 %v395
    %857 = vmatpush.msra.mxu0 %v392
    %858 = vmatpush.msra.mxu0 %v389
    %859 = vmatpush.msra.mxu0 %v386
    %860 = vmatpush.msra.mxu0 %v383
    %861 = vmatpush.msra.mxu0 %v380
    %862 = vmatpush.msra.mxu0 %v377
    %863 = vmatmul.f32.gmra.mxu0 %v369
    %v864 = vpop.f32.mrf.mxu0
    %v865 = vadd.f32 %v728, %v864
    %866 = vmatmul.f32.gmra.mxu0 %v371
    %v867 = vpop.f32.mrf.mxu0
    %v868 = vadd.f32 %v731, %v867
    %869 = vmatmul.f32.gmra.mxu0 %v373
    %v870 = vpop.f32.mrf.mxu0
    %v871 = vadd.f32 %v734, %v870
    %872 = vdwg.mxu0
    %873 = vmatpush.msra.mxu0 0.0
    %874 = vmatpush.msra.mxu0 0.0
    %875 = vmatpush.msra.mxu0 0.0
    %876 = vmatpush.msra.mxu0 0.0
    %877 = vmatpush.msra.mxu0 %v458
    %878 = vmatpush.msra.mxu0 %v455
    %879 = vmatpush.msra.mxu0 %v452
    %880 = vmatpush.msra.mxu0 %v449
    %881 = vmatpush.msra.mxu0 %v446
    %882 = vmatpush.msra.mxu0 %v443
    %883 = vmatpush.msra.mxu0 %v440
    %884 = vmatpush.msra.mxu0 %v437
    %885 = vmatpush.msra.mxu0 %v434
    %886 = vmatpush.msra.mxu0 %v431
    %887 = vmatpush.msra.mxu0 %v428
    %888 = vmatpush.msra.mxu0 %v425
    %889 = vmatmul.f32.gmra.mxu0 %v737
    %v890 = vpop.f32.mrf.mxu0
    %v891 = vadd.f32 %v865, %v890
    %892 = vmatmul.f32.gmra.mxu0 %v739
    %v893 = vpop.f32.mrf.mxu0
    %v894 = vadd.f32 %v868, %v893
    %895 = vmatmul.f32.gmra.mxu0 %v741
    %v896 = vpop.f32.mrf.mxu0
    %v897 = vadd.f32 %v871, %v896
    %898 = vdwg.mxu0
    %v899 = vld [vmem:[#allocation2] sm:$0xf0]
    %v900 = vld [vmem:[#allocation2 + $0x8] sm:$0xf0]
    %v901 = vld [vmem:[#allocation2 + $0x30] sm:$0xf]
    %v902 = vld [vmem:[#allocation2 + $0x38] sm:$0xf]
    %s903 = scalar_lea.vmem %s5, 1344
    %v904 = vld [vmem:[%s903] sm:$0xff]
    %v905 = vld [vmem:[%s903 + $0x8] sm:$0xff]
    %v906 = vld [vmem:[%s903 + $0x10] sm:$0xff]
    %v907 = vld [vmem:[%s903 + $0x18] sm:$0xff]
    %v908 = vld [vmem:[%s903 + $0x20] sm:$0xff]
    %v909 = vld [vmem:[%s903 + $0x28] sm:$0xff]
    %v910 = vld [vmem:[%s903 + $0x30] sm:$0xff]
    %v911 = vld [vmem:[%s903 + $0x38] sm:$0xff]
    %v912 = vld [vmem:[%s903 + $0x40] sm:$0xff]
    %v913 = vld [vmem:[%s903 + $0x48] sm:$0xff]
    %v914 = vld [vmem:[%s903 + $0x50] sm:$0xff]
    %v915 = vld [vmem:[%s903 + $0x58] sm:$0xff]
    %v916 = vld [vmem:[%s903 + $0x60] sm:$0xff]
    %v917 = vld [vmem:[%s903 + $0x68] sm:$0xff]
    %v918 = vld [vmem:[%s903 + $0x70] sm:$0xff]
    %v919 = vld [vmem:[%s903 + $0x78] sm:$0xff]
    %v920 = vld [vmem:[%s903 + $0x80] sm:$0xff]
    %v921 = vld [vmem:[%s903 + $0x88] sm:$0xff]
    %v922 = vld [vmem:[%s903 + $0x90] sm:$0xff]
    %v923 = vld [vmem:[%s903 + $0x98] sm:$0xff]
    %v924 = vld [vmem:[%s903 + $0xa0] sm:$0xff]
    %v925 = vld [vmem:[%s903 + $0xa8] sm:$0xff]
    %v926 = vld [vmem:[%s903 + $0xb0] sm:$0xff]
    %v927 = vld [vmem:[%s903 + $0xb8] sm:$0xff]
    %v928 = vld [vmem:[%s903 + $0xc0] sm:$0xff]
    %v929 = vld [vmem:[%s903 + $0xc8] sm:$0xff]
    %v930 = vld [vmem:[%s903 + $0xd0] sm:$0xff]
    %v931 = vld [vmem:[%s903 + $0xd8] sm:$0xff]
    %v932 = vld [vmem:[%s903 + $0xe0] sm:$0xff]
    %v933 = vld [vmem:[%s903 + $0xe8] sm:$0xff]
    %v934 = vld [vmem:[%s903 + $0xf0] sm:$0xff]
    %v935 = vld [vmem:[%s903 + $0xf8] sm:$0xff]
    %v936 = vld [vmem:[%s903 + $0x100] sm:$0xff]
    %v937 = vld [vmem:[%s903 + $0x108] sm:$0xff]
    %v938 = vld [vmem:[%s903 + $0x110] sm:$0xff]
    %v939 = vld [vmem:[%s903 + $0x118] sm:$0xff]
    %v940 = vld [vmem:[%s903 + $0x120] sm:$0xff]
    %v941 = vld [vmem:[%s903 + $0x128] sm:$0xff]
    %v942 = vld [vmem:[%s903 + $0x130] sm:$0xff]
    %v943 = vld [vmem:[%s903 + $0x138] sm:$0xff]
    %v944 = vld [vmem:[%s903 + $0x140] sm:$0xff]
    %v945 = vld [vmem:[%s903 + $0x148] sm:$0xff]
    %v946 = vld [vmem:[%s903 + $0x150] sm:$0xff]
    %v947 = vld [vmem:[%s903 + $0x158] sm:$0xff]
    %v948 = vld [vmem:[%s903 + $0x160] sm:$0xff]
    %v949 = vld [vmem:[%s903 + $0x168] sm:$0xff]
    %v950 = vld [vmem:[%s903 + $0x170] sm:$0xff]
    %v951 = vld [vmem:[%s903 + $0x178] sm:$0xff]
    %v952 = vld [vmem:[%s903 + $0x180] sm:$0xff]
    %v953 = vld [vmem:[%s903 + $0x188] sm:$0xff]
    %v954 = vld [vmem:[%s903 + $0x190] sm:$0xff]
    %v955 = vld [vmem:[%s903 + $0x198] sm:$0xff]
    %v956 = vld [vmem:[%s903 + $0x1a0] sm:$0xff]
    %v957 = vld [vmem:[%s903 + $0x1a8] sm:$0xff]
    %v958 = vld [vmem:[%s903 + $0x1b0] sm:$0xff]
    %v959 = vld [vmem:[%s903 + $0x1b8] sm:$0xff]
    %v960 = vld [vmem:[%s903 + $0x1c0] sm:$0xff]
    %v961 = vld [vmem:[%s903 + $0x1c8] sm:$0xff]
    %v962 = vld [vmem:[%s903 + $0x1d0] sm:$0xff]
    %v963 = vld [vmem:[%s903 + $0x1d8] sm:$0xff]
    %v964 = vld [vmem:[%s903 + $0x1e0] sm:$0xff]
    %v965 = vld [vmem:[%s903 + $0x1e8] sm:$0xff]
    %v966 = vld [vmem:[%s903 + $0x1f0] sm:$0xff]
    %v967 = vld [vmem:[%s903 + $0x1f8] sm:$0xff]
    %v968 = vld [vmem:[%s903 + $0x200] sm:$0xff]
    %v969 = vld [vmem:[%s903 + $0x208] sm:$0xff]
    %v970 = vld [vmem:[%s903 + $0x210] sm:$0xff]
    %v971 = vld [vmem:[%s903 + $0x218] sm:$0xff]
    %v972 = vld [vmem:[%s903 + $0x220] sm:$0xff]
    %v973 = vld [vmem:[%s903 + $0x228] sm:$0xff]
    %v974 = vld [vmem:[%s903 + $0x230] sm:$0xff]
    %v975 = vld [vmem:[%s903 + $0x238] sm:$0xff]
    %v976 = vld [vmem:[%s903 + $0x240] sm:$0xff]
    %v977 = vld [vmem:[%s903 + $0x248] sm:$0xff]
    %v978 = vld [vmem:[%s903 + $0x250] sm:$0xff]
    %v979 = vld [vmem:[%s903 + $0x258] sm:$0xff]
    %v980 = vld [vmem:[%s903 + $0x260] sm:$0xff]
    %v981 = vld [vmem:[%s903 + $0x268] sm:$0xff]
    %v982 = vld [vmem:[%s903 + $0x270] sm:$0xff]
    %v983 = vld [vmem:[%s903 + $0x278] sm:$0xff]
    %v984 = vld [vmem:[%s903 + $0x280] sm:$0xff]
    %v985 = vld [vmem:[%s903 + $0x288] sm:$0xff]
    %v986 = vld [vmem:[%s903 + $0x290] sm:$0xff]
    %v987 = vld [vmem:[%s903 + $0x298] sm:$0xff]
    %vm992 = vcmask 1043456
    %v993 = vrot.slane %v899, 4
    %v994 = vrot.slane %v371, 4
    %v995 = vsel %vm992, %v993, %v994
    %v996 = vrot.slane %v900, 4
    %v997 = vrot.slane %v372, 4
    %v998 = vsel %vm992, %v996, %v997
    %v999 = vrot.slane %v373, 4
    %v1000 = vsel %vm992, %v994, %v999
    %v1001 = vrot.slane %v374, 4
    %v1002 = vsel %vm992, %v997, %v1001
    %v1003 = vrot.slane %v901, 4
    %v1004 = vsel %vm992, %v999, %v1003
    %v1005 = vrot.slane %v902, 4
    %v1006 = vsel %vm992, %v1001, %v1005
    %v1010 = vsel %vm360, %v998, 0
    %v1012 = vsel %vm360, %v1002, 0
    %v1014 = vsel %vm360, %v1006, 0
    %1016 = vmatpush.msra.mxu0 %v949
    %1017 = vmatpush.msra.mxu0 %v946
    %1018 = vmatpush.msra.mxu0 %v943
    %1019 = vmatpush.msra.mxu0 %v940
    %1020 = vmatpush.msra.mxu0 %v937
    %1021 = vmatpush.msra.mxu0 %v934
    %1022 = vmatpush.msra.mxu0 %v931
    %1023 = vmatpush.msra.mxu0 %v928
    %1024 = vmatpush.msra.mxu0 %v925
    %1025 = vmatpush.msra.mxu0 %v922
    %1026 = vmatpush.msra.mxu0 %v919
    %1027 = vmatpush.msra.mxu0 %v916
    %1028 = vmatpush.msra.mxu0 %v913
    %1029 = vmatpush.msra.mxu0 %v910
    %1030 = vmatpush.msra.mxu0 %v907
    %1031 = vmatpush.msra.mxu0 %v904
    %1032 = vmatmul.f32.gmra.mxu0 %v995
    %v1033 = vpop.f32.mrf.mxu0
    %v1034 = vadd.f32 0.0, %v1033
    %1035 = vmatmul.f32.gmra.mxu0 %v1000
    %v1036 = vpop.f32.mrf.mxu0
    %v1037 = vadd.f32 0.0, %v1036
    %1038 = vmatmul.f32.gmra.mxu0 %v1004
    %v1039 = vpop.f32.mrf.mxu0
    %v1040 = vadd.f32 0.0, %v1039
    %1041 = vdwg.mxu0
    %1042 = vmatpush.msra.mxu0 0.0
    %1043 = vmatpush.msra.mxu0 0.0
    %1044 = vmatpush.msra.mxu0 0.0
    %1045 = vmatpush.msra.mxu0 0.0
    %1046 = vmatpush.msra.mxu0 %v985
    %1047 = vmatpush.msra.mxu0 %v982
    %1048 = vmatpush.msra.mxu0 %v979
    %1049 = vmatpush.msra.mxu0 %v976
    %1050 = vmatpush.msra.mxu0 %v973
    %1051 = vmatpush.msra.mxu0 %v970
    %1052 = vmatpush.msra.mxu0 %v967
    %1053 = vmatpush.msra.mxu0 %v964
    %1054 = vmatpush.msra.mxu0 %v961
    %1055 = vmatpush.msra.mxu0 %v958
    %1056 = vmatpush.msra.mxu0 %v955
    %1057 = vmatpush.msra.mxu0 %v952
    %1058 = vmatmul.f32.gmra.mxu0 %v1010
    %v1059 = vpop.f32.mrf.mxu0
    %v1060 = vadd.f32 %v1034, %v1059
    %1061 = vmatmul.f32.gmra.mxu0 %v1012
    %v1062 = vpop.f32.mrf.mxu0
    %v1063 = vadd.f32 %v1037, %v1062
    %1064 = vmatmul.f32.gmra.mxu0 %v1014
    %v1065 = vpop.f32.mrf.mxu0
    %v1066 = vadd.f32 %v1040, %v1065
    %1067 = vdwg.mxu0
    %1068 = vmatpush.msra.mxu0 %v950
    %1069 = vmatpush.msra.mxu0 %v947
    %1070 = vmatpush.msra.mxu0 %v944
    %1071 = vmatpush.msra.mxu0 %v941
    %1072 = vmatpush.msra.mxu0 %v938
    %1073 = vmatpush.msra.mxu0 %v935
    %1074 = vmatpush.msra.mxu0 %v932
    %1075 = vmatpush.msra.mxu0 %v929
    %1076 = vmatpush.msra.mxu0 %v926
    %1077 = vmatpush.msra.mxu0 %v923
    %1078 = vmatpush.msra.mxu0 %v920
    %1079 = vmatpush.msra.mxu0 %v917
    %1080 = vmatpush.msra.mxu0 %v914
    %1081 = vmatpush.msra.mxu0 %v911
    %1082 = vmatpush.msra.mxu0 %v908
    %1083 = vmatpush.msra.mxu0 %v905
    %1084 = vmatmul.f32.gmra.mxu0 %v995
    %v1085 = vpop.f32.mrf.mxu0
    %v1086 = vadd.f32 0.0, %v1085
    %1087 = vmatmul.f32.gmra.mxu0 %v1000
    %v1088 = vpop.f32.mrf.mxu0
    %v1089 = vadd.f32 0.0, %v1088
    %1090 = vmatmul.f32.gmra.mxu0 %v1004
    %v1091 = vpop.f32.mrf.mxu0
    %v1092 = vadd.f32 0.0, %v1091
    %1093 = vdwg.mxu0
    %1094 = vmatpush.msra.mxu0 0.0
    %1095 = vmatpush.msra.mxu0 0.0
    %1096 = vmatpush.msra.mxu0 0.0
    %1097 = vmatpush.msra.mxu0 0.0
    %1098 = vmatpush.msra.mxu0 %v986
    %1099 = vmatpush.msra.mxu0 %v983
    %1100 = vmatpush.msra.mxu0 %v980
    %1101 = vmatpush.msra.mxu0 %v977
    %1102 = vmatpush.msra.mxu0 %v974
    %1103 = vmatpush.msra.mxu0 %v971
    %1104 = vmatpush.msra.mxu0 %v968
    %1105 = vmatpush.msra.mxu0 %v965
    %1106 = vmatpush.msra.mxu0 %v962
    %1107 = vmatpush.msra.mxu0 %v959
    %1108 = vmatpush.msra.mxu0 %v956
    %1109 = vmatpush.msra.mxu0 %v953
    %1110 = vmatmul.f32.gmra.mxu0 %v1010
    %v1111 = vpop.f32.mrf.mxu0
    %v1112 = vadd.f32 %v1086, %v1111
    %1113 = vmatmul.f32.gmra.mxu0 %v1012
    %v1114 = vpop.f32.mrf.mxu0
    %v1115 = vadd.f32 %v1089, %v1114
    %1116 = vmatmul.f32.gmra.mxu0 %v1014
    %v1117 = vpop.f32.mrf.mxu0
    %v1118 = vadd.f32 %v1092, %v1117
    %1119 = vdwg.mxu0
    %1120 = vmatpush.msra.mxu0 %v951
    %1121 = vmatpush.msra.mxu0 %v948
    %1122 = vmatpush.msra.mxu0 %v945
    %1123 = vmatpush.msra.mxu0 %v942
    %1124 = vmatpush.msra.mxu0 %v939
    %1125 = vmatpush.msra.mxu0 %v936
    %1126 = vmatpush.msra.mxu0 %v933
    %1127 = vmatpush.msra.mxu0 %v930
    %1128 = vmatpush.msra.mxu0 %v927
    %1129 = vmatpush.msra.mxu0 %v924
    %1130 = vmatpush.msra.mxu0 %v921
    %1131 = vmatpush.msra.mxu0 %v918
    %1132 = vmatpush.msra.mxu0 %v915
    %1133 = vmatpush.msra.mxu0 %v912
    %1134 = vmatpush.msra.mxu0 %v909
    %1135 = vmatpush.msra.mxu0 %v906
    %1136 = vmatmul.f32.gmra.mxu0 %v995
    %v1137 = vpop.f32.mrf.mxu0
    %v1138 = vadd.f32 0.0, %v1137
    %1139 = vmatmul.f32.gmra.mxu0 %v1000
    %v1140 = vpop.f32.mrf.mxu0
    %v1141 = vadd.f32 0.0, %v1140
    %1142 = vmatmul.f32.gmra.mxu0 %v1004
    %v1143 = vpop.f32.mrf.mxu0
    %v1144 = vadd.f32 0.0, %v1143
    %1145 = vdwg.mxu0
    %1146 = vmatpush.msra.mxu0 0.0
    %1147 = vmatpush.msra.mxu0 0.0
    %1148 = vmatpush.msra.mxu0 0.0
    %1149 = vmatpush.msra.mxu0 0.0
    %1150 = vmatpush.msra.mxu0 %v987
    %1151 = vmatpush.msra.mxu0 %v984
    %1152 = vmatpush.msra.mxu0 %v981
    %1153 = vmatpush.msra.mxu0 %v978
    %1154 = vmatpush.msra.mxu0 %v975
    %1155 = vmatpush.msra.mxu0 %v972
    %1156 = vmatpush.msra.mxu0 %v969
    %1157 = vmatpush.msra.mxu0 %v966
    %1158 = vmatpush.msra.mxu0 %v963
    %1159 = vmatpush.msra.mxu0 %v960
    %1160 = vmatpush.msra.mxu0 %v957
    %1161 = vmatpush.msra.mxu0 %v954
    %1162 = vmatmul.f32.gmra.mxu0 %v1010
    %v1163 = vpop.f32.mrf.mxu0
    %v1164 = vadd.f32 %v1138, %v1163
    %1165 = vmatmul.f32.gmra.mxu0 %v1012
    %v1166 = vpop.f32.mrf.mxu0
    %v1167 = vadd.f32 %v1141, %v1166
    %1168 = vmatmul.f32.gmra.mxu0 %v1014
    %v1169 = vpop.f32.mrf.mxu0
    %v1170 = vadd.f32 %v1144, %v1169
    %1171 = vdwg.mxu0
    %v1172 = vadd.f32 %v787, %v1060
    %v1173 = vadd.f32 %v839, %v1112
    %v1174 = vadd.f32 %v891, %v1164
    %v1175 = vadd.f32 %v790, %v1063
    %v1176 = vadd.f32 %v842, %v1115
    %v1177 = vadd.f32 %v894, %v1167
    %v1178 = vadd.f32 %v793, %v1066
    %v1179 = vadd.f32 %v845, %v1118
    %v1180 = vadd.f32 %v897, %v1170
    %v1181 = vld [vmem:[%s6] sm:$0x7]
    %v1183 = vperm.slane %v1181, 0
    %v1184 = vperm.slane %v1181, 1
    %v1185 = vperm.slane %v1181, 2
    %v1189 = vadd.f32 %v1172, %v1183
    %v1190 = vadd.f32 %v1173, %v1184
    %v1191 = vadd.f32 %v1174, %v1185
    %v1192 = vadd.f32 %v1175, %v1183
    %v1193 = vadd.f32 %v1176, %v1184
    %v1194 = vadd.f32 %v1177, %v1185
    %v1195 = vadd.f32 %v1178, %v1183
    %v1196 = vadd.f32 %v1179, %v1184
    %v1197 = vadd.f32 %v1180, %v1185
    %v1198 = vmax.f32 %v1189, 0.0
    %v1199 = vmax.f32 %v1190, 0.0
    %v1200 = vmax.f32 %v1191, 0.0
    %v1201 = vmax.f32 %v1192, 0.0
    %v1202 = vmax.f32 %v1193, 0.0
    %v1203 = vmax.f32 %v1194, 0.0
    %v1204 = vmax.f32 %v1195, 0.0
    %v1205 = vmax.f32 %v1196, 0.0
    %v1206 = vmax.f32 %v1197, 0.0
    %v1207 = vld [vmem:[%s7] sm:$0x7]
    %v1209 = vperm.slane %v1207, 0
    %v1210 = vperm.slane %v1207, 1
    %v1211 = vperm.slane %v1207, 2
    %v1215 = vmul.f32 %v1198, %v1209
    %v1216 = vmul.f32 %v1199, %v1210
    %v1217 = vmul.f32 %v1200, %v1211
    %v1218 = vmul.f32 %v1201, %v1209
    %v1219 = vmul.f32 %v1202, %v1210
    %v1220 = vmul.f32 %v1203, %v1211
    %v1221 = vmul.f32 %v1204, %v1209
    %v1222 = vmul.f32 %v1205, %v1210
    %v1223 = vmul.f32 %v1206, %v1211
    %v1224 = vld [vmem:[%s8] sm:$0x7]
    %v1226 = vperm.slane %v1224, 0
    %v1227 = vperm.slane %v1224, 1
    %v1228 = vperm.slane %v1224, 2
    %v1232 = vadd.f32 %v1215, %v1226
    %v1233 = vadd.f32 %v1216, %v1227
    %v1234 = vadd.f32 %v1217, %v1228
    %v1235 = vadd.f32 %v1218, %v1226
    %v1236 = vadd.f32 %v1219, %v1227
    %v1237 = vadd.f32 %v1220, %v1228
    %v1238 = vadd.f32 %v1221, %v1226
    %v1239 = vadd.f32 %v1222, %v1227
    %v1240 = vadd.f32 %v1223, %v1228
    %1241 = vst [vmem:[#allocation3] sm:$0xff] %v1232
    %1242 = vst [vmem:[#allocation3 + $0x8] sm:$0xff] %v1233
    %vm1243 = vcmask 523264
    %1244 = vst.msk [vmem:[#allocation3 + $0x10] sm:$0xff] %vm1243, %v1234
    %1245 = vst [vmem:[#allocation3 + $0x18] sm:$0xff] %v1235
    %1246 = vst [vmem:[#allocation3 + $0x20] sm:$0xff] %v1236
    %1247 = vst.msk [vmem:[#allocation3 + $0x28] sm:$0xff] %vm1243, %v1237
    %1248 = vst [vmem:[#allocation3 + $0x30] sm:$0xff] %v1238
    %1249 = vst [vmem:[#allocation3 + $0x38] sm:$0xff] %v1239
    %1250 = vst.msk [vmem:[#allocation3 + $0x40] sm:$0xff] %vm1243, %v1240
    %v1251 = vld [vmem:[#allocation3] sm:$0x3]
    %v1252 = vld [vmem:[#allocation3 + $0x8] sm:$0x3]
    %v1253 = vld [vmem:[#allocation3 + $0x10] sm:$0x3]
    %v1254 = vld [vmem:[%s9] sm:$0xff]
    %v1255 = vld [vmem:[%s9 + $0x8] sm:$0xff]
    %v1256 = vld [vmem:[%s9 + $0x10] sm:$0xff]
    %v1257 = vld [vmem:[%s9 + $0x18] sm:$0xff]
    %v1258 = vld [vmem:[%s9 + $0x20] sm:$0xff]
    %v1259 = vld [vmem:[%s9 + $0x28] sm:$0xff]
    %v1260 = vld [vmem:[%s9 + $0x30] sm:$0xff]
    %v1261 = vld [vmem:[%s9 + $0x38] sm:$0xff]
    %v1262 = vld [vmem:[%s9 + $0x40] sm:$0xff]
    %v1263 = vld [vmem:[%s9 + $0x48] sm:$0xff]
    %v1264 = vld [vmem:[%s9 + $0x50] sm:$0xff]
    %v1265 = vld [vmem:[%s9 + $0x58] sm:$0xff]
    %v1266 = vld [vmem:[%s9 + $0x60] sm:$0xff]
    %v1267 = vld [vmem:[%s9 + $0x68] sm:$0xff]
    %v1268 = vld [vmem:[%s9 + $0x70] sm:$0xff]
    %v1269 = vld [vmem:[%s9 + $0x78] sm:$0xff]
    %v1270 = vld [vmem:[%s9 + $0x80] sm:$0xff]
    %v1271 = vld [vmem:[%s9 + $0x88] sm:$0xff]
    %v1272 = vld [vmem:[%s9 + $0x90] sm:$0xff]
    %v1273 = vld [vmem:[%s9 + $0x98] sm:$0xff]
    %v1274 = vld [vmem:[%s9 + $0xa0] sm:$0xff]
    %v1275 = vld [vmem:[%s9 + $0xa8] sm:$0xff]
    %v1276 = vld [vmem:[%s9 + $0xb0] sm:$0xff]
    %v1277 = vld [vmem:[%s9 + $0xb8] sm:$0xff]
    %v1278 = vld [vmem:[%s9 + $0xc0] sm:$0xff]
    %v1279 = vld [vmem:[%s9 + $0xc8] sm:$0xff]
    %v1280 = vld [vmem:[%s9 + $0xd0] sm:$0xff]
    %v1281 = vld [vmem:[%s9 + $0xd8] sm:$0xff]
    %v1282 = vld [vmem:[%s9 + $0xe0] sm:$0xff]
    %v1283 = vld [vmem:[%s9 + $0xe8] sm:$0xff]
    %v1284 = vld [vmem:[%s9 + $0xf0] sm:$0xff]
    %v1285 = vld [vmem:[%s9 + $0xf8] sm:$0xff]
    %v1286 = vld [vmem:[%s9 + $0x100] sm:$0xff]
    %v1287 = vld [vmem:[%s9 + $0x108] sm:$0xff]
    %v1288 = vld [vmem:[%s9 + $0x110] sm:$0xff]
    %v1289 = vld [vmem:[%s9 + $0x118] sm:$0xff]
    %v1290 = vld [vmem:[%s9 + $0x120] sm:$0xff]
    %v1291 = vld [vmem:[%s9 + $0x128] sm:$0xff]
    %v1292 = vld [vmem:[%s9 + $0x130] sm:$0xff]
    %v1293 = vld [vmem:[%s9 + $0x138] sm:$0xff]
    %v1294 = vld [vmem:[#allocation3] sm:$0xc]
    %v1295 = vld [vmem:[#allocation3 + $0x8] sm:$0xc]
    %v1296 = vld [vmem:[#allocation3 + $0x10] sm:$0xc]
    %s1297 = scalar_lea.vmem %s9, 320
    %v1298 = vld [vmem:[%s1297] sm:$0xff]
    %v1299 = vld [vmem:[%s1297 + $0x8] sm:$0xff]
    %v1300 = vld [vmem:[%s1297 + $0x10] sm:$0xff]
    %v1301 = vld [vmem:[%s1297 + $0x18] sm:$0xff]
    %v1302 = vld [vmem:[%s1297 + $0x20] sm:$0xff]
    %v1303 = vld [vmem:[%s1297 + $0x28] sm:$0xff]
    %v1304 = vld [vmem:[%s1297 + $0x30] sm:$0xff]
    %v1305 = vld [vmem:[%s1297 + $0x38] sm:$0xff]
    %v1306 = vld [vmem:[%s1297 + $0x40] sm:$0xff]
    %v1307 = vld [vmem:[%s1297 + $0x48] sm:$0xff]
    %v1308 = vld [vmem:[%s1297 + $0x50] sm:$0xff]
    %v1309 = vld [vmem:[%s1297 + $0x58] sm:$0xff]
    %v1310 = vld [vmem:[%s1297 + $0x60] sm:$0xff]
    %v1311 = vld [vmem:[%s1297 + $0x68] sm:$0xff]
    %v1312 = vld [vmem:[%s1297 + $0x70] sm:$0xff]
    %v1313 = vld [vmem:[%s1297 + $0x78] sm:$0xff]
    %v1314 = vld [vmem:[%s1297 + $0x80] sm:$0xff]
    %v1315 = vld [vmem:[%s1297 + $0x88] sm:$0xff]
    %v1316 = vld [vmem:[%s1297 + $0x90] sm:$0xff]
    %v1317 = vld [vmem:[%s1297 + $0x98] sm:$0xff]
    %v1318 = vld [vmem:[%s1297 + $0xa0] sm:$0xff]
    %v1319 = vld [vmem:[%s1297 + $0xa8] sm:$0xff]
    %v1320 = vld [vmem:[%s1297 + $0xb0] sm:$0xff]
    %v1321 = vld [vmem:[%s1297 + $0xb8] sm:$0xff]
    %v1322 = vld [vmem:[%s1297 + $0xc0] sm:$0xff]
    %v1323 = vld [vmem:[%s1297 + $0xc8] sm:$0xff]
    %v1324 = vld [vmem:[%s1297 + $0xd0] sm:$0xff]
    %v1325 = vld [vmem:[%s1297 + $0xd8] sm:$0xff]
    %v1326 = vld [vmem:[%s1297 + $0xe0] sm:$0xff]
    %v1327 = vld [vmem:[%s1297 + $0xe8] sm:$0xff]
    %v1328 = vld [vmem:[%s1297 + $0xf0] sm:$0xff]
    %v1329 = vld [vmem:[%s1297 + $0xf8] sm:$0xff]
    %v1330 = vld [vmem:[%s1297 + $0x100] sm:$0xff]
    %v1331 = vld [vmem:[%s1297 + $0x108] sm:$0xff]
    %v1332 = vld [vmem:[%s1297 + $0x110] sm:$0xff]
    %v1333 = vld [vmem:[%s1297 + $0x118] sm:$0xff]
    %v1334 = vld [vmem:[%s1297 + $0x120] sm:$0xff]
    %v1335 = vld [vmem:[%s1297 + $0x128] sm:$0xff]
    %v1336 = vld [vmem:[%s1297 + $0x130] sm:$0xff]
    %v1337 = vld [vmem:[%s1297 + $0x138] sm:$0xff]
    %v1341 = vrot.slane %v1294, 2
    %v1342 = vrot.slane %v1295, 2
    %v1343 = vrot.slane %v1296, 2
    %v1346 = vsel %vm1243, %v1343, 0
    %1348 = vmatpush.msra.mxu0 %v1313
    %1349 = vmatpush.msra.mxu0 %v1312
    %1350 = vmatpush.msra.mxu0 %v1311
    %1351 = vmatpush.msra.mxu0 %v1310
    %1352 = vmatpush.msra.mxu0 %v1309
    %1353 = vmatpush.msra.mxu0 %v1308
    %1354 = vmatpush.msra.mxu0 %v1307
    %1355 = vmatpush.msra.mxu0 %v1306
    %1356 = vmatpush.msra.mxu0 %v1305
    %1357 = vmatpush.msra.mxu0 %v1304
    %1358 = vmatpush.msra.mxu0 %v1303
    %1359 = vmatpush.msra.mxu0 %v1302
    %1360 = vmatpush.msra.mxu0 %v1301
    %1361 = vmatpush.msra.mxu0 %v1300
    %1362 = vmatpush.msra.mxu0 %v1299
    %1363 = vmatpush.msra.mxu0 %v1298
    %1364 = vmatmul.f32.gmra.mxu0 %v1341
    %v1365 = vpop.f32.mrf.mxu0
    %v1366 = vadd.f32 0.0, %v1365
    %1367 = vdwg.mxu0
    %1368 = vmatpush.msra.mxu0 %v1329
    %1369 = vmatpush.msra.mxu0 %v1328
    %1370 = vmatpush.msra.mxu0 %v1327
    %1371 = vmatpush.msra.mxu0 %v1326
    %1372 = vmatpush.msra.mxu0 %v1325
    %1373 = vmatpush.msra.mxu0 %v1324
    %1374 = vmatpush.msra.mxu0 %v1323
    %1375 = vmatpush.msra.mxu0 %v1322
    %1376 = vmatpush.msra.mxu0 %v1321
    %1377 = vmatpush.msra.mxu0 %v1320
    %1378 = vmatpush.msra.mxu0 %v1319
    %1379 = vmatpush.msra.mxu0 %v1318
    %1380 = vmatpush.msra.mxu0 %v1317
    %1381 = vmatpush.msra.mxu0 %v1316
    %1382 = vmatpush.msra.mxu0 %v1315
    %1383 = vmatpush.msra.mxu0 %v1314
    %1384 = vmatmul.f32.gmra.mxu0 %v1342
    %v1385 = vpop.f32.mrf.mxu0
    %v1386 = vadd.f32 %v1366, %v1385
    %1387 = vdwg.mxu0
    %1388 = vmatpush.msra.mxu0 0.0
    %1389 = vmatpush.msra.mxu0 0.0
    %1390 = vmatpush.msra.mxu0 0.0
    %1391 = vmatpush.msra.mxu0 0.0
    %1392 = vmatpush.msra.mxu0 0.0
    %1393 = vmatpush.msra.mxu0 0.0
    %1394 = vmatpush.msra.mxu0 0.0
    %1395 = vmatpush.msra.mxu0 0.0
    %1396 = vmatpush.msra.mxu0 %v1337
    %1397 = vmatpush.msra.mxu0 %v1336
    %1398 = vmatpush.msra.mxu0 %v1335
    %1399 = vmatpush.msra.mxu0 %v1334
    %1400 = vmatpush.msra.mxu0 %v1333
    %1401 = vmatpush.msra.mxu0 %v1332
    %1402 = vmatpush.msra.mxu0 %v1331
    %1403 = vmatpush.msra.mxu0 %v1330
    %1404 = vmatmul.f32.gmra.mxu0 %v1346
    %v1405 = vpop.f32.mrf.mxu0
    %v1406 = vadd.f32 %v1386, %v1405
    %1407 = vdwg.mxu0
    %v1409 = vsel %vm1243, %v1253, 0
    %1411 = vmatpush.msra.mxu0 %v1269
    %1412 = vmatpush.msra.mxu0 %v1268
    %1413 = vmatpush.msra.mxu0 %v1267
    %1414 = vmatpush.msra.mxu0 %v1266
    %1415 = vmatpush.msra.mxu0 %v1265
    %1416 = vmatpush.msra.mxu0 %v1264
    %1417 = vmatpush.msra.mxu0 %v1263
    %1418 = vmatpush.msra.mxu0 %v1262
    %1419 = vmatpush.msra.mxu0 %v1261
    %1420 = vmatpush.msra.mxu0 %v1260
    %1421 = vmatpush.msra.mxu0 %v1259
    %1422 = vmatpush.msra.mxu0 %v1258
    %1423 = vmatpush.msra.mxu0 %v1257
    %1424 = vmatpush.msra.mxu0 %v1256
    %1425 = vmatpush.msra.mxu0 %v1255
    %1426 = vmatpush.msra.mxu0 %v1254
    %1427 = vmatmul.f32.gmra.mxu0 %v1251
    %v1428 = vpop.f32.mrf.mxu0
    %v1429 = vadd.f32 %v1406, %v1428
    %1430 = vdwg.mxu0
    %1431 = vmatpush.msra.mxu0 %v1285
    %1432 = vmatpush.msra.mxu0 %v1284
    %1433 = vmatpush.msra.mxu0 %v1283
    %1434 = vmatpush.msra.mxu0 %v1282
    %1435 = vmatpush.msra.mxu0 %v1281
    %1436 = vmatpush.msra.mxu0 %v1280
    %1437 = vmatpush.msra.mxu0 %v1279
    %1438 = vmatpush.msra.mxu0 %v1278
    %1439 = vmatpush.msra.mxu0 %v1277
    %1440 = vmatpush.msra.mxu0 %v1276
    %1441 = vmatpush.msra.mxu0 %v1275
    %1442 = vmatpush.msra.mxu0 %v1274
    %1443 = vmatpush.msra.mxu0 %v1273
    %1444 = vmatpush.msra.mxu0 %v1272
    %1445 = vmatpush.msra.mxu0 %v1271
    %1446 = vmatpush.msra.mxu0 %v1270
    %1447 = vmatmul.f32.gmra.mxu0 %v1252
    %v1448 = vpop.f32.mrf.mxu0
    %v1449 = vadd.f32 %v1429, %v1448
    %1450 = vdwg.mxu0
    %1451 = vmatpush.msra.mxu0 0.0
    %1452 = vmatpush.msra.mxu0 0.0
    %1453 = vmatpush.msra.mxu0 0.0
    %1454 = vmatpush.msra.mxu0 0.0
    %1455 = vmatpush.msra.mxu0 0.0
    %1456 = vmatpush.msra.mxu0 0.0
    %1457 = vmatpush.msra.mxu0 0.0
    %1458 = vmatpush.msra.mxu0 0.0
    %1459 = vmatpush.msra.mxu0 %v1293
    %1460 = vmatpush.msra.mxu0 %v1292
    %1461 = vmatpush.msra.mxu0 %v1291
    %1462 = vmatpush.msra.mxu0 %v1290
    %1463 = vmatpush.msra.mxu0 %v1289
    %1464 = vmatpush.msra.mxu0 %v1288
    %1465 = vmatpush.msra.mxu0 %v1287
    %1466 = vmatpush.msra.mxu0 %v1286
    %1467 = vmatmul.f32.gmra.mxu0 %v1409
    %v1468 = vpop.f32.mrf.mxu0
    %v1469 = vadd.f32 %v1449, %v1468
    %1470 = vdwg.mxu0
    %v1471 = vld [vmem:[#allocation3] sm:$0x30]
    %v1472 = vld [vmem:[#allocation3 + $0x8] sm:$0x30]
    %v1473 = vld [vmem:[#allocation3 + $0x10] sm:$0x30]
    %s1474 = scalar_lea.vmem %s9, 640
    %v1475 = vld [vmem:[%s1474] sm:$0xff]
    %v1476 = vld [vmem:[%s1474 + $0x8] sm:$0xff]
    %v1477 = vld [vmem:[%s1474 + $0x10] sm:$0xff]
    %v1478 = vld [vmem:[%s1474 + $0x18] sm:$0xff]
    %v1479 = vld [vmem:[%s1474 + $0x20] sm:$0xff]
    %v1480 = vld [vmem:[%s1474 + $0x28] sm:$0xff]
    %v1481 = vld [vmem:[%s1474 + $0x30] sm:$0xff]
    %v1482 = vld [vmem:[%s1474 + $0x38] sm:$0xff]
    %v1483 = vld [vmem:[%s1474 + $0x40] sm:$0xff]
    %v1484 = vld [vmem:[%s1474 + $0x48] sm:$0xff]
    %v1485 = vld [vmem:[%s1474 + $0x50] sm:$0xff]
    %v1486 = vld [vmem:[%s1474 + $0x58] sm:$0xff]
    %v1487 = vld [vmem:[%s1474 + $0x60] sm:$0xff]
    %v1488 = vld [vmem:[%s1474 + $0x68] sm:$0xff]
    %v1489 = vld [vmem:[%s1474 + $0x70] sm:$0xff]
    %v1490 = vld [vmem:[%s1474 + $0x78] sm:$0xff]
    %v1491 = vld [vmem:[%s1474 + $0x80] sm:$0xff]
    %v1492 = vld [vmem:[%s1474 + $0x88] sm:$0xff]
    %v1493 = vld [vmem:[%s1474 + $0x90] sm:$0xff]
    %v1494 = vld [vmem:[%s1474 + $0x98] sm:$0xff]
    %v1495 = vld [vmem:[%s1474 + $0xa0] sm:$0xff]
    %v1496 = vld [vmem:[%s1474 + $0xa8] sm:$0xff]
    %v1497 = vld [vmem:[%s1474 + $0xb0] sm:$0xff]
    %v1498 = vld [vmem:[%s1474 + $0xb8] sm:$0xff]
    %v1499 = vld [vmem:[%s1474 + $0xc0] sm:$0xff]
    %v1500 = vld [vmem:[%s1474 + $0xc8] sm:$0xff]
    %v1501 = vld [vmem:[%s1474 + $0xd0] sm:$0xff]
    %v1502 = vld [vmem:[%s1474 + $0xd8] sm:$0xff]
    %v1503 = vld [vmem:[%s1474 + $0xe0] sm:$0xff]
    %v1504 = vld [vmem:[%s1474 + $0xe8] sm:$0xff]
    %v1505 = vld [vmem:[%s1474 + $0xf0] sm:$0xff]
    %v1506 = vld [vmem:[%s1474 + $0xf8] sm:$0xff]
    %v1507 = vld [vmem:[%s1474 + $0x100] sm:$0xff]
    %v1508 = vld [vmem:[%s1474 + $0x108] sm:$0xff]
    %v1509 = vld [vmem:[%s1474 + $0x110] sm:$0xff]
    %v1510 = vld [vmem:[%s1474 + $0x118] sm:$0xff]
    %v1511 = vld [vmem:[%s1474 + $0x120] sm:$0xff]
    %v1512 = vld [vmem:[%s1474 + $0x128] sm:$0xff]
    %v1513 = vld [vmem:[%s1474 + $0x130] sm:$0xff]
    %v1514 = vld [vmem:[%s1474 + $0x138] sm:$0xff]
    %v1518 = vrot.slane %v1471, 4
    %v1519 = vrot.slane %v1472, 4
    %v1520 = vrot.slane %v1473, 4
    %v1523 = vsel %vm1243, %v1520, 0
    %1525 = vmatpush.msra.mxu0 %v1490
    %1526 = vmatpush.msra.mxu0 %v1489
    %1527 = vmatpush.msra.mxu0 %v1488
    %1528 = vmatpush.msra.mxu0 %v1487
    %1529 = vmatpush.msra.mxu0 %v1486
    %1530 = vmatpush.msra.mxu0 %v1485
    %1531 = vmatpush.msra.mxu0 %v1484
    %1532 = vmatpush.msra.mxu0 %v1483
    %1533 = vmatpush.msra.mxu0 %v1482
    %1534 = vmatpush.msra.mxu0 %v1481
    %1535 = vmatpush.msra.mxu0 %v1480
    %1536 = vmatpush.msra.mxu0 %v1479
    %1537 = vmatpush.msra.mxu0 %v1478
    %1538 = vmatpush.msra.mxu0 %v1477
    %1539 = vmatpush.msra.mxu0 %v1476
    %1540 = vmatpush.msra.mxu0 %v1475
    %1541 = vmatmul.f32.gmra.mxu0 %v1518
    %v1542 = vpop.f32.mrf.mxu0
    %v1543 = vadd.f32 0.0, %v1542
    %1544 = vdwg.mxu0
    %1545 = vmatpush.msra.mxu0 %v1506
    %1546 = vmatpush.msra.mxu0 %v1505
    %1547 = vmatpush.msra.mxu0 %v1504
    %1548 = vmatpush.msra.mxu0 %v1503
    %1549 = vmatpush.msra.mxu0 %v1502
    %1550 = vmatpush.msra.mxu0 %v1501
    %1551 = vmatpush.msra.mxu0 %v1500
    %1552 = vmatpush.msra.mxu0 %v1499
    %1553 = vmatpush.msra.mxu0 %v1498
    %1554 = vmatpush.msra.mxu0 %v1497
    %1555 = vmatpush.msra.mxu0 %v1496
    %1556 = vmatpush.msra.mxu0 %v1495
    %1557 = vmatpush.msra.mxu0 %v1494
    %1558 = vmatpush.msra.mxu0 %v1493
    %1559 = vmatpush.msra.mxu0 %v1492
    %1560 = vmatpush.msra.mxu0 %v1491
    %1561 = vmatmul.f32.gmra.mxu0 %v1519
    %v1562 = vpop.f32.mrf.mxu0
    %v1563 = vadd.f32 %v1543, %v1562
    %1564 = vdwg.mxu0
    %1565 = vmatpush.msra.mxu0 0.0
    %1566 = vmatpush.msra.mxu0 0.0
    %1567 = vmatpush.msra.mxu0 0.0
    %1568 = vmatpush.msra.mxu0 0.0
    %1569 = vmatpush.msra.mxu0 0.0
    %1570 = vmatpush.msra.mxu0 0.0
    %1571 = vmatpush.msra.mxu0 0.0
    %1572 = vmatpush.msra.mxu0 0.0
    %1573 = vmatpush.msra.mxu0 %v1514
    %1574 = vmatpush.msra.mxu0 %v1513
    %1575 = vmatpush.msra.mxu0 %v1512
    %1576 = vmatpush.msra.mxu0 %v1511
    %1577 = vmatpush.msra.mxu0 %v1510
    %1578 = vmatpush.msra.mxu0 %v1509
    %1579 = vmatpush.msra.mxu0 %v1508
    %1580 = vmatpush.msra.mxu0 %v1507
    %1581 = vmatmul.f32.gmra.mxu0 %v1523
    %v1582 = vpop.f32.mrf.mxu0
    %v1583 = vadd.f32 %v1563, %v1582
    %1584 = vdwg.mxu0
    %v1585 = vadd.f32 %v1469, %v1583
    %v1586 = vld [vmem:[#allocation3] sm:$0xc0]
    %v1587 = vld [vmem:[#allocation3 + $0x8] sm:$0xc0]
    %v1588 = vld [vmem:[#allocation3 + $0x10] sm:$0xc0]
    %s1589 = scalar_lea.vmem %s9, 960
    %v1590 = vld [vmem:[%s1589] sm:$0xff]
    %v1591 = vld [vmem:[%s1589 + $0x8] sm:$0xff]
    %v1592 = vld [vmem:[%s1589 + $0x10] sm:$0xff]
    %v1593 = vld [vmem:[%s1589 + $0x18] sm:$0xff]
    %v1594 = vld [vmem:[%s1589 + $0x20] sm:$0xff]
    %v1595 = vld [vmem:[%s1589 + $0x28] sm:$0xff]
    %v1596 = vld [vmem:[%s1589 + $0x30] sm:$0xff]
    %v1597 = vld [vmem:[%s1589 + $0x38] sm:$0xff]
    %v1598 = vld [vmem:[%s1589 + $0x40] sm:$0xff]
    %v1599 = vld [vmem:[%s1589 + $0x48] sm:$0xff]
    %v1600 = vld [vmem:[%s1589 + $0x50] sm:$0xff]
    %v1601 = vld [vmem:[%s1589 + $0x58] sm:$0xff]
    %v1602 = vld [vmem:[%s1589 + $0x60] sm:$0xff]
    %v1603 = vld [vmem:[%s1589 + $0x68] sm:$0xff]
    %v1604 = vld [vmem:[%s1589 + $0x70] sm:$0xff]
    %v1605 = vld [vmem:[%s1589 + $0x78] sm:$0xff]
    %v1606 = vld [vmem:[%s1589 + $0x80] sm:$0xff]
    %v1607 = vld [vmem:[%s1589 + $0x88] sm:$0xff]
    %v1608 = vld [vmem:[%s1589 + $0x90] sm:$0xff]
    %v1609 = vld [vmem:[%s1589 + $0x98] sm:$0xff]
    %v1610 = vld [vmem:[%s1589 + $0xa0] sm:$0xff]
    %v1611 = vld [vmem:[%s1589 + $0xa8] sm:$0xff]
    %v1612 = vld [vmem:[%s1589 + $0xb0] sm:$0xff]
    %v1613 = vld [vmem:[%s1589 + $0xb8] sm:$0xff]
    %v1614 = vld [vmem:[%s1589 + $0xc0] sm:$0xff]
    %v1615 = vld [vmem:[%s1589 + $0xc8] sm:$0xff]
    %v1616 = vld [vmem:[%s1589 + $0xd0] sm:$0xff]
    %v1617 = vld [vmem:[%s1589 + $0xd8] sm:$0xff]
    %v1618 = vld [vmem:[%s1589 + $0xe0] sm:$0xff]
    %v1619 = vld [vmem:[%s1589 + $0xe8] sm:$0xff]
    %v1620 = vld [vmem:[%s1589 + $0xf0] sm:$0xff]
    %v1621 = vld [vmem:[%s1589 + $0xf8] sm:$0xff]
    %v1622 = vld [vmem:[%s1589 + $0x100] sm:$0xff]
    %v1623 = vld [vmem:[%s1589 + $0x108] sm:$0xff]
    %v1624 = vld [vmem:[%s1589 + $0x110] sm:$0xff]
    %v1625 = vld [vmem:[%s1589 + $0x118] sm:$0xff]
    %v1626 = vld [vmem:[%s1589 + $0x120] sm:$0xff]
    %v1627 = vld [vmem:[%s1589 + $0x128] sm:$0xff]
    %v1628 = vld [vmem:[%s1589 + $0x130] sm:$0xff]
    %v1629 = vld [vmem:[%s1589 + $0x138] sm:$0xff]
    %v1633 = vrot.slane %v1586, 6
    %v1634 = vrot.slane %v1587, 6
    %v1635 = vrot.slane %v1588, 6
    %v1638 = vsel %vm1243, %v1635, 0
    %1640 = vmatpush.msra.mxu0 %v1605
    %1641 = vmatpush.msra.mxu0 %v1604
    %1642 = vmatpush.msra.mxu0 %v1603
    %1643 = vmatpush.msra.mxu0 %v1602
    %1644 = vmatpush.msra.mxu0 %v1601
    %1645 = vmatpush.msra.mxu0 %v1600
    %1646 = vmatpush.msra.mxu0 %v1599
    %1647 = vmatpush.msra.mxu0 %v1598
    %1648 = vmatpush.msra.mxu0 %v1597
    %1649 = vmatpush.msra.mxu0 %v1596
    %1650 = vmatpush.msra.mxu0 %v1595
    %1651 = vmatpush.msra.mxu0 %v1594
    %1652 = vmatpush.msra.mxu0 %v1593
    %1653 = vmatpush.msra.mxu0 %v1592
    %1654 = vmatpush.msra.mxu0 %v1591
    %1655 = vmatpush.msra.mxu0 %v1590
    %1656 = vmatmul.f32.gmra.mxu0 %v1633
    %v1657 = vpop.f32.mrf.mxu0
    %v1658 = vadd.f32 0.0, %v1657
    %1659 = vdwg.mxu0
    %1660 = vmatpush.msra.mxu0 %v1621
    %1661 = vmatpush.msra.mxu0 %v1620
    %1662 = vmatpush.msra.mxu0 %v1619
    %1663 = vmatpush.msra.mxu0 %v1618
    %1664 = vmatpush.msra.mxu0 %v1617
    %1665 = vmatpush.msra.mxu0 %v1616
    %1666 = vmatpush.msra.mxu0 %v1615
    %1667 = vmatpush.msra.mxu0 %v1614
    %1668 = vmatpush.msra.mxu0 %v1613
    %1669 = vmatpush.msra.mxu0 %v1612
    %1670 = vmatpush.msra.mxu0 %v1611
    %1671 = vmatpush.msra.mxu0 %v1610
    %1672 = vmatpush.msra.mxu0 %v1609
    %1673 = vmatpush.msra.mxu0 %v1608
    %1674 = vmatpush.msra.mxu0 %v1607
    %1675 = vmatpush.msra.mxu0 %v1606
    %1676 = vmatmul.f32.gmra.mxu0 %v1634
    %v1677 = vpop.f32.mrf.mxu0
    %v1678 = vadd.f32 %v1658, %v1677
    %1679 = vdwg.mxu0
    %1680 = vmatpush.msra.mxu0 0.0
    %1681 = vmatpush.msra.mxu0 0.0
    %1682 = vmatpush.msra.mxu0 0.0
    %1683 = vmatpush.msra.mxu0 0.0
    %1684 = vmatpush.msra.mxu0 0.0
    %1685 = vmatpush.msra.mxu0 0.0
    %1686 = vmatpush.msra.mxu0 0.0
    %1687 = vmatpush.msra.mxu0 0.0
    %1688 = vmatpush.msra.mxu0 %v1629
    %1689 = vmatpush.msra.mxu0 %v1628
    %1690 = vmatpush.msra.mxu0 %v1627
    %1691 = vmatpush.msra.mxu0 %v1626
    %1692 = vmatpush.msra.mxu0 %v1625
    %1693 = vmatpush.msra.mxu0 %v1624
    %1694 = vmatpush.msra.mxu0 %v1623
    %1695 = vmatpush.msra.mxu0 %v1622
    %1696 = vmatmul.f32.gmra.mxu0 %v1638
    %v1697 = vpop.f32.mrf.mxu0
    %v1698 = vadd.f32 %v1678, %v1697
    %1699 = vdwg.mxu0
    %v1700 = vadd.f32 %v1585, %v1698
    %v1701 = vld [vmem:[#allocation3 + $0x18] sm:$0x3]
    %v1702 = vld [vmem:[#allocation3 + $0x20] sm:$0x3]
    %v1703 = vld [vmem:[#allocation3 + $0x28] sm:$0x3]
    %s1704 = scalar_lea.vmem %s9, 1280
    %v1705 = vld [vmem:[%s1704] sm:$0xff]
    %v1706 = vld [vmem:[%s1704 + $0x8] sm:$0xff]
    %v1707 = vld [vmem:[%s1704 + $0x10] sm:$0xff]
    %v1708 = vld [vmem:[%s1704 + $0x18] sm:$0xff]
    %v1709 = vld [vmem:[%s1704 + $0x20] sm:$0xff]
    %v1710 = vld [vmem:[%s1704 + $0x28] sm:$0xff]
    %v1711 = vld [vmem:[%s1704 + $0x30] sm:$0xff]
    %v1712 = vld [vmem:[%s1704 + $0x38] sm:$0xff]
    %v1713 = vld [vmem:[%s1704 + $0x40] sm:$0xff]
    %v1714 = vld [vmem:[%s1704 + $0x48] sm:$0xff]
    %v1715 = vld [vmem:[%s1704 + $0x50] sm:$0xff]
    %v1716 = vld [vmem:[%s1704 + $0x58] sm:$0xff]
    %v1717 = vld [vmem:[%s1704 + $0x60] sm:$0xff]
    %v1718 = vld [vmem:[%s1704 + $0x68] sm:$0xff]
    %v1719 = vld [vmem:[%s1704 + $0x70] sm:$0xff]
    %v1720 = vld [vmem:[%s1704 + $0x78] sm:$0xff]
    %v1721 = vld [vmem:[%s1704 + $0x80] sm:$0xff]
    %v1722 = vld [vmem:[%s1704 + $0x88] sm:$0xff]
    %v1723 = vld [vmem:[%s1704 + $0x90] sm:$0xff]
    %v1724 = vld [vmem:[%s1704 + $0x98] sm:$0xff]
    %v1725 = vld [vmem:[%s1704 + $0xa0] sm:$0xff]
    %v1726 = vld [vmem:[%s1704 + $0xa8] sm:$0xff]
    %v1727 = vld [vmem:[%s1704 + $0xb0] sm:$0xff]
    %v1728 = vld [vmem:[%s1704 + $0xb8] sm:$0xff]
    %v1729 = vld [vmem:[%s1704 + $0xc0] sm:$0xff]
    %v1730 = vld [vmem:[%s1704 + $0xc8] sm:$0xff]
    %v1731 = vld [vmem:[%s1704 + $0xd0] sm:$0xff]
    %v1732 = vld [vmem:[%s1704 + $0xd8] sm:$0xff]
    %v1733 = vld [vmem:[%s1704 + $0xe0] sm:$0xff]
    %v1734 = vld [vmem:[%s1704 + $0xe8] sm:$0xff]
    %v1735 = vld [vmem:[%s1704 + $0xf0] sm:$0xff]
    %v1736 = vld [vmem:[%s1704 + $0xf8] sm:$0xff]
    %v1737 = vld [vmem:[%s1704 + $0x100] sm:$0xff]
    %v1738 = vld [vmem:[%s1704 + $0x108] sm:$0xff]
    %v1739 = vld [vmem:[%s1704 + $0x110] sm:$0xff]
    %v1740 = vld [vmem:[%s1704 + $0x118] sm:$0xff]
    %v1741 = vld [vmem:[%s1704 + $0x120] sm:$0xff]
    %v1742 = vld [vmem:[%s1704 + $0x128] sm:$0xff]
    %v1743 = vld [vmem:[%s1704 + $0x130] sm:$0xff]
    %v1744 = vld [vmem:[%s1704 + $0x138] sm:$0xff]
    %v1746 = vsel %vm1243, %v1703, 0
    %1748 = vmatpush.msra.mxu0 %v1720
    %1749 = vmatpush.msra.mxu0 %v1719
    %1750 = vmatpush.msra.mxu0 %v1718
    %1751 = vmatpush.msra.mxu0 %v1717
    %1752 = vmatpush.msra.mxu0 %v1716
    %1753 = vmatpush.msra.mxu0 %v1715
    %1754 = vmatpush.msra.mxu0 %v1714
    %1755 = vmatpush.msra.mxu0 %v1713
    %1756 = vmatpush.msra.mxu0 %v1712
    %1757 = vmatpush.msra.mxu0 %v1711
    %1758 = vmatpush.msra.mxu0 %v1710
    %1759 = vmatpush.msra.mxu0 %v1709
    %1760 = vmatpush.msra.mxu0 %v1708
    %1761 = vmatpush.msra.mxu0 %v1707
    %1762 = vmatpush.msra.mxu0 %v1706
    %1763 = vmatpush.msra.mxu0 %v1705
    %1764 = vmatmul.f32.gmra.mxu0 %v1701
    %v1765 = vpop.f32.mrf.mxu0
    %v1766 = vadd.f32 0.0, %v1765
    %1767 = vdwg.mxu0
    %1768 = vmatpush.msra.mxu0 %v1736
    %1769 = vmatpush.msra.mxu0 %v1735
    %1770 = vmatpush.msra.mxu0 %v1734
    %1771 = vmatpush.msra.mxu0 %v1733
    %1772 = vmatpush.msra.mxu0 %v1732
    %1773 = vmatpush.msra.mxu0 %v1731
    %1774 = vmatpush.msra.mxu0 %v1730
    %1775 = vmatpush.msra.mxu0 %v1729
    %1776 = vmatpush.msra.mxu0 %v1728
    %1777 = vmatpush.msra.mxu0 %v1727
    %1778 = vmatpush.msra.mxu0 %v1726
    %1779 = vmatpush.msra.mxu0 %v1725
    %1780 = vmatpush.msra.mxu0 %v1724
    %1781 = vmatpush.msra.mxu0 %v1723
    %1782 = vmatpush.msra.mxu0 %v1722
    %1783 = vmatpush.msra.mxu0 %v1721
    %1784 = vmatmul.f32.gmra.mxu0 %v1702
    %v1785 = vpop.f32.mrf.mxu0
    %v1786 = vadd.f32 %v1766, %v1785
    %1787 = vdwg.mxu0
    %1788 = vmatpush.msra.mxu0 0.0
    %1789 = vmatpush.msra.mxu0 0.0
    %1790 = vmatpush.msra.mxu0 0.0
    %1791 = vmatpush.msra.mxu0 0.0
    %1792 = vmatpush.msra.mxu0 0.0
    %1793 = vmatpush.msra.mxu0 0.0
    %1794 = vmatpush.msra.mxu0 0.0
    %1795 = vmatpush.msra.mxu0 0.0
    %1796 = vmatpush.msra.mxu0 %v1744
    %1797 = vmatpush.msra.mxu0 %v1743
    %1798 = vmatpush.msra.mxu0 %v1742
    %1799 = vmatpush.msra.mxu0 %v1741
    %1800 = vmatpush.msra.mxu0 %v1740
    %1801 = vmatpush.msra.mxu0 %v1739
    %1802 = vmatpush.msra.mxu0 %v1738
    %1803 = vmatpush.msra.mxu0 %v1737
    %1804 = vmatmul.f32.gmra.mxu0 %v1746
    %v1805 = vpop.f32.mrf.mxu0
    %v1806 = vadd.f32 %v1786, %v1805
    %1807 = vdwg.mxu0
    %v1808 = vadd.f32 %v1700, %v1806
    %v1809 = vld [vmem:[#allocation3 + $0x18] sm:$0xc]
    %v1810 = vld [vmem:[#allocation3 + $0x20] sm:$0xc]
    %v1811 = vld [vmem:[#allocation3 + $0x28] sm:$0xc]
    %s1812 = scalar_lea.vmem %s9, 1600
    %v1813 = vld [vmem:[%s1812] sm:$0xff]
    %v1814 = vld [vmem:[%s1812 + $0x8] sm:$0xff]
    %v1815 = vld [vmem:[%s1812 + $0x10] sm:$0xff]
    %v1816 = vld [vmem:[%s1812 + $0x18] sm:$0xff]
    %v1817 = vld [vmem:[%s1812 + $0x20] sm:$0xff]
    %v1818 = vld [vmem:[%s1812 + $0x28] sm:$0xff]
    %v1819 = vld [vmem:[%s1812 + $0x30] sm:$0xff]
    %v1820 = vld [vmem:[%s1812 + $0x38] sm:$0xff]
    %v1821 = vld [vmem:[%s1812 + $0x40] sm:$0xff]
    %v1822 = vld [vmem:[%s1812 + $0x48] sm:$0xff]
    %v1823 = vld [vmem:[%s1812 + $0x50] sm:$0xff]
    %v1824 = vld [vmem:[%s1812 + $0x58] sm:$0xff]
    %v1825 = vld [vmem:[%s1812 + $0x60] sm:$0xff]
    %v1826 = vld [vmem:[%s1812 + $0x68] sm:$0xff]
    %v1827 = vld [vmem:[%s1812 + $0x70] sm:$0xff]
    %v1828 = vld [vmem:[%s1812 + $0x78] sm:$0xff]
    %v1829 = vld [vmem:[%s1812 + $0x80] sm:$0xff]
    %v1830 = vld [vmem:[%s1812 + $0x88] sm:$0xff]
    %v1831 = vld [vmem:[%s1812 + $0x90] sm:$0xff]
    %v1832 = vld [vmem:[%s1812 + $0x98] sm:$0xff]
    %v1833 = vld [vmem:[%s1812 + $0xa0] sm:$0xff]
    %v1834 = vld [vmem:[%s1812 + $0xa8] sm:$0xff]
    %v1835 = vld [vmem:[%s1812 + $0xb0] sm:$0xff]
    %v1836 = vld [vmem:[%s1812 + $0xb8] sm:$0xff]
    %v1837 = vld [vmem:[%s1812 + $0xc0] sm:$0xff]
    %v1838 = vld [vmem:[%s1812 + $0xc8] sm:$0xff]
    %v1839 = vld [vmem:[%s1812 + $0xd0] sm:$0xff]
    %v1840 = vld [vmem:[%s1812 + $0xd8] sm:$0xff]
    %v1841 = vld [vmem:[%s1812 + $0xe0] sm:$0xff]
    %v1842 = vld [vmem:[%s1812 + $0xe8] sm:$0xff]
    %v1843 = vld [vmem:[%s1812 + $0xf0] sm:$0xff]
    %v1844 = vld [vmem:[%s1812 + $0xf8] sm:$0xff]
    %v1845 = vld [vmem:[%s1812 + $0x100] sm:$0xff]
    %v1846 = vld [vmem:[%s1812 + $0x108] sm:$0xff]
    %v1847 = vld [vmem:[%s1812 + $0x110] sm:$0xff]
    %v1848 = vld [vmem:[%s1812 + $0x118] sm:$0xff]
    %v1849 = vld [vmem:[%s1812 + $0x120] sm:$0xff]
    %v1850 = vld [vmem:[%s1812 + $0x128] sm:$0xff]
    %v1851 = vld [vmem:[%s1812 + $0x130] sm:$0xff]
    %v1852 = vld [vmem:[%s1812 + $0x138] sm:$0xff]
    %v1856 = vrot.slane %v1809, 2
    %v1857 = vrot.slane %v1810, 2
    %v1858 = vrot.slane %v1811, 2
    %v1861 = vsel %vm1243, %v1858, 0
    %1863 = vmatpush.msra.mxu0 %v1828
    %1864 = vmatpush.msra.mxu0 %v1827
    %1865 = vmatpush.msra.mxu0 %v1826
    %1866 = vmatpush.msra.mxu0 %v1825
    %1867 = vmatpush.msra.mxu0 %v1824
    %1868 = vmatpush.msra.mxu0 %v1823
    %1869 = vmatpush.msra.mxu0 %v1822
    %1870 = vmatpush.msra.mxu0 %v1821
    %1871 = vmatpush.msra.mxu0 %v1820
    %1872 = vmatpush.msra.mxu0 %v1819
    %1873 = vmatpush.msra.mxu0 %v1818
    %1874 = vmatpush.msra.mxu0 %v1817
    %1875 = vmatpush.msra.mxu0 %v1816
    %1876 = vmatpush.msra.mxu0 %v1815
    %1877 = vmatpush.msra.mxu0 %v1814
    %1878 = vmatpush.msra.mxu0 %v1813
    %1879 = vmatmul.f32.gmra.mxu0 %v1856
    %v1880 = vpop.f32.mrf.mxu0
    %v1881 = vadd.f32 0.0, %v1880
    %1882 = vdwg.mxu0
    %1883 = vmatpush.msra.mxu0 %v1844
    %1884 = vmatpush.msra.mxu0 %v1843
    %1885 = vmatpush.msra.mxu0 %v1842
    %1886 = vmatpush.msra.mxu0 %v1841
    %1887 = vmatpush.msra.mxu0 %v1840
    %1888 = vmatpush.msra.mxu0 %v1839
    %1889 = vmatpush.msra.mxu0 %v1838
    %1890 = vmatpush.msra.mxu0 %v1837
    %1891 = vmatpush.msra.mxu0 %v1836
    %1892 = vmatpush.msra.mxu0 %v1835
    %1893 = vmatpush.msra.mxu0 %v1834
    %1894 = vmatpush.msra.mxu0 %v1833
    %1895 = vmatpush.msra.mxu0 %v1832
    %1896 = vmatpush.msra.mxu0 %v1831
    %1897 = vmatpush.msra.mxu0 %v1830
    %1898 = vmatpush.msra.mxu0 %v1829
    %1899 = vmatmul.f32.gmra.mxu0 %v1857
    %v1900 = vpop.f32.mrf.mxu0
    %v1901 = vadd.f32 %v1881, %v1900
    %1902 = vdwg.mxu0
    %1903 = vmatpush.msra.mxu0 0.0
    %1904 = vmatpush.msra.mxu0 0.0
    %1905 = vmatpush.msra.mxu0 0.0
    %1906 = vmatpush.msra.mxu0 0.0
    %1907 = vmatpush.msra.mxu0 0.0
    %1908 = vmatpush.msra.mxu0 0.0
    %1909 = vmatpush.msra.mxu0 0.0
    %1910 = vmatpush.msra.mxu0 0.0
    %1911 = vmatpush.msra.mxu0 %v1852
    %1912 = vmatpush.msra.mxu0 %v1851
    %1913 = vmatpush.msra.mxu0 %v1850
    %1914 = vmatpush.msra.mxu0 %v1849
    %1915 = vmatpush.msra.mxu0 %v1848
    %1916 = vmatpush.msra.mxu0 %v1847
    %1917 = vmatpush.msra.mxu0 %v1846
    %1918 = vmatpush.msra.mxu0 %v1845
    %1919 = vmatmul.f32.gmra.mxu0 %v1861
    %v1920 = vpop.f32.mrf.mxu0
    %v1921 = vadd.f32 %v1901, %v1920
    %1922 = vdwg.mxu0
    %v1923 = vadd.f32 %v1808, %v1921
    %v1924 = vld [vmem:[#allocation3 + $0x18] sm:$0x30]
    %v1925 = vld [vmem:[#allocation3 + $0x20] sm:$0x30]
    %v1926 = vld [vmem:[#allocation3 + $0x28] sm:$0x30]
    %s1927 = scalar_lea.vmem %s9, 1920
    %v1928 = vld [vmem:[%s1927] sm:$0xff]
    %v1929 = vld [vmem:[%s1927 + $0x8] sm:$0xff]
    %v1930 = vld [vmem:[%s1927 + $0x10] sm:$0xff]
    %v1931 = vld [vmem:[%s1927 + $0x18] sm:$0xff]
    %v1932 = vld [vmem:[%s1927 + $0x20] sm:$0xff]
    %v1933 = vld [vmem:[%s1927 + $0x28] sm:$0xff]
    %v1934 = vld [vmem:[%s1927 + $0x30] sm:$0xff]
    %v1935 = vld [vmem:[%s1927 + $0x38] sm:$0xff]
    %v1936 = vld [vmem:[%s1927 + $0x40] sm:$0xff]
    %v1937 = vld [vmem:[%s1927 + $0x48] sm:$0xff]
    %v1938 = vld [vmem:[%s1927 + $0x50] sm:$0xff]
    %v1939 = vld [vmem:[%s1927 + $0x58] sm:$0xff]
    %v1940 = vld [vmem:[%s1927 + $0x60] sm:$0xff]
    %v1941 = vld [vmem:[%s1927 + $0x68] sm:$0xff]
    %v1942 = vld [vmem:[%s1927 + $0x70] sm:$0xff]
    %v1943 = vld [vmem:[%s1927 + $0x78] sm:$0xff]
    %v1944 = vld [vmem:[%s1927 + $0x80] sm:$0xff]
    %v1945 = vld [vmem:[%s1927 + $0x88] sm:$0xff]
    %v1946 = vld [vmem:[%s1927 + $0x90] sm:$0xff]
    %v1947 = vld [vmem:[%s1927 + $0x98] sm:$0xff]
    %v1948 = vld [vmem:[%s1927 + $0xa0] sm:$0xff]
    %v1949 = vld [vmem:[%s1927 + $0xa8] sm:$0xff]
    %v1950 = vld [vmem:[%s1927 + $0xb0] sm:$0xff]
    %v1951 = vld [vmem:[%s1927 + $0xb8] sm:$0xff]
    %v1952 = vld [vmem:[%s1927 + $0xc0] sm:$0xff]
    %v1953 = vld [vmem:[%s1927 + $0xc8] sm:$0xff]
    %v1954 = vld [vmem:[%s1927 + $0xd0] sm:$0xff]
    %v1955 = vld [vmem:[%s1927 + $0xd8] sm:$0xff]
    %v1956 = vld [vmem:[%s1927 + $0xe0] sm:$0xff]
    %v1957 = vld [vmem:[%s1927 + $0xe8] sm:$0xff]
    %v1958 = vld [vmem:[%s1927 + $0xf0] sm:$0xff]
    %v1959 = vld [vmem:[%s1927 + $0xf8] sm:$0xff]
    %v1960 = vld [vmem:[%s1927 + $0x100] sm:$0xff]
    %v1961 = vld [vmem:[%s1927 + $0x108] sm:$0xff]
    %v1962 = vld [vmem:[%s1927 + $0x110] sm:$0xff]
    %v1963 = vld [vmem:[%s1927 + $0x118] sm:$0xff]
    %v1964 = vld [vmem:[%s1927 + $0x120] sm:$0xff]
    %v1965 = vld [vmem:[%s1927 + $0x128] sm:$0xff]
    %v1966 = vld [vmem:[%s1927 + $0x130] sm:$0xff]
    %v1967 = vld [vmem:[%s1927 + $0x138] sm:$0xff]
    %v1971 = vrot.slane %v1924, 4
    %v1972 = vrot.slane %v1925, 4
    %v1973 = vrot.slane %v1926, 4
    %v1976 = vsel %vm1243, %v1973, 0
    %1978 = vmatpush.msra.mxu0 %v1943
    %1979 = vmatpush.msra.mxu0 %v1942
    %1980 = vmatpush.msra.mxu0 %v1941
    %1981 = vmatpush.msra.mxu0 %v1940
    %1982 = vmatpush.msra.mxu0 %v1939
    %1983 = vmatpush.msra.mxu0 %v1938
    %1984 = vmatpush.msra.mxu0 %v1937
    %1985 = vmatpush.msra.mxu0 %v1936
    %1986 = vmatpush.msra.mxu0 %v1935
    %1987 = vmatpush.msra.mxu0 %v1934
    %1988 = vmatpush.msra.mxu0 %v1933
    %1989 = vmatpush.msra.mxu0 %v1932
    %1990 = vmatpush.msra.mxu0 %v1931
    %1991 = vmatpush.msra.mxu0 %v1930
    %1992 = vmatpush.msra.mxu0 %v1929
    %1993 = vmatpush.msra.mxu0 %v1928
    %1994 = vmatmul.f32.gmra.mxu0 %v1971
    %v1995 = vpop.f32.mrf.mxu0
    %v1996 = vadd.f32 0.0, %v1995
    %1997 = vdwg.mxu0
    %1998 = vmatpush.msra.mxu0 %v1959
    %1999 = vmatpush.msra.mxu0 %v1958
    %2000 = vmatpush.msra.mxu0 %v1957
    %2001 = vmatpush.msra.mxu0 %v1956
    %2002 = vmatpush.msra.mxu0 %v1955
    %2003 = vmatpush.msra.mxu0 %v1954
    %2004 = vmatpush.msra.mxu0 %v1953
    %2005 = vmatpush.msra.mxu0 %v1952
    %2006 = vmatpush.msra.mxu0 %v1951
    %2007 = vmatpush.msra.mxu0 %v1950
    %2008 = vmatpush.msra.mxu0 %v1949
    %2009 = vmatpush.msra.mxu0 %v1948
    %2010 = vmatpush.msra.mxu0 %v1947
    %2011 = vmatpush.msra.mxu0 %v1946
    %2012 = vmatpush.msra.mxu0 %v1945
    %2013 = vmatpush.msra.mxu0 %v1944
    %2014 = vmatmul.f32.gmra.mxu0 %v1972
    %v2015 = vpop.f32.mrf.mxu0
    %v2016 = vadd.f32 %v1996, %v2015
    %2017 = vdwg.mxu0
    %2018 = vmatpush.msra.mxu0 0.0
    %2019 = vmatpush.msra.mxu0 0.0
    %2020 = vmatpush.msra.mxu0 0.0
    %2021 = vmatpush.msra.mxu0 0.0
    %2022 = vmatpush.msra.mxu0 0.0
    %2023 = vmatpush.msra.mxu0 0.0
    %2024 = vmatpush.msra.mxu0 0.0
    %2025 = vmatpush.msra.mxu0 0.0
    %2026 = vmatpush.msra.mxu0 %v1967
    %2027 = vmatpush.msra.mxu0 %v1966
    %2028 = vmatpush.msra.mxu0 %v1965
    %2029 = vmatpush.msra.mxu0 %v1964
    %2030 = vmatpush.msra.mxu0 %v1963
    %2031 = vmatpush.msra.mxu0 %v1962
    %2032 = vmatpush.msra.mxu0 %v1961
    %2033 = vmatpush.msra.mxu0 %v1960
    %2034 = vmatmul.f32.gmra.mxu0 %v1976
    %v2035 = vpop.f32.mrf.mxu0
    %v2036 = vadd.f32 %v2016, %v2035
    %2037 = vdwg.mxu0
    %v2038 = vadd.f32 %v1923, %v2036
    %v2039 = vld [vmem:[#allocation3 + $0x18] sm:$0xc0]
    %v2040 = vld [vmem:[#allocation3 + $0x20] sm:$0xc0]
    %v2041 = vld [vmem:[#allocation3 + $0x28] sm:$0xc0]
    %s2042 = scalar_lea.vmem %s9, 2240
    %v2043 = vld [vmem:[%s2042] sm:$0xff]
    %v2044 = vld [vmem:[%s2042 + $0x8] sm:$0xff]
    %v2045 = vld [vmem:[%s2042 + $0x10] sm:$0xff]
    %v2046 = vld [vmem:[%s2042 + $0x18] sm:$0xff]
    %v2047 = vld [vmem:[%s2042 + $0x20] sm:$0xff]
    %v2048 = vld [vmem:[%s2042 + $0x28] sm:$0xff]
    %v2049 = vld [vmem:[%s2042 + $0x30] sm:$0xff]
    %v2050 = vld [vmem:[%s2042 + $0x38] sm:$0xff]
    %v2051 = vld [vmem:[%s2042 + $0x40] sm:$0xff]
    %v2052 = vld [vmem:[%s2042 + $0x48] sm:$0xff]
    %v2053 = vld [vmem:[%s2042 + $0x50] sm:$0xff]
    %v2054 = vld [vmem:[%s2042 + $0x58] sm:$0xff]
    %v2055 = vld [vmem:[%s2042 + $0x60] sm:$0xff]
    %v2056 = vld [vmem:[%s2042 + $0x68] sm:$0xff]
    %v2057 = vld [vmem:[%s2042 + $0x70] sm:$0xff]
    %v2058 = vld [vmem:[%s2042 + $0x78] sm:$0xff]
    %v2059 = vld [vmem:[%s2042 + $0x80] sm:$0xff]
    %v2060 = vld [vmem:[%s2042 + $0x88] sm:$0xff]
    %v2061 = vld [vmem:[%s2042 + $0x90] sm:$0xff]
    %v2062 = vld [vmem:[%s2042 + $0x98] sm:$0xff]
    %v2063 = vld [vmem:[%s2042 + $0xa0] sm:$0xff]
    %v2064 = vld [vmem:[%s2042 + $0xa8] sm:$0xff]
    %v2065 = vld [vmem:[%s2042 + $0xb0] sm:$0xff]
    %v2066 = vld [vmem:[%s2042 + $0xb8] sm:$0xff]
    %v2067 = vld [vmem:[%s2042 + $0xc0] sm:$0xff]
    %v2068 = vld [vmem:[%s2042 + $0xc8] sm:$0xff]
    %v2069 = vld [vmem:[%s2042 + $0xd0] sm:$0xff]
    %v2070 = vld [vmem:[%s2042 + $0xd8] sm:$0xff]
    %v2071 = vld [vmem:[%s2042 + $0xe0] sm:$0xff]
    %v2072 = vld [vmem:[%s2042 + $0xe8] sm:$0xff]
    %v2073 = vld [vmem:[%s2042 + $0xf0] sm:$0xff]
    %v2074 = vld [vmem:[%s2042 + $0xf8] sm:$0xff]
    %v2075 = vld [vmem:[%s2042 + $0x100] sm:$0xff]
    %v2076 = vld [vmem:[%s2042 + $0x108] sm:$0xff]
    %v2077 = vld [vmem:[%s2042 + $0x110] sm:$0xff]
    %v2078 = vld [vmem:[%s2042 + $0x118] sm:$0xff]
    %v2079 = vld [vmem:[%s2042 + $0x120] sm:$0xff]
    %v2080 = vld [vmem:[%s2042 + $0x128] sm:$0xff]
    %v2081 = vld [vmem:[%s2042 + $0x130] sm:$0xff]
    %v2082 = vld [vmem:[%s2042 + $0x138] sm:$0xff]
    %v2086 = vrot.slane %v2039, 6
    %v2087 = vrot.slane %v2040, 6
    %v2088 = vrot.slane %v2041, 6
    %v2091 = vsel %vm1243, %v2088, 0
    %2093 = vmatpush.msra.mxu0 %v2058
    %2094 = vmatpush.msra.mxu0 %v2057
    %2095 = vmatpush.msra.mxu0 %v2056
    %2096 = vmatpush.msra.mxu0 %v2055
    %2097 = vmatpush.msra.mxu0 %v2054
    %2098 = vmatpush.msra.mxu0 %v2053
    %2099 = vmatpush.msra.mxu0 %v2052
    %2100 = vmatpush.msra.mxu0 %v2051
    %2101 = vmatpush.msra.mxu0 %v2050
    %2102 = vmatpush.msra.mxu0 %v2049
    %2103 = vmatpush.msra.mxu0 %v2048
    %2104 = vmatpush.msra.mxu0 %v2047
    %2105 = vmatpush.msra.mxu0 %v2046
    %2106 = vmatpush.msra.mxu0 %v2045
    %2107 = vmatpush.msra.mxu0 %v2044
    %2108 = vmatpush.msra.mxu0 %v2043
    %2109 = vmatmul.f32.gmra.mxu0 %v2086
    %v2110 = vpop.f32.mrf.mxu0
    %v2111 = vadd.f32 0.0, %v2110
    %2112 = vdwg.mxu0
    %2113 = vmatpush.msra.mxu0 %v2074
    %2114 = vmatpush.msra.mxu0 %v2073
    %2115 = vmatpush.msra.mxu0 %v2072
    %2116 = vmatpush.msra.mxu0 %v2071
    %2117 = vmatpush.msra.mxu0 %v2070
    %2118 = vmatpush.msra.mxu0 %v2069
    %2119 = vmatpush.msra.mxu0 %v2068
    %2120 = vmatpush.msra.mxu0 %v2067
    %2121 = vmatpush.msra.mxu0 %v2066
    %2122 = vmatpush.msra.mxu0 %v2065
    %2123 = vmatpush.msra.mxu0 %v2064
    %2124 = vmatpush.msra.mxu0 %v2063
    %2125 = vmatpush.msra.mxu0 %v2062
    %2126 = vmatpush.msra.mxu0 %v2061
    %2127 = vmatpush.msra.mxu0 %v2060
    %2128 = vmatpush.msra.mxu0 %v2059
    %2129 = vmatmul.f32.gmra.mxu0 %v2087
    %v2130 = vpop.f32.mrf.mxu0
    %v2131 = vadd.f32 %v2111, %v2130
    %2132 = vdwg.mxu0
    %2133 = vmatpush.msra.mxu0 0.0
    %2134 = vmatpush.msra.mxu0 0.0
    %2135 = vmatpush.msra.mxu0 0.0
    %2136 = vmatpush.msra.mxu0 0.0
    %2137 = vmatpush.msra.mxu0 0.0
    %2138 = vmatpush.msra.mxu0 0.0
    %2139 = vmatpush.msra.mxu0 0.0
    %2140 = vmatpush.msra.mxu0 0.0
    %2141 = vmatpush.msra.mxu0 %v2082
    %2142 = vmatpush.msra.mxu0 %v2081
    %2143 = vmatpush.msra.mxu0 %v2080
    %2144 = vmatpush.msra.mxu0 %v2079
    %2145 = vmatpush.msra.mxu0 %v2078
    %2146 = vmatpush.msra.mxu0 %v2077
    %2147 = vmatpush.msra.mxu0 %v2076
    %2148 = vmatpush.msra.mxu0 %v2075
    %2149 = vmatmul.f32.gmra.mxu0 %v2091
    %v2150 = vpop.f32.mrf.mxu0
    %v2151 = vadd.f32 %v2131, %v2150
    %2152 = vdwg.mxu0
    %v2153 = vadd.f32 %v2038, %v2151
    %v2154 = vld [vmem:[#allocation3 + $0x30] sm:$0x3]
    %v2155 = vld [vmem:[#allocation3 + $0x38] sm:$0x3]
    %v2156 = vld [vmem:[#allocation3 + $0x40] sm:$0x3]
    %s2157 = scalar_lea.vmem %s9, 2560
    %v2158 = vld [vmem:[%s2157] sm:$0xff]
    %v2159 = vld [vmem:[%s2157 + $0x8] sm:$0xff]
    %v2160 = vld [vmem:[%s2157 + $0x10] sm:$0xff]
    %v2161 = vld [vmem:[%s2157 + $0x18] sm:$0xff]
    %v2162 = vld [vmem:[%s2157 + $0x20] sm:$0xff]
    %v2163 = vld [vmem:[%s2157 + $0x28] sm:$0xff]
    %v2164 = vld [vmem:[%s2157 + $0x30] sm:$0xff]
    %v2165 = vld [vmem:[%s2157 + $0x38] sm:$0xff]
    %v2166 = vld [vmem:[%s2157 + $0x40] sm:$0xff]
    %v2167 = vld [vmem:[%s2157 + $0x48] sm:$0xff]
    %v2168 = vld [vmem:[%s2157 + $0x50] sm:$0xff]
    %v2169 = vld [vmem:[%s2157 + $0x58] sm:$0xff]
    %v2170 = vld [vmem:[%s2157 + $0x60] sm:$0xff]
    %v2171 = vld [vmem:[%s2157 + $0x68] sm:$0xff]
    %v2172 = vld [vmem:[%s2157 + $0x70] sm:$0xff]
    %v2173 = vld [vmem:[%s2157 + $0x78] sm:$0xff]
    %v2174 = vld [vmem:[%s2157 + $0x80] sm:$0xff]
    %v2175 = vld [vmem:[%s2157 + $0x88] sm:$0xff]
    %v2176 = vld [vmem:[%s2157 + $0x90] sm:$0xff]
    %v2177 = vld [vmem:[%s2157 + $0x98] sm:$0xff]
    %v2178 = vld [vmem:[%s2157 + $0xa0] sm:$0xff]
    %v2179 = vld [vmem:[%s2157 + $0xa8] sm:$0xff]
    %v2180 = vld [vmem:[%s2157 + $0xb0] sm:$0xff]
    %v2181 = vld [vmem:[%s2157 + $0xb8] sm:$0xff]
    %v2182 = vld [vmem:[%s2157 + $0xc0] sm:$0xff]
    %v2183 = vld [vmem:[%s2157 + $0xc8] sm:$0xff]
    %v2184 = vld [vmem:[%s2157 + $0xd0] sm:$0xff]
    %v2185 = vld [vmem:[%s2157 + $0xd8] sm:$0xff]
    %v2186 = vld [vmem:[%s2157 + $0xe0] sm:$0xff]
    %v2187 = vld [vmem:[%s2157 + $0xe8] sm:$0xff]
    %v2188 = vld [vmem:[%s2157 + $0xf0] sm:$0xff]
    %v2189 = vld [vmem:[%s2157 + $0xf8] sm:$0xff]
    %v2190 = vld [vmem:[%s2157 + $0x100] sm:$0xff]
    %v2191 = vld [vmem:[%s2157 + $0x108] sm:$0xff]
    %v2192 = vld [vmem:[%s2157 + $0x110] sm:$0xff]
    %v2193 = vld [vmem:[%s2157 + $0x118] sm:$0xff]
    %v2194 = vld [vmem:[%s2157 + $0x120] sm:$0xff]
    %v2195 = vld [vmem:[%s2157 + $0x128] sm:$0xff]
    %v2196 = vld [vmem:[%s2157 + $0x130] sm:$0xff]
    %v2197 = vld [vmem:[%s2157 + $0x138] sm:$0xff]
    %v2199 = vsel %vm1243, %v2156, 0
    %2201 = vmatpush.msra.mxu0 %v2173
    %2202 = vmatpush.msra.mxu0 %v2172
    %2203 = vmatpush.msra.mxu0 %v2171
    %2204 = vmatpush.msra.mxu0 %v2170
    %2205 = vmatpush.msra.mxu0 %v2169
    %2206 = vmatpush.msra.mxu0 %v2168
    %2207 = vmatpush.msra.mxu0 %v2167
    %2208 = vmatpush.msra.mxu0 %v2166
    %2209 = vmatpush.msra.mxu0 %v2165
    %2210 = vmatpush.msra.mxu0 %v2164
    %2211 = vmatpush.msra.mxu0 %v2163
    %2212 = vmatpush.msra.mxu0 %v2162
    %2213 = vmatpush.msra.mxu0 %v2161
    %2214 = vmatpush.msra.mxu0 %v2160
    %2215 = vmatpush.msra.mxu0 %v2159
    %2216 = vmatpush.msra.mxu0 %v2158
    %2217 = vmatmul.f32.gmra.mxu0 %v2154
    %v2218 = vpop.f32.mrf.mxu0
    %v2219 = vadd.f32 0.0, %v2218
    %2220 = vdwg.mxu0
    %2221 = vmatpush.msra.mxu0 %v2189
    %2222 = vmatpush.msra.mxu0 %v2188
    %2223 = vmatpush.msra.mxu0 %v2187
    %2224 = vmatpush.msra.mxu0 %v2186
    %2225 = vmatpush.msra.mxu0 %v2185
    %2226 = vmatpush.msra.mxu0 %v2184
    %2227 = vmatpush.msra.mxu0 %v2183
    %2228 = vmatpush.msra.mxu0 %v2182
    %2229 = vmatpush.msra.mxu0 %v2181
    %2230 = vmatpush.msra.mxu0 %v2180
    %2231 = vmatpush.msra.mxu0 %v2179
    %2232 = vmatpush.msra.mxu0 %v2178
    %2233 = vmatpush.msra.mxu0 %v2177
    %2234 = vmatpush.msra.mxu0 %v2176
    %2235 = vmatpush.msra.mxu0 %v2175
    %2236 = vmatpush.msra.mxu0 %v2174
    %2237 = vmatmul.f32.gmra.mxu0 %v2155
    %v2238 = vpop.f32.mrf.mxu0
    %v2239 = vadd.f32 %v2219, %v2238
    %2240 = vdwg.mxu0
    %2241 = vmatpush.msra.mxu0 0.0
    %2242 = vmatpush.msra.mxu0 0.0
    %2243 = vmatpush.msra.mxu0 0.0
    %2244 = vmatpush.msra.mxu0 0.0
    %2245 = vmatpush.msra.mxu0 0.0
    %2246 = vmatpush.msra.mxu0 0.0
    %2247 = vmatpush.msra.mxu0 0.0
    %2248 = vmatpush.msra.mxu0 0.0
    %2249 = vmatpush.msra.mxu0 %v2197
    %2250 = vmatpush.msra.mxu0 %v2196
    %2251 = vmatpush.msra.mxu0 %v2195
    %2252 = vmatpush.msra.mxu0 %v2194
    %2253 = vmatpush.msra.mxu0 %v2193
    %2254 = vmatpush.msra.mxu0 %v2192
    %2255 = vmatpush.msra.mxu0 %v2191
    %2256 = vmatpush.msra.mxu0 %v2190
    %2257 = vmatmul.f32.gmra.mxu0 %v2199
    %v2258 = vpop.f32.mrf.mxu0
    %v2259 = vadd.f32 %v2239, %v2258
    %2260 = vdwg.mxu0
    %v2261 = vadd.f32 %v2153, %v2259
    %v2262 = vld [vmem:[#allocation3 + $0x30] sm:$0xc]
    %v2263 = vld [vmem:[#allocation3 + $0x38] sm:$0xc]
    %v2264 = vld [vmem:[#allocation3 + $0x40] sm:$0xc]
    %s2265 = scalar_lea.vmem %s9, 2880
    %v2266 = vld [vmem:[%s2265] sm:$0xff]
    %v2267 = vld [vmem:[%s2265 + $0x8] sm:$0xff]
    %v2268 = vld [vmem:[%s2265 + $0x10] sm:$0xff]
    %v2269 = vld [vmem:[%s2265 + $0x18] sm:$0xff]
    %v2270 = vld [vmem:[%s2265 + $0x20] sm:$0xff]
    %v2271 = vld [vmem:[%s2265 + $0x28] sm:$0xff]
    %v2272 = vld [vmem:[%s2265 + $0x30] sm:$0xff]
    %v2273 = vld [vmem:[%s2265 + $0x38] sm:$0xff]
    %v2274 = vld [vmem:[%s2265 + $0x40] sm:$0xff]
    %v2275 = vld [vmem:[%s2265 + $0x48] sm:$0xff]
    %v2276 = vld [vmem:[%s2265 + $0x50] sm:$0xff]
    %v2277 = vld [vmem:[%s2265 + $0x58] sm:$0xff]
    %v2278 = vld [vmem:[%s2265 + $0x60] sm:$0xff]
    %v2279 = vld [vmem:[%s2265 + $0x68] sm:$0xff]
    %v2280 = vld [vmem:[%s2265 + $0x70] sm:$0xff]
    %v2281 = vld [vmem:[%s2265 + $0x78] sm:$0xff]
    %v2282 = vld [vmem:[%s2265 + $0x80] sm:$0xff]
    %v2283 = vld [vmem:[%s2265 + $0x88] sm:$0xff]
    %v2284 = vld [vmem:[%s2265 + $0x90] sm:$0xff]
    %v2285 = vld [vmem:[%s2265 + $0x98] sm:$0xff]
    %v2286 = vld [vmem:[%s2265 + $0xa0] sm:$0xff]
    %v2287 = vld [vmem:[%s2265 + $0xa8] sm:$0xff]
    %v2288 = vld [vmem:[%s2265 + $0xb0] sm:$0xff]
    %v2289 = vld [vmem:[%s2265 + $0xb8] sm:$0xff]
    %v2290 = vld [vmem:[%s2265 + $0xc0] sm:$0xff]
    %v2291 = vld [vmem:[%s2265 + $0xc8] sm:$0xff]
    %v2292 = vld [vmem:[%s2265 + $0xd0] sm:$0xff]
    %v2293 = vld [vmem:[%s2265 + $0xd8] sm:$0xff]
    %v2294 = vld [vmem:[%s2265 + $0xe0] sm:$0xff]
    %v2295 = vld [vmem:[%s2265 + $0xe8] sm:$0xff]
    %v2296 = vld [vmem:[%s2265 + $0xf0] sm:$0xff]
    %v2297 = vld [vmem:[%s2265 + $0xf8] sm:$0xff]
    %v2298 = vld [vmem:[%s2265 + $0x100] sm:$0xff]
    %v2299 = vld [vmem:[%s2265 + $0x108] sm:$0xff]
    %v2300 = vld [vmem:[%s2265 + $0x110] sm:$0xff]
    %v2301 = vld [vmem:[%s2265 + $0x118] sm:$0xff]
    %v2302 = vld [vmem:[%s2265 + $0x120] sm:$0xff]
    %v2303 = vld [vmem:[%s2265 + $0x128] sm:$0xff]
    %v2304 = vld [vmem:[%s2265 + $0x130] sm:$0xff]
    %v2305 = vld [vmem:[%s2265 + $0x138] sm:$0xff]
    %v2309 = vrot.slane %v2262, 2
    %v2310 = vrot.slane %v2263, 2
    %v2311 = vrot.slane %v2264, 2
    %v2314 = vsel %vm1243, %v2311, 0
    %2316 = vmatpush.msra.mxu0 %v2281
    %2317 = vmatpush.msra.mxu0 %v2280
    %2318 = vmatpush.msra.mxu0 %v2279
    %2319 = vmatpush.msra.mxu0 %v2278
    %2320 = vmatpush.msra.mxu0 %v2277
    %2321 = vmatpush.msra.mxu0 %v2276
    %2322 = vmatpush.msra.mxu0 %v2275
    %2323 = vmatpush.msra.mxu0 %v2274
    %2324 = vmatpush.msra.mxu0 %v2273
    %2325 = vmatpush.msra.mxu0 %v2272
    %2326 = vmatpush.msra.mxu0 %v2271
    %2327 = vmatpush.msra.mxu0 %v2270
    %2328 = vmatpush.msra.mxu0 %v2269
    %2329 = vmatpush.msra.mxu0 %v2268
    %2330 = vmatpush.msra.mxu0 %v2267
    %2331 = vmatpush.msra.mxu0 %v2266
    %2332 = vmatmul.f32.gmra.mxu0 %v2309
    %v2333 = vpop.f32.mrf.mxu0
    %v2334 = vadd.f32 0.0, %v2333
    %2335 = vdwg.mxu0
    %2336 = vmatpush.msra.mxu0 %v2297
    %2337 = vmatpush.msra.mxu0 %v2296
    %2338 = vmatpush.msra.mxu0 %v2295
    %2339 = vmatpush.msra.mxu0 %v2294
    %2340 = vmatpush.msra.mxu0 %v2293
    %2341 = vmatpush.msra.mxu0 %v2292
    %2342 = vmatpush.msra.mxu0 %v2291
    %2343 = vmatpush.msra.mxu0 %v2290
    %2344 = vmatpush.msra.mxu0 %v2289
    %2345 = vmatpush.msra.mxu0 %v2288
    %2346 = vmatpush.msra.mxu0 %v2287
    %2347 = vmatpush.msra.mxu0 %v2286
    %2348 = vmatpush.msra.mxu0 %v2285
    %2349 = vmatpush.msra.mxu0 %v2284
    %2350 = vmatpush.msra.mxu0 %v2283
    %2351 = vmatpush.msra.mxu0 %v2282
    %2352 = vmatmul.f32.gmra.mxu0 %v2310
    %v2353 = vpop.f32.mrf.mxu0
    %v2354 = vadd.f32 %v2334, %v2353
    %2355 = vdwg.mxu0
    %2356 = vmatpush.msra.mxu0 0.0
    %2357 = vmatpush.msra.mxu0 0.0
    %2358 = vmatpush.msra.mxu0 0.0
    %2359 = vmatpush.msra.mxu0 0.0
    %2360 = vmatpush.msra.mxu0 0.0
    %2361 = vmatpush.msra.mxu0 0.0
    %2362 = vmatpush.msra.mxu0 0.0
    %2363 = vmatpush.msra.mxu0 0.0
    %2364 = vmatpush.msra.mxu0 %v2305
    %2365 = vmatpush.msra.mxu0 %v2304
    %2366 = vmatpush.msra.mxu0 %v2303
    %2367 = vmatpush.msra.mxu0 %v2302
    %2368 = vmatpush.msra.mxu0 %v2301
    %2369 = vmatpush.msra.mxu0 %v2300
    %2370 = vmatpush.msra.mxu0 %v2299
    %2371 = vmatpush.msra.mxu0 %v2298
    %2372 = vmatmul.f32.gmra.mxu0 %v2314
    %v2373 = vpop.f32.mrf.mxu0
    %v2374 = vadd.f32 %v2354, %v2373
    %2375 = vdwg.mxu0
    %v2376 = vadd.f32 %v2261, %v2374
    %v2377 = vld [vmem:[#allocation3 + $0x30] sm:$0x30]
    %v2378 = vld [vmem:[#allocation3 + $0x38] sm:$0x30]
    %v2379 = vld [vmem:[#allocation3 + $0x40] sm:$0x30]
    %s2380 = scalar_lea.vmem %s9, 3200
    %v2381 = vld [vmem:[%s2380] sm:$0xff]
    %v2382 = vld [vmem:[%s2380 + $0x8] sm:$0xff]
    %v2383 = vld [vmem:[%s2380 + $0x10] sm:$0xff]
    %v2384 = vld [vmem:[%s2380 + $0x18] sm:$0xff]
    %v2385 = vld [vmem:[%s2380 + $0x20] sm:$0xff]
    %v2386 = vld [vmem:[%s2380 + $0x28] sm:$0xff]
    %v2387 = vld [vmem:[%s2380 + $0x30] sm:$0xff]
    %v2388 = vld [vmem:[%s2380 + $0x38] sm:$0xff]
    %v2389 = vld [vmem:[%s2380 + $0x40] sm:$0xff]
    %v2390 = vld [vmem:[%s2380 + $0x48] sm:$0xff]
    %v2391 = vld [vmem:[%s2380 + $0x50] sm:$0xff]
    %v2392 = vld [vmem:[%s2380 + $0x58] sm:$0xff]
    %v2393 = vld [vmem:[%s2380 + $0x60] sm:$0xff]
    %v2394 = vld [vmem:[%s2380 + $0x68] sm:$0xff]
    %v2395 = vld [vmem:[%s2380 + $0x70] sm:$0xff]
    %v2396 = vld [vmem:[%s2380 + $0x78] sm:$0xff]
    %v2397 = vld [vmem:[%s2380 + $0x80] sm:$0xff]
    %v2398 = vld [vmem:[%s2380 + $0x88] sm:$0xff]
    %v2399 = vld [vmem:[%s2380 + $0x90] sm:$0xff]
    %v2400 = vld [vmem:[%s2380 + $0x98] sm:$0xff]
    %v2401 = vld [vmem:[%s2380 + $0xa0] sm:$0xff]
    %v2402 = vld [vmem:[%s2380 + $0xa8] sm:$0xff]
    %v2403 = vld [vmem:[%s2380 + $0xb0] sm:$0xff]
    %v2404 = vld [vmem:[%s2380 + $0xb8] sm:$0xff]
    %v2405 = vld [vmem:[%s2380 + $0xc0] sm:$0xff]
    %v2406 = vld [vmem:[%s2380 + $0xc8] sm:$0xff]
    %v2407 = vld [vmem:[%s2380 + $0xd0] sm:$0xff]
    %v2408 = vld [vmem:[%s2380 + $0xd8] sm:$0xff]
    %v2409 = vld [vmem:[%s2380 + $0xe0] sm:$0xff]
    %v2410 = vld [vmem:[%s2380 + $0xe8] sm:$0xff]
    %v2411 = vld [vmem:[%s2380 + $0xf0] sm:$0xff]
    %v2412 = vld [vmem:[%s2380 + $0xf8] sm:$0xff]
    %v2413 = vld [vmem:[%s2380 + $0x100] sm:$0xff]
    %v2414 = vld [vmem:[%s2380 + $0x108] sm:$0xff]
    %v2415 = vld [vmem:[%s2380 + $0x110] sm:$0xff]
    %v2416 = vld [vmem:[%s2380 + $0x118] sm:$0xff]
    %v2417 = vld [vmem:[%s2380 + $0x120] sm:$0xff]
    %v2418 = vld [vmem:[%s2380 + $0x128] sm:$0xff]
    %v2419 = vld [vmem:[%s2380 + $0x130] sm:$0xff]
    %v2420 = vld [vmem:[%s2380 + $0x138] sm:$0xff]
    %v2424 = vrot.slane %v2377, 4
    %v2425 = vrot.slane %v2378, 4
    %v2426 = vrot.slane %v2379, 4
    %v2429 = vsel %vm1243, %v2426, 0
    %2431 = vmatpush.msra.mxu0 %v2396
    %2432 = vmatpush.msra.mxu0 %v2395
    %2433 = vmatpush.msra.mxu0 %v2394
    %2434 = vmatpush.msra.mxu0 %v2393
    %2435 = vmatpush.msra.mxu0 %v2392
    %2436 = vmatpush.msra.mxu0 %v2391
    %2437 = vmatpush.msra.mxu0 %v2390
    %2438 = vmatpush.msra.mxu0 %v2389
    %2439 = vmatpush.msra.mxu0 %v2388
    %2440 = vmatpush.msra.mxu0 %v2387
    %2441 = vmatpush.msra.mxu0 %v2386
    %2442 = vmatpush.msra.mxu0 %v2385
    %2443 = vmatpush.msra.mxu0 %v2384
    %2444 = vmatpush.msra.mxu0 %v2383
    %2445 = vmatpush.msra.mxu0 %v2382
    %2446 = vmatpush.msra.mxu0 %v2381
    %2447 = vmatmul.f32.gmra.mxu0 %v2424
    %v2448 = vpop.f32.mrf.mxu0
    %v2449 = vadd.f32 0.0, %v2448
    %2450 = vdwg.mxu0
    %2451 = vmatpush.msra.mxu0 %v2412
    %2452 = vmatpush.msra.mxu0 %v2411
    %2453 = vmatpush.msra.mxu0 %v2410
    %2454 = vmatpush.msra.mxu0 %v2409
    %2455 = vmatpush.msra.mxu0 %v2408
    %2456 = vmatpush.msra.mxu0 %v2407
    %2457 = vmatpush.msra.mxu0 %v2406
    %2458 = vmatpush.msra.mxu0 %v2405
    %2459 = vmatpush.msra.mxu0 %v2404
    %2460 = vmatpush.msra.mxu0 %v2403
    %2461 = vmatpush.msra.mxu0 %v2402
    %2462 = vmatpush.msra.mxu0 %v2401
    %2463 = vmatpush.msra.mxu0 %v2400
    %2464 = vmatpush.msra.mxu0 %v2399
    %2465 = vmatpush.msra.mxu0 %v2398
    %2466 = vmatpush.msra.mxu0 %v2397
    %2467 = vmatmul.f32.gmra.mxu0 %v2425
    %v2468 = vpop.f32.mrf.mxu0
    %v2469 = vadd.f32 %v2449, %v2468
    %2470 = vdwg.mxu0
    %2471 = vmatpush.msra.mxu0 0.0
    %2472 = vmatpush.msra.mxu0 0.0
    %2473 = vmatpush.msra.mxu0 0.0
    %2474 = vmatpush.msra.mxu0 0.0
    %2475 = vmatpush.msra.mxu0 0.0
    %2476 = vmatpush.msra.mxu0 0.0
    %2477 = vmatpush.msra.mxu0 0.0
    %2478 = vmatpush.msra.mxu0 0.0
    %2479 = vmatpush.msra.mxu0 %v2420
    %2480 = vmatpush.msra.mxu0 %v2419
    %2481 = vmatpush.msra.mxu0 %v2418
    %2482 = vmatpush.msra.mxu0 %v2417
    %2483 = vmatpush.msra.mxu0 %v2416
    %2484 = vmatpush.msra.mxu0 %v2415
    %2485 = vmatpush.msra.mxu0 %v2414
    %2486 = vmatpush.msra.mxu0 %v2413
    %2487 = vmatmul.f32.gmra.mxu0 %v2429
    %v2488 = vpop.f32.mrf.mxu0
    %v2489 = vadd.f32 %v2469, %v2488
    %2490 = vdwg.mxu0
    %v2491 = vadd.f32 %v2376, %v2489
    %v2492 = vld [vmem:[#allocation3 + $0x30] sm:$0xc0]
    %v2493 = vld [vmem:[#allocation3 + $0x38] sm:$0xc0]
    %v2494 = vld [vmem:[#allocation3 + $0x40] sm:$0xc0]
    %s2495 = scalar_lea.vmem %s9, 3520
    %v2496 = vld [vmem:[%s2495] sm:$0xff]
    %v2497 = vld [vmem:[%s2495 + $0x8] sm:$0xff]
    %v2498 = vld [vmem:[%s2495 + $0x10] sm:$0xff]
    %v2499 = vld [vmem:[%s2495 + $0x18] sm:$0xff]
    %v2500 = vld [vmem:[%s2495 + $0x20] sm:$0xff]
    %v2501 = vld [vmem:[%s2495 + $0x28] sm:$0xff]
    %v2502 = vld [vmem:[%s2495 + $0x30] sm:$0xff]
    %v2503 = vld [vmem:[%s2495 + $0x38] sm:$0xff]
    %v2504 = vld [vmem:[%s2495 + $0x40] sm:$0xff]
    %v2505 = vld [vmem:[%s2495 + $0x48] sm:$0xff]
    %v2506 = vld [vmem:[%s2495 + $0x50] sm:$0xff]
    %v2507 = vld [vmem:[%s2495 + $0x58] sm:$0xff]
    %v2508 = vld [vmem:[%s2495 + $0x60] sm:$0xff]
    %v2509 = vld [vmem:[%s2495 + $0x68] sm:$0xff]
    %v2510 = vld [vmem:[%s2495 + $0x70] sm:$0xff]
    %v2511 = vld [vmem:[%s2495 + $0x78] sm:$0xff]
    %v2512 = vld [vmem:[%s2495 + $0x80] sm:$0xff]
    %v2513 = vld [vmem:[%s2495 + $0x88] sm:$0xff]
    %v2514 = vld [vmem:[%s2495 + $0x90] sm:$0xff]
    %v2515 = vld [vmem:[%s2495 + $0x98] sm:$0xff]
    %v2516 = vld [vmem:[%s2495 + $0xa0] sm:$0xff]
    %v2517 = vld [vmem:[%s2495 + $0xa8] sm:$0xff]
    %v2518 = vld [vmem:[%s2495 + $0xb0] sm:$0xff]
    %v2519 = vld [vmem:[%s2495 + $0xb8] sm:$0xff]
    %v2520 = vld [vmem:[%s2495 + $0xc0] sm:$0xff]
    %v2521 = vld [vmem:[%s2495 + $0xc8] sm:$0xff]
    %v2522 = vld [vmem:[%s2495 + $0xd0] sm:$0xff]
    %v2523 = vld [vmem:[%s2495 + $0xd8] sm:$0xff]
    %v2524 = vld [vmem:[%s2495 + $0xe0] sm:$0xff]
    %v2525 = vld [vmem:[%s2495 + $0xe8] sm:$0xff]
    %v2526 = vld [vmem:[%s2495 + $0xf0] sm:$0xff]
    %v2527 = vld [vmem:[%s2495 + $0xf8] sm:$0xff]
    %v2528 = vld [vmem:[%s2495 + $0x100] sm:$0xff]
    %v2529 = vld [vmem:[%s2495 + $0x108] sm:$0xff]
    %v2530 = vld [vmem:[%s2495 + $0x110] sm:$0xff]
    %v2531 = vld [vmem:[%s2495 + $0x118] sm:$0xff]
    %v2532 = vld [vmem:[%s2495 + $0x120] sm:$0xff]
    %v2533 = vld [vmem:[%s2495 + $0x128] sm:$0xff]
    %v2534 = vld [vmem:[%s2495 + $0x130] sm:$0xff]
    %v2535 = vld [vmem:[%s2495 + $0x138] sm:$0xff]
    %v2539 = vrot.slane %v2492, 6
    %v2540 = vrot.slane %v2493, 6
    %v2541 = vrot.slane %v2494, 6
    %v2544 = vsel %vm1243, %v2541, 0
    %2546 = vmatpush.msra.mxu0 %v2511
    %2547 = vmatpush.msra.mxu0 %v2510
    %2548 = vmatpush.msra.mxu0 %v2509
    %2549 = vmatpush.msra.mxu0 %v2508
    %2550 = vmatpush.msra.mxu0 %v2507
    %2551 = vmatpush.msra.mxu0 %v2506
    %2552 = vmatpush.msra.mxu0 %v2505
    %2553 = vmatpush.msra.mxu0 %v2504
    %2554 = vmatpush.msra.mxu0 %v2503
    %2555 = vmatpush.msra.mxu0 %v2502
    %2556 = vmatpush.msra.mxu0 %v2501
    %2557 = vmatpush.msra.mxu0 %v2500
    %2558 = vmatpush.msra.mxu0 %v2499
    %2559 = vmatpush.msra.mxu0 %v2498
    %2560 = vmatpush.msra.mxu0 %v2497
    %2561 = vmatpush.msra.mxu0 %v2496
    %2562 = vmatmul.f32.gmra.mxu0 %v2539
    %v2563 = vpop.f32.mrf.mxu0
    %v2564 = vadd.f32 0.0, %v2563
    %2565 = vdwg.mxu0
    %2566 = vmatpush.msra.mxu0 %v2527
    %2567 = vmatpush.msra.mxu0 %v2526
    %2568 = vmatpush.msra.mxu0 %v2525
    %2569 = vmatpush.msra.mxu0 %v2524
    %2570 = vmatpush.msra.mxu0 %v2523
    %2571 = vmatpush.msra.mxu0 %v2522
    %2572 = vmatpush.msra.mxu0 %v2521
    %2573 = vmatpush.msra.mxu0 %v2520
    %2574 = vmatpush.msra.mxu0 %v2519
    %2575 = vmatpush.msra.mxu0 %v2518
    %2576 = vmatpush.msra.mxu0 %v2517
    %2577 = vmatpush.msra.mxu0 %v2516
    %2578 = vmatpush.msra.mxu0 %v2515
    %2579 = vmatpush.msra.mxu0 %v2514
    %2580 = vmatpush.msra.mxu0 %v2513
    %2581 = vmatpush.msra.mxu0 %v2512
    %2582 = vmatmul.f32.gmra.mxu0 %v2540
    %v2583 = vpop.f32.mrf.mxu0
    %v2584 = vadd.f32 %v2564, %v2583
    %2585 = vdwg.mxu0
    %2586 = vmatpush.msra.mxu0 0.0
    %2587 = vmatpush.msra.mxu0 0.0
    %2588 = vmatpush.msra.mxu0 0.0
    %2589 = vmatpush.msra.mxu0 0.0
    %2590 = vmatpush.msra.mxu0 0.0
    %2591 = vmatpush.msra.mxu0 0.0
    %2592 = vmatpush.msra.mxu0 0.0
    %2593 = vmatpush.msra.mxu0 0.0
    %2594 = vmatpush.msra.mxu0 %v2535
    %2595 = vmatpush.msra.mxu0 %v2534
    %2596 = vmatpush.msra.mxu0 %v2533
    %2597 = vmatpush.msra.mxu0 %v2532
    %2598 = vmatpush.msra.mxu0 %v2531
    %2599 = vmatpush.msra.mxu0 %v2530
    %2600 = vmatpush.msra.mxu0 %v2529
    %2601 = vmatpush.msra.mxu0 %v2528
    %2602 = vmatmul.f32.gmra.mxu0 %v2544
    %v2603 = vpop.f32.mrf.mxu0
    %v2604 = vadd.f32 %v2584, %v2603
    %2605 = vdwg.mxu0
    %v2606 = vadd.f32 %v2491, %v2604
    %v2607 = vld [vmem:[%s10] sm:$0x1]
    %v2609 = vperm.slane %v2607, 0
    %v2611 = vadd.f32 %v2606, %v2609
    %v2612 = vmax.f32 %v2611, 0.0
    %v2613 = vld [vmem:[%s11] sm:$0xff]
    %v2614 = vld [vmem:[%s11 + $0x8] sm:$0xff]
    %v2615 = vld [vmem:[%s11 + $0x10] sm:$0xff]
    %v2616 = vld [vmem:[%s11 + $0x18] sm:$0xff]
    %v2617 = vld [vmem:[%s11 + $0x20] sm:$0xff]
    %v2618 = vld [vmem:[%s11 + $0x28] sm:$0xff]
    %v2619 = vld [vmem:[%s11 + $0x30] sm:$0xff]
    %v2620 = vld [vmem:[%s11 + $0x38] sm:$0xff]
    %v2621 = vld [vmem:[%s11 + $0x40] sm:$0xff]
    %v2622 = vld [vmem:[%s11 + $0x48] sm:$0xff]
    %v2623 = vld [vmem:[%s11 + $0x50] sm:$0xff]
    %v2624 = vld [vmem:[%s11 + $0x58] sm:$0xff]
    %v2625 = vld [vmem:[%s11 + $0x60] sm:$0xff]
    %v2626 = vld [vmem:[%s11 + $0x68] sm:$0xff]
    %v2627 = vld [vmem:[%s11 + $0x70] sm:$0xff]
    %v2628 = vld [vmem:[%s11 + $0x78] sm:$0xff]
    %v2629 = vld [vmem:[%s12] sm:$0x1]
    %v2631 = vperm.slane %v2629, 0
    %2633 = vmatpush.msra.mxu0 %v2628
    %2634 = vmatpush.msra.mxu0 %v2627
    %2635 = vmatpush.msra.mxu0 %v2626
    %2636 = vmatpush.msra.mxu0 %v2625
    %2637 = vmatpush.msra.mxu0 %v2624
    %2638 = vmatpush.msra.mxu0 %v2623
    %2639 = vmatpush.msra.mxu0 %v2622
    %2640 = vmatpush.msra.mxu0 %v2621
    %2641 = vmatpush.msra.mxu0 %v2620
    %2642 = vmatpush.msra.mxu0 %v2619
    %2643 = vmatpush.msra.mxu0 %v2618
    %2644 = vmatpush.msra.mxu0 %v2617
    %2645 = vmatpush.msra.mxu0 %v2616
    %2646 = vmatpush.msra.mxu0 %v2615
    %2647 = vmatpush.msra.mxu0 %v2614
    %2648 = vmatpush.msra.mxu0 %v2613
    %2649 = vmatmul.f32.gmra.mxu0 %v2612
    %v2650 = vpop.f32.mrf.mxu0
    %v2651 = vadd.f32 %v2631, %v2650
    %2652 = vdwg.mxu0
    %vm2653 = vcmask 1041408
    %v2654 = vsel %vm2653, %v2651, -inf
    %2655 = vmax.xlane.f32.xlu0 %v2654
    %v2656 = vpop.xlane.xlu0 %2655
    %v2657 = vsub.f32 %v2651, %v2656
    %v2658 = vmul.f32 %v2657, 1.442695
    %v2659 = vpow.pop %v2658
    %v2660 = vsel %vm2653, %v2659, 0.0
    %2661 = vadd.xlane.f32.xlu0 %v2660
    %v2662 = vpop.xlane.xlu0 %2661
    %v2663 = vlog2.pop %v2662
    %v2664 = vmul.f32 %v2663, 0.6931472
    %v2665 = vsub.f32 %v2657, %v2664
    %2666 = vst [vmem:[#allocation4] sm:$0x3] %v2665
    // Predicated region
    $region54: #{cnn_classifier_forward.1} parent=1 // pred_check
      _
    $region55: #{cnn_classifier_forward.1} parent=1 // pred_check_branch
      %2668 = sbr.rel (0) target = $region57
    $region56: #{cnn_classifier_forward.1} parent=1 // pred_region
      %2670 = vsyncadd [#allocation5], 0
      %s2672 = sshll.u32 [#allocation4], 4
      %s2673 = int_to_ptr.vmem [resolvable:$true] %s2672
      %s2674 = sshll.u32 %s13, 4
      %s2675 = int_to_ptr.hbm [resolvable:$true] %s2674
      %2677 = dma.vmem_to_hbm [thread:$0]  %s2673, 32, %s2675, [#allocation5]
    $region57: #{cnn_classifier_forward.1} parent=1 // pred_fallthru
      _
    // Predicated region
    $region58: #{cnn_classifier_forward.1} parent=1 // pred_check
      _
    $region59: #{cnn_classifier_forward.1} parent=1 // pred_check_branch
      %2679 = sbr.rel (0) target = $region61
    $region60: #{cnn_classifier_forward.1} parent=1 // pred_region
      %2681 = dma.done [#allocation5], 32
    $region61: #{cnn_classifier_forward.1} parent=1 // pred_fallthru
      _
    %2682 = vsyncpa [#allocation5], 1

</llo_original>
